<compile_context>
chip_gen: v5e
topology: v5e:2x2
jax: 0.10.0
libtpu: 0.0.40
codegen_flags: <defaults>
</compile_context>

<pallas_src>
import math

import jax
import jax.numpy as jnp
import numpy as np
from jax import lax
from jax.experimental import pallas as pl
from jax.experimental.pallas import tpu as pltpu

STATE_DIM = 32
MOVE_DIM = 30          # move_embed_dim default in the module
HIDDEN = 256           # hidden_dim default in the module
E = HIDDEN // 2        # attention embed_dim = 128
HEADS = 4
DH = E // HEADS        # head_dim = 32
LN_EPS = 1e-5


def _layernorm(x, gamma, beta):
    # Single-pass form: var = E[x^2] - mean^2 (one fewer cross-lane reduction pass).
    mu = jnp.mean(x, axis=-1, keepdims=True)
    ms = jnp.mean(x * x, axis=-1, keepdims=True)
    var = jnp.maximum(ms - mu * mu, 0.0)
    return (x - mu) * lax.rsqrt(var + LN_EPS) * gamma + beta


def _make_kernel(mm_dtype):
    """Build the fused kernel; mm_dtype is the matmul-operand dtype (f32 exact, bf16 fast)."""
    use_cast = np.dtype(mm_dtype) != np.dtype(np.float32)

    def cast(x):
        return x.astype(mm_dtype) if use_cast else x

    def kernel(state_ref, moves_ref,
               w1t_ref, w2t_ref, wmt_ref, wsq_ref, vh_ref, ve_ref,
               out_ref):
        Bt = state_ref.shape[1]          # batch elements in this block
        R = moves_ref.shape[1]           # Bt * n_moves rows
        N = R // Bt                      # n_moves
        E_ = wmt_ref.shape[1]            # attention embed dim

        # ---- unpack packed parameter slabs (static, aligned slices) ----------
        b1, g1, be1 = vh_ref[0:1, :], vh_ref[1:2, :], vh_ref[2:3, :]
        b2 = ve_ref[0:1, :]
        bm, gm, bem = ve_ref[1:2, :], ve_ref[2:3, :], ve_ref[3:4, :]
        bq, bk, bv, bo = ve_ref[4:5, :], ve_ref[5:6, :], ve_ref[6:7, :], ve_ref[7:8, :]
        wp = ve_ref[8:9, :]
        bp = ve_ref[9:10, 0:1]

        wqt = wsq_ref[:, 0:E_]           # (E, E)
        wkvt = wsq_ref[:, E_:3 * E_]     # (E, 2E)  = [wk.T | wv.T]
        wot = wsq_ref[:, 3 * E_:4 * E_]  # (E, E)
        hmask = wsq_ref[:, 4 * E_:5 * E_]  # scaled block-diagonal head mask (E, E)

        # ---------------- state encoder (query path, Bt rows) ----------------
        s = state_ref[0]                                                       # (Bt, state_dim)
        h = jnp.dot(s, w1t_ref[...], preferred_element_type=jnp.float32) + b1
        h = jnp.maximum(_layernorm(h, g1, be1), 0.0)                           # ReLU; Dropout = id (eval)
        s_enc = jnp.dot(cast(h), cast(w2t_ref[...]),
                        preferred_element_type=jnp.float32) + b2               # (Bt, E)

        # ---------------- move encoder (R rows, one big matmul) --------------
        mv = moves_ref[0]                                                      # (R, move_dim)
        m = jnp.dot(cast(mv), cast(wmt_ref[...]),
                    preferred_element_type=jnp.float32) + bm
        m_enc = jnp.maximum(_layernorm(m, gm, bem), 0.0)                       # (R, E)

        # ---------------- projections (Q once per batch element; K,V fused) --
        q = jnp.dot(cast(s_enc), cast(wqt),
                    preferred_element_type=jnp.float32) + bq                   # (Bt, E)
        kv = jnp.dot(cast(m_enc), cast(wkvt),
                     preferred_element_type=jnp.float32)                       # (R, 2E)
        k = kv[:, :E_] + bk
        v = kv[:, E_:] + bv

        k3 = k.reshape(Bt, N, E_)
        v3 = v.reshape(Bt, N, E_)

        # scores: elementwise q*k, then per-head segment-sum + broadcast-back via
        # ONE full (R,E)@(E,E) matmul against the scaled block-diagonal head mask.
        prod = (q[:, None, :] * k3).reshape(R, E_)                             # (R, E)
        s_full = jnp.dot(cast(prod), cast(hmask),
                         preferred_element_type=jnp.float32)                   # (R, E)

        # softmax over the n_moves keys of each batch element (per head; values are
        # constant within each head's DH-lane segment, so lane-wise ops are exact).
        s3 = s_full.reshape(Bt, N, E_)
        s_max = jnp.max(s3, axis=1, keepdims=True)                             # (Bt, 1, E)
        p_un = jnp.exp(s3 - s_max)
        denom = jnp.sum(p_un, axis=1, keepdims=True)                           # (Bt, 1, E)
        p3 = p_un * pl.reciprocal(denom, approx=True)                          # (Bt, N, E)

        # attention output (heads concatenated in lanes) + fused out-projection
        o = jnp.sum(p3 * v3, axis=1)                                           # (Bt, E)
        attn = jnp.dot(o, wot, preferred_element_type=jnp.float32) + bo        # (Bt, E)

        # ---------------- residual + output projection (lane-dense row) ------
        combined = (attn[:, None, :] + m_enc.reshape(Bt, N, E_)).reshape(R, E_)  # (R, E)
        scores = lax.dot_general(wp, combined, (((1,), (1,)), ((), ())),
                                 preferred_element_type=jnp.float32) + bp       # (1, R)
        out_ref[0] = scores

    return kernel


def attention_move_selector(state, moves, packed, *, block_batch=None,
                            target_rows=1024, matmul_dtype=jnp.bfloat16,
                            vmem_limit_bytes=None):
    """Fused forward. `packed` is the dict from pack_params()."""
    B, state_dim = state.shape
    _, n_moves, move_dim = moves.shape
    e = packed["wmt"].shape[1]

    if block_batch is None:
        # Target ~target_rows rows (Bt*n_moves) per grid step: amortizes the
        # ~0.35us/step pipeline overhead and fills the MXU M-dimension.
        # (On v5e/v6e with 128 MiB VMEM target_rows can be pushed to 4096-8192;
        #  on v7x keep R <= ~4096 and G >= 2 so both TensorCores get work.)
        block_batch = max(1, target_rows // max(1, n_moves))
    block_batch = ((block_batch + 7) // 8) * 8
    Bt = min(block_batch, ((B + 7) // 8) * 8)
    Bt = max(8, ((Bt + 7) // 8) * 8)
    G = (B + Bt - 1) // Bt
    Bp = G * Bt
    if Bp != B:                                   # pad batch to a multiple of Bt
        state = jnp.pad(state, ((0, Bp - B), (0, 0)))
        moves = jnp.pad(moves, ((0, Bp - B), (0, 0), (0, 0)))

    R = Bt * n_moves
    if vmem_limit_bytes is None:
        # ~12 live (R, E) f32 temps + double-buffered moves block + params/headroom.
        est = R * e * 4 * 12 + 2 * R * move_dim * 4 + (8 << 20)
        vmem_limit_bytes = int(min(max(est, 32 << 20), 48 << 20))  # stay under v7x's 64 MiB physical

    state3 = state.reshape(G, Bt, state_dim)
    moves3 = moves.reshape(G, R, move_dim)

    param_vals = [packed["w1t"], packed["w2t"], packed["wmt"],
                  packed["wsq"], packed["vecs_h"], packed["vecs_e"]]

    def full_spec(arr):
        nd = arr.ndim
        return pl.BlockSpec(arr.shape, lambda g, _nd=nd: (0,) * _nd)

    in_specs = [
        pl.BlockSpec((1, Bt, state_dim), lambda g: (g, 0, 0)),
        pl.BlockSpec((1, R, move_dim), lambda g: (g, 0, 0)),
    ] + [full_spec(p) for p in param_vals]

    out = pl.pallas_call(
        _make_kernel(matmul_dtype),
        out_shape=jax.ShapeDtypeStruct((G, 1, R), jnp.float32),
        grid_spec=pltpu.PrefetchScalarGridSpec(
            num_scalar_prefetch=0,
            grid=(G,),
            in_specs=in_specs,
            out_specs=pl.BlockSpec((1, 1, R), lambda g: (g, 0, 0)),
        ),
        compiler_params=pltpu.CompilerParams(
            dimension_semantics=("parallel",),
            vmem_limit_bytes=vmem_limit_bytes),
    )(state3, moves3, *param_vals)

    return out.reshape(Bp, n_moves)[:B]                                        # [B, n_moves]


def init_params(key, state_dim=STATE_DIM, move_dim=MOVE_DIM, hidden=HIDDEN):
    """Synthetic deterministic params in the module's natural (out,in) layout."""
    e = hidden // 2
    keys = jax.random.split(key, 8)

    def lin(k, fan_in, fan_out):
        kw, kb = jax.random.split(k)
        bound = 1.0 / math.sqrt(fan_in)
        w = jax.random.uniform(kw, (fan_out, fan_in), jnp.float32, -bound, bound)
        b = jax.random.uniform(kb, (fan_out,), jnp.float32, -bound, bound)
        return w, b

    w1, b1 = lin(keys[0], state_dim, hidden)
    w2, b2 = lin(keys[1], hidden, e)
    wm, bm = lin(keys[2], move_dim, e)
    win, binp = lin(keys[3], e, 3 * e)           # MHA in_proj
    wo, bo = lin(keys[4], e, e)                  # MHA out_proj
    wp, bp = lin(keys[5], e, 1)                  # output_proj
    g1 = 1.0 + 0.05 * jax.random.normal(keys[6], (hidden,), jnp.float32)
    gm = 1.0 + 0.05 * jax.random.normal(keys[7], (e,), jnp.float32)

    return dict(
        w1=w1, b1=b1, g1=g1, be1=jnp.zeros((hidden,), jnp.float32),
        w2=w2, b2=b2,
        wm=wm, bm=bm, gm=gm, bem=jnp.zeros((e,), jnp.float32),
        wq=win[:e], bq=binp[:e], wk=win[e:2 * e], bk=binp[e:2 * e],
        wv=win[2 * e:], bv=binp[2 * e:],
        wo=wo, bo=bo, wp=wp, bp=bp,
    )


def pack_params(p):
    """Pack the 21 parameter tensors into 6 kernel inputs (done once, off the hot path)."""
    hidden = p["w1"].shape[0]
    e = p["w2"].shape[0]
    assert e % HEADS == 0, "head mask trick requires contiguous equal head segments"
    dh = e // HEADS
    head_ids = jnp.arange(e) // dh
    hmask = (head_ids[:, None] == head_ids[None, :]).astype(jnp.float32) / math.sqrt(dh)

    # (E, 5E) weight slab: [wq.T | wk.T | wv.T | wo.T | hmask] — sliced at 128-lane
    # boundaries inside the kernel (zero-cost aligned views).
    wsq = jnp.concatenate([p["wq"].T, p["wk"].T, p["wv"].T, p["wo"].T, hmask], axis=1)

    vecs_h = jnp.zeros((8, hidden), jnp.float32)       # hidden-wide vectors
    vecs_h = vecs_h.at[0].set(p["b1"]).at[1].set(p["g1"]).at[2].set(p["be1"])

    vecs_e = jnp.zeros((16, e), jnp.float32)           # E-wide vectors (+ bp scalar row)
    rows = [p["b2"], p["bm"], p["gm"], p["bem"], p["bq"], p["bk"], p["bv"], p["bo"],
            p["wp"][0], jnp.full((e,), p["bp"][0], jnp.float32)]
    for i, r in enumerate(rows):
        vecs_e = vecs_e.at[i].set(r)

    return dict(w1t=p["w1"].T, w2t=p["w2"].T, wmt=p["wm"].T,
                wsq=wsq, vecs_h=vecs_h, vecs_e=vecs_e)


def reference(state, moves, p):
    """Plain-JAX reference mirroring the PyTorch forward (eval mode)."""
    def ln(x, g, b):
        mu = x.mean(-1, keepdims=True)
        var = ((x - mu) ** 2).mean(-1, keepdims=True)
        return (x - mu) / jnp.sqrt(var + LN_EPS) * g + b

    B, n_moves, _ = moves.shape
    e = p["w2"].shape[0]
    dh = e // HEADS
    h = state @ p["w1"].T + p["b1"]
    h = jnp.maximum(ln(h, p["g1"], p["be1"]), 0.0)
    s_enc = h @ p["w2"].T + p["b2"]                                            # (B, E)
    m = moves @ p["wm"].T + p["bm"]
    m_enc = jnp.maximum(ln(m, p["gm"], p["bem"]), 0.0)                         # (B, N, E)

    q_in = jnp.broadcast_to(s_enc[:, None, :], (B, n_moves, e))
    Q = q_in @ p["wq"].T + p["bq"]
    K = m_enc @ p["wk"].T + p["bk"]
    V = m_enc @ p["wv"].T + p["bv"]
    Qh = Q.reshape(B, n_moves, HEADS, dh).transpose(0, 2, 1, 3)
    Kh = K.reshape(B, n_moves, HEADS, dh).transpose(0, 2, 1, 3)
    Vh = V.reshape(B, n_moves, HEADS, dh).transpose(0, 2, 1, 3)
    sc = jnp.einsum("bhqd,bhkd->bhqk", Qh, Kh) / math.sqrt(dh)
    pw = jax.nn.softmax(sc, axis=-1)
    o = jnp.einsum("bhqk,bhkd->bhqd", pw, Vh).transpose(0, 2, 1, 3).reshape(B, n_moves, e)
    attn = o @ p["wo"].T + p["bo"]
    combined = attn + m_enc
    return (combined @ p["wp"].T)[..., 0] + p["bp"][0]


if __name__ == "__main__":
    key = jax.random.PRNGKey(0)
    kp, ks, km = jax.random.split(key, 3)
    B, n_moves = 32, 8
    params = init_params(kp)
    packed = pack_params(params)
    state = jax.random.normal(ks, (B, STATE_DIM), jnp.float32)
    moves = jax.random.normal(km, (B, n_moves, MOVE_DIM), jnp.float32)

    with jax.default_matmul_precision("highest"):
        ref = jax.block_until_ready(reference(state, moves, params))

    # Exact-math path (f32 matmul operands): tight tolerance.
    out_f32 = jax.block_until_ready(
        attention_move_selector(state, moves, packed, matmul_dtype=jnp.float32))
    assert out_f32.shape == (B, n_moves)
    np.testing.assert_allclose(np.asarray(out_f32), np.asarray(ref), atol=3e-3, rtol=3e-3)

    # Default fast path (bf16 matmul operands, f32 accumulation): looser tolerance.
    out_bf16 = jax.block_until_ready(attention_move_selector(state, moves, packed))
    np.testing.assert_allclose(np.asarray(out_bf16), np.asarray(ref), atol=3e-2, rtol=3e-2)

    # Multi-grid-step path (G=2, exercises the "parallel" grid axis) in exact math.
    out_multi = jax.block_until_ready(
        attention_move_selector(state, moves, packed, block_batch=16,
                                matmul_dtype=jnp.float32))
    np.testing.assert_allclose(np.asarray(out_multi), np.asarray(ref), atol=3e-3, rtol=3e-3)

    # Batch not a multiple of the block (exercises the padding path).
    out_small = jax.block_until_ready(
        attention_move_selector(state[:2], moves[:2], packed, matmul_dtype=jnp.float32))
    np.testing.assert_allclose(np.asarray(out_small), np.asarray(ref[:2]), atol=3e-3, rtol=3e-3)

    print("KERNEL_OK")
</pallas_src>

<mosaic_0001>
module attributes {stable_mosaic.version = 11 : i64} {
  func.func @kernel(%arg0: i32, %arg1: memref<1x32x32xf32, #tpu.memory_space<vmem>>, %arg2: memref<1x256x30xf32, #tpu.memory_space<vmem>>, %arg3: memref<32x256xf32, #tpu.memory_space<vmem>>, %arg4: memref<256x128xf32, #tpu.memory_space<vmem>>, %arg5: memref<30x128xf32, #tpu.memory_space<vmem>>, %arg6: memref<128x640xf32, #tpu.memory_space<vmem>>, %arg7: memref<8x256xf32, #tpu.memory_space<vmem>>, %arg8: memref<16x128xf32, #tpu.memory_space<vmem>>, %arg9: memref<1x1x256xf32, #tpu.memory_space<vmem>>) attributes {dimension_semantics = [#tpu.dimension_semantics<parallel>], iteration_bounds = array<i64: 1>, scalar_prefetch = 0 : i64, scratch_operands = 0 : i64, tpu.core_type = #tpu.core_type<tc>, window_params = [{transform_indices = @transform_0, window_bounds = array<i64: 1, 32, 32>}, {transform_indices = @transform_1, window_bounds = array<i64: 1, 256, 30>}, {pipeline_mode = #tpu.pipeline_mode<synchronous>, transform_indices = @transform_2, window_bounds = array<i64: 32, 256>}, {pipeline_mode = #tpu.pipeline_mode<synchronous>, transform_indices = @transform_3, window_bounds = array<i64: 256, 128>}, {pipeline_mode = #tpu.pipeline_mode<synchronous>, transform_indices = @transform_4, window_bounds = array<i64: 30, 128>}, {pipeline_mode = #tpu.pipeline_mode<synchronous>, transform_indices = @transform_5, window_bounds = array<i64: 128, 640>}, {pipeline_mode = #tpu.pipeline_mode<synchronous>, transform_indices = @transform_6, window_bounds = array<i64: 8, 256>}, {pipeline_mode = #tpu.pipeline_mode<synchronous>, transform_indices = @transform_7, window_bounds = array<i64: 16, 128>}, {transform_indices = @transform_8, window_bounds = array<i64: 1, 1, 256>}]} {
    %c0 = arith.constant 0 : index
    %c0_0 = arith.constant 0 : index
    %0 = vector.load %arg7[%c0, %c0_0] : memref<8x256xf32, #tpu.memory_space<vmem>>, vector<1x256xf32>
    %c1 = arith.constant 1 : index
    %c0_1 = arith.constant 0 : index
    %1 = vector.load %arg7[%c1, %c0_1] : memref<8x256xf32, #tpu.memory_space<vmem>>, vector<1x256xf32>
    %c2 = arith.constant 2 : index
    %c0_2 = arith.constant 0 : index
    %2 = vector.load %arg7[%c2, %c0_2] : memref<8x256xf32, #tpu.memory_space<vmem>>, vector<1x256xf32>
    %c0_3 = arith.constant 0 : index
    %c0_4 = arith.constant 0 : index
    %3 = vector.load %arg8[%c0_3, %c0_4] : memref<16x128xf32, #tpu.memory_space<vmem>>, vector<1x128xf32>
    %c1_5 = arith.constant 1 : index
    %c0_6 = arith.constant 0 : index
    %4 = vector.load %arg8[%c1_5, %c0_6] : memref<16x128xf32, #tpu.memory_space<vmem>>, vector<1x128xf32>
    %c2_7 = arith.constant 2 : index
    %c0_8 = arith.constant 0 : index
    %5 = vector.load %arg8[%c2_7, %c0_8] : memref<16x128xf32, #tpu.memory_space<vmem>>, vector<1x128xf32>
    %c3 = arith.constant 3 : index
    %c0_9 = arith.constant 0 : index
    %6 = vector.load %arg8[%c3, %c0_9] : memref<16x128xf32, #tpu.memory_space<vmem>>, vector<1x128xf32>
    %c4 = arith.constant 4 : index
    %c0_10 = arith.constant 0 : index
    %7 = vector.load %arg8[%c4, %c0_10] : memref<16x128xf32, #tpu.memory_space<vmem>>, vector<1x128xf32>
    %c5 = arith.constant 5 : index
    %c0_11 = arith.constant 0 : index
    %8 = vector.load %arg8[%c5, %c0_11] : memref<16x128xf32, #tpu.memory_space<vmem>>, vector<1x128xf32>
    %c6 = arith.constant 6 : index
    %c0_12 = arith.constant 0 : index
    %9 = vector.load %arg8[%c6, %c0_12] : memref<16x128xf32, #tpu.memory_space<vmem>>, vector<1x128xf32>
    %c7 = arith.constant 7 : index
    %c0_13 = arith.constant 0 : index
    %10 = vector.load %arg8[%c7, %c0_13] : memref<16x128xf32, #tpu.memory_space<vmem>>, vector<1x128xf32>
    %c8 = arith.constant 8 : index
    %c0_14 = arith.constant 0 : index
    %11 = vector.load %arg8[%c8, %c0_14] : memref<16x128xf32, #tpu.memory_space<vmem>>, vector<1x128xf32>
    %c9 = arith.constant 9 : index
    %c0_15 = arith.constant 0 : index
    %12 = vector.load %arg8[%c9, %c0_15] : memref<16x128xf32, #tpu.memory_space<vmem>>, vector<1x1xf32>
    %c0_16 = arith.constant 0 : index
    %c0_17 = arith.constant 0 : index
    %13 = vector.load %arg6[%c0_16, %c0_17] : memref<128x640xf32, #tpu.memory_space<vmem>>, vector<128x128xf32>
    %c0_18 = arith.constant 0 : index
    %c128 = arith.constant 128 : index
    %14 = vector.load %arg6[%c0_18, %c128] : memref<128x640xf32, #tpu.memory_space<vmem>>, vector<128x256xf32>
    %c0_19 = arith.constant 0 : index
    %c384 = arith.constant 384 : index
    %15 = vector.load %arg6[%c0_19, %c384] : memref<128x640xf32, #tpu.memory_space<vmem>>, vector<128x128xf32>
    %c0_20 = arith.constant 0 : index
    %c512 = arith.constant 512 : index
    %16 = vector.load %arg6[%c0_20, %c512] : memref<128x640xf32, #tpu.memory_space<vmem>>, vector<128x128xf32>
    %c0_21 = arith.constant 0 : index
    %c0_22 = arith.constant 0 : index
    %c0_23 = arith.constant 0 : index
    %17 = vector.load %arg1[%c0_21, %c0_22, %c0_23] : memref<1x32x32xf32, #tpu.memory_space<vmem>>, vector<1x32x32xf32>
    %18 = vector.shape_cast %17 : vector<1x32x32xf32> to vector<32x32xf32>
    %c0_24 = arith.constant 0 : index
    %c0_25 = arith.constant 0 : index
    %19 = vector.load %arg3[%c0_24, %c0_25] : memref<32x256xf32, #tpu.memory_space<vmem>>, vector<32x256xf32>
    %cst = arith.constant dense<0.000000e+00> : vector<32x256xf32>
    %20 = tpu.matmul %18, %19, %cst {dimension_numbers = #tpu.dot_dimension_numbers<[1], [0], [0], [1], [0, 0, 1, 1], [], []>} : vector<32x32xf32>, vector<32x256xf32>, vector<32x256xf32> -> vector<32x256xf32>
    %21 = vector.broadcast %0 : vector<1x256xf32> to vector<32x256xf32>
    %22 = arith.addf %20, %21 : vector<32x256xf32>
    %cst_26 = arith.constant dense<0.000000e+00> : vector<32xf32>
    %23 = vector.multi_reduction <add>, %22, %cst_26 [1] : vector<32x256xf32> to vector<32xf32>
    %24 = vector.shape_cast %23 : vector<32xf32> to vector<32x1xf32>
    %cst_27 = arith.constant 2.560000e+02 : f32
    %25 = vector.broadcast %cst_27 : f32 to vector<32x1xf32>
    %26 = arith.divf %24, %25 : vector<32x1xf32>
    %27 = arith.mulf %22, %22 : vector<32x256xf32>
    %cst_28 = arith.constant dense<0.000000e+00> : vector<32xf32>
    %28 = vector.multi_reduction <add>, %27, %cst_28 [1] : vector<32x256xf32> to vector<32xf32>
    %29 = vector.shape_cast %28 : vector<32xf32> to vector<32x1xf32>
    %cst_29 = arith.constant 2.560000e+02 : f32
    %30 = vector.broadcast %cst_29 : f32 to vector<32x1xf32>
    %31 = arith.divf %29, %30 : vector<32x1xf32>
    %32 = arith.mulf %26, %26 : vector<32x1xf32>
    %33 = arith.subf %31, %32 : vector<32x1xf32>
    %cst_30 = arith.constant 0.000000e+00 : f32
    %34 = vector.broadcast %cst_30 : f32 to vector<32x1xf32>
    %35 = arith.maximumf %33, %34 : vector<32x1xf32>
    %36 = vector.broadcast %26 : vector<32x1xf32> to vector<32x256xf32>
    %37 = arith.subf %22, %36 : vector<32x256xf32>
    %cst_31 = arith.constant 9.99999974E-6 : f32
    %38 = vector.broadcast %cst_31 : f32 to vector<32x1xf32>
    %39 = arith.addf %35, %38 : vector<32x1xf32>
    %40 = math.rsqrt %39 : vector<32x1xf32>
    %41 = vector.broadcast %40 : vector<32x1xf32> to vector<32x256xf32>
    %42 = arith.mulf %37, %41 : vector<32x256xf32>
    %43 = vector.broadcast %1 : vector<1x256xf32> to vector<32x256xf32>
    %44 = arith.mulf %42, %43 : vector<32x256xf32>
    %45 = vector.broadcast %2 : vector<1x256xf32> to vector<32x256xf32>
    %46 = arith.addf %44, %45 : vector<32x256xf32>
    %cst_32 = arith.constant 0.000000e+00 : f32
    %47 = vector.broadcast %cst_32 : f32 to vector<32x256xf32>
    %48 = arith.maximumf %46, %47 : vector<32x256xf32>
    %c0_33 = arith.constant 0 : index
    %c0_34 = arith.constant 0 : index
    %49 = vector.load %arg4[%c0_33, %c0_34] : memref<256x128xf32, #tpu.memory_space<vmem>>, vector<256x128xf32>
    %cst_35 = arith.constant dense<0.000000e+00> : vector<32x128xf32>
    %50 = tpu.matmul %48, %49, %cst_35 {dimension_numbers = #tpu.dot_dimension_numbers<[1], [0], [0], [1], [0, 0, 1, 1], [], []>} : vector<32x256xf32>, vector<256x128xf32>, vector<32x128xf32> -> vector<32x128xf32>
    %51 = vector.broadcast %3 : vector<1x128xf32> to vector<32x128xf32>
    %52 = arith.addf %50, %51 : vector<32x128xf32>
    %c0_36 = arith.constant 0 : index
    %c0_37 = arith.constant 0 : index
    %c0_38 = arith.constant 0 : index
    %53 = vector.load %arg2[%c0_36, %c0_37, %c0_38] : memref<1x256x30xf32, #tpu.memory_space<vmem>>, vector<1x256x30xf32>
    %54 = vector.shape_cast %53 : vector<1x256x30xf32> to vector<256x30xf32>
    %c0_39 = arith.constant 0 : index
    %c0_40 = arith.constant 0 : index
    %55 = vector.load %arg5[%c0_39, %c0_40] : memref<30x128xf32, #tpu.memory_space<vmem>>, vector<30x128xf32>
    %cst_41 = arith.constant dense<0.000000e+00> : vector<256x128xf32>
    %56 = tpu.matmul %54, %55, %cst_41 {dimension_numbers = #tpu.dot_dimension_numbers<[1], [0], [0], [1], [0, 0, 1, 1], [], []>} : vector<256x30xf32>, vector<30x128xf32>, vector<256x128xf32> -> vector<256x128xf32>
    %57 = vector.broadcast %4 : vector<1x128xf32> to vector<256x128xf32>
    %58 = arith.addf %56, %57 : vector<256x128xf32>
    %cst_42 = arith.constant dense<0.000000e+00> : vector<256xf32>
    %59 = vector.multi_reduction <add>, %58, %cst_42 [1] : vector<256x128xf32> to vector<256xf32>
    %60 = vector.shape_cast %59 : vector<256xf32> to vector<256x1xf32>
    %cst_43 = arith.constant 1.280000e+02 : f32
    %61 = vector.broadcast %cst_43 : f32 to vector<256x1xf32>
    %62 = arith.divf %60, %61 : vector<256x1xf32>
    %63 = arith.mulf %58, %58 : vector<256x128xf32>
    %cst_44 = arith.constant dense<0.000000e+00> : vector<256xf32>
    %64 = vector.multi_reduction <add>, %63, %cst_44 [1] : vector<256x128xf32> to vector<256xf32>
    %65 = vector.shape_cast %64 : vector<256xf32> to vector<256x1xf32>
    %cst_45 = arith.constant 1.280000e+02 : f32
    %66 = vector.broadcast %cst_45 : f32 to vector<256x1xf32>
    %67 = arith.divf %65, %66 : vector<256x1xf32>
    %68 = arith.mulf %62, %62 : vector<256x1xf32>
    %69 = arith.subf %67, %68 : vector<256x1xf32>
    %cst_46 = arith.constant 0.000000e+00 : f32
    %70 = vector.broadcast %cst_46 : f32 to vector<256x1xf32>
    %71 = arith.maximumf %69, %70 : vector<256x1xf32>
    %72 = vector.broadcast %62 : vector<256x1xf32> to vector<256x128xf32>
    %73 = arith.subf %58, %72 : vector<256x128xf32>
    %cst_47 = arith.constant 9.99999974E-6 : f32
    %74 = vector.broadcast %cst_47 : f32 to vector<256x1xf32>
    %75 = arith.addf %71, %74 : vector<256x1xf32>
    %76 = math.rsqrt %75 : vector<256x1xf32>
    %77 = vector.broadcast %76 : vector<256x1xf32> to vector<256x128xf32>
    %78 = arith.mulf %73, %77 : vector<256x128xf32>
    %79 = vector.broadcast %5 : vector<1x128xf32> to vector<256x128xf32>
    %80 = arith.mulf %78, %79 : vector<256x128xf32>
    %81 = vector.broadcast %6 : vector<1x128xf32> to vector<256x128xf32>
    %82 = arith.addf %80, %81 : vector<256x128xf32>
    %cst_48 = arith.constant 0.000000e+00 : f32
    %83 = vector.broadcast %cst_48 : f32 to vector<256x128xf32>
    %84 = arith.maximumf %82, %83 : vector<256x128xf32>
    %cst_49 = arith.constant dense<0.000000e+00> : vector<32x128xf32>
    %85 = tpu.matmul %52, %13, %cst_49 {dimension_numbers = #tpu.dot_dimension_numbers<[1], [0], [0], [1], [0, 0, 1, 1], [], []>} : vector<32x128xf32>, vector<128x128xf32>, vector<32x128xf32> -> vector<32x128xf32>
    %86 = vector.broadcast %7 : vector<1x128xf32> to vector<32x128xf32>
    %87 = arith.addf %85, %86 : vector<32x128xf32>
    %cst_50 = arith.constant dense<0.000000e+00> : vector<256x256xf32>
    %88 = tpu.matmul %84, %14, %cst_50 {dimension_numbers = #tpu.dot_dimension_numbers<[1], [0], [0], [1], [0, 0, 1, 1], [], []>} : vector<256x128xf32>, vector<128x256xf32>, vector<256x256xf32> -> vector<256x256xf32>
    %89 = vector.extract_strided_slice %88 {offsets = [0, 0], sizes = [256, 128], strides = [1, 1]} : vector<256x256xf32> to vector<256x128xf32>
    %90 = vector.broadcast %8 : vector<1x128xf32> to vector<256x128xf32>
    %91 = arith.addf %89, %90 : vector<256x128xf32>
    %92 = vector.extract_strided_slice %88 {offsets = [0, 128], sizes = [256, 128], strides = [1, 1]} : vector<256x256xf32> to vector<256x128xf32>
    %93 = vector.broadcast %9 : vector<1x128xf32> to vector<256x128xf32>
    %94 = arith.addf %92, %93 : vector<256x128xf32>
    %95 = vector.shape_cast %91 : vector<256x128xf32> to vector<32x8x128xf32>
    %96 = vector.shape_cast %94 : vector<256x128xf32> to vector<32x8x128xf32>
    %97 = vector.shape_cast %87 : vector<32x128xf32> to vector<32x1x128xf32>
    %98 = vector.broadcast %97 : vector<32x1x128xf32> to vector<32x8x128xf32>
    %99 = arith.mulf %98, %95 : vector<32x8x128xf32>
    %100 = vector.shape_cast %99 : vector<32x8x128xf32> to vector<256x128xf32>
    %cst_51 = arith.constant dense<0.000000e+00> : vector<256x128xf32>
    %101 = tpu.matmul %100, %16, %cst_51 {dimension_numbers = #tpu.dot_dimension_numbers<[1], [0], [0], [1], [0, 0, 1, 1], [], []>} : vector<256x128xf32>, vector<128x128xf32>, vector<256x128xf32> -> vector<256x128xf32>
    %102 = vector.shape_cast %101 : vector<256x128xf32> to vector<32x8x128xf32>
    %cst_52 = arith.constant dense<0xFF800000> : vector<32x128xf32>
    %103 = vector.multi_reduction <maximumf>, %102, %cst_52 [1] : vector<32x8x128xf32> to vector<32x128xf32>
    %104 = vector.shape_cast %103 : vector<32x128xf32> to vector<32x1x128xf32>
    %105 = vector.broadcast %104 : vector<32x1x128xf32> to vector<32x8x128xf32>
    %106 = arith.subf %102, %105 : vector<32x8x128xf32>
    %107 = math.exp %106 : vector<32x8x128xf32>
    %cst_53 = arith.constant dense<0.000000e+00> : vector<32x128xf32>
    %108 = vector.multi_reduction <add>, %107, %cst_53 [1] : vector<32x8x128xf32> to vector<32x128xf32>
    %109 = vector.shape_cast %108 : vector<32x128xf32> to vector<32x1x128xf32>
    %110 = tpu.reciprocal %109 {approx = true} : vector<32x1x128xf32> -> vector<32x1x128xf32>
    %111 = vector.broadcast %110 : vector<32x1x128xf32> to vector<32x8x128xf32>
    %112 = arith.mulf %107, %111 : vector<32x8x128xf32>
    %113 = arith.mulf %112, %96 : vector<32x8x128xf32>
    %cst_54 = arith.constant dense<0.000000e+00> : vector<32x128xf32>
    %114 = vector.multi_reduction <add>, %113, %cst_54 [1] : vector<32x8x128xf32> to vector<32x128xf32>
    %cst_55 = arith.constant dense<0.000000e+00> : vector<32x128xf32>
    %115 = tpu.matmul %114, %15, %cst_55 {dimension_numbers = #tpu.dot_dimension_numbers<[1], [0], [0], [1], [0, 0, 1, 1], [], []>} : vector<32x128xf32>, vector<128x128xf32>, vector<32x128xf32> -> vector<32x128xf32>
    %116 = vector.broadcast %10 : vector<1x128xf32> to vector<32x128xf32>
    %117 = arith.addf %115, %116 : vector<32x128xf32>
    %118 = vector.shape_cast %117 : vector<32x128xf32> to vector<32x1x128xf32>
    %119 = vector.shape_cast %84 : vector<256x128xf32> to vector<32x8x128xf32>
    %120 = vector.broadcast %118 : vector<32x1x128xf32> to vector<32x8x128xf32>
    %121 = arith.addf %120, %119 : vector<32x8x128xf32>
    %122 = vector.shape_cast %121 : vector<32x8x128xf32> to vector<256x128xf32>
    %cst_56 = arith.constant dense<0.000000e+00> : vector<1x256xf32>
    %123 = tpu.matmul %11, %122, %cst_56 {dimension_numbers = #tpu.dot_dimension_numbers<[1], [1], [0], [0], [0, 0, 1, 0], [], []>} : vector<1x128xf32>, vector<256x128xf32>, vector<1x256xf32> -> vector<1x256xf32>
    %124 = vector.broadcast %12 : vector<1x1xf32> to vector<1x256xf32>
    %125 = arith.addf %123, %124 : vector<1x256xf32>
    %c0_57 = arith.constant 0 : index
    %c0_58 = arith.constant 0 : index
    %c0_59 = arith.constant 0 : index
    %126 = vector.load %arg9[%c0_57, %c0_58, %c0_59] : memref<1x1x256xf32, #tpu.memory_space<vmem>>, vector<1x1x256xf32>
    %127 = vector.shape_cast %126 : vector<1x1x256xf32> to vector<1x256xf32>
    %128 = vector.shape_cast %125 : vector<1x256xf32> to vector<1x1x256xf32>
    tpu.vector_store %arg9[%c0_57, %c0_58, %c0_59], %128 {strides = array<i32>} : memref<1x1x256xf32, #tpu.memory_space<vmem>>, vector<1x1x256xf32>,
    return
  }
  func.func @transform_0(%arg0: i32) -> (i32, i32, i32) {
    %c0_i32 = arith.constant 0 : i32
    %c0_i32_0 = arith.constant 0 : i32
    %c0_i32_1 = arith.constant 0 : i32
    return %arg0, %c0_i32, %c0_i32_0 : i32, i32, i32
  }
  func.func @transform_1(%arg0: i32) -> (i32, i32, i32) {
    %c0_i32 = arith.constant 0 : i32
    %c0_i32_0 = arith.constant 0 : i32
    %c0_i32_1 = arith.constant 0 : i32
    return %arg0, %c0_i32, %c0_i32_0 : i32, i32, i32
  }
  func.func @transform_2(%arg0: i32) -> (i32, i32) {
    %c0_i32 = arith.constant 0 : i32
    %c0_i32_0 = arith.constant 0 : i32
    %c0_i32_1 = arith.constant 0 : i32
    return %c0_i32, %c0_i32_0 : i32, i32
  }
  func.func @transform_3(%arg0: i32) -> (i32, i32) {
    %c0_i32 = arith.constant 0 : i32
    %c0_i32_0 = arith.constant 0 : i32
    %c0_i32_1 = arith.constant 0 : i32
    return %c0_i32, %c0_i32_0 : i32, i32
  }
  func.func @transform_4(%arg0: i32) -> (i32, i32) {
    %c0_i32 = arith.constant 0 : i32
    %c0_i32_0 = arith.constant 0 : i32
    %c0_i32_1 = arith.constant 0 : i32
    return %c0_i32, %c0_i32_0 : i32, i32
  }
  func.func @transform_5(%arg0: i32) -> (i32, i32) {
    %c0_i32 = arith.constant 0 : i32
    %c0_i32_0 = arith.constant 0 : i32
    %c0_i32_1 = arith.constant 0 : i32
    return %c0_i32, %c0_i32_0 : i32, i32
  }
  func.func @transform_6(%arg0: i32) -> (i32, i32) {
    %c0_i32 = arith.constant 0 : i32
    %c0_i32_0 = arith.constant 0 : i32
    %c0_i32_1 = arith.constant 0 : i32
    return %c0_i32, %c0_i32_0 : i32, i32
  }
  func.func @transform_7(%arg0: i32) -> (i32, i32) {
    %c0_i32 = arith.constant 0 : i32
    %c0_i32_0 = arith.constant 0 : i32
    %c0_i32_1 = arith.constant 0 : i32
    return %c0_i32, %c0_i32_0 : i32, i32
  }
  func.func @transform_8(%arg0: i32) -> (i32, i32, i32) {
    %c0_i32 = arith.constant 0 : i32
    %c0_i32_0 = arith.constant 0 : i32
    %c0_i32_1 = arith.constant 0 : i32
    return %arg0, %c0_i32, %c0_i32_0 : i32, i32, i32
  }
}

</mosaic_0001>

<llo_original>
// kernel: tpu_custom_call.1
$region0: #{tpu_custom_call.1}
  #allocation0 [shape = 'u32[]', space=smem, size = 0x4, offset = 0x4, fixed_abs, tag = 'smem constant byte address 0x4 - core index']
  #allocation1 [shape = 'u32[72,128]{1,0:T(1,128)}', space=vmem, size = 0x9000, scoped, tag = 'internal scratch']
  %s0 = inlined_call_operand.vmem [shape: f32[1,32,32], index: 0, kind: input, shape index: {}]
  %s1 = inlined_call_operand.vmem [shape: f32[1,256,30], index: 1, kind: input, shape index: {}]
  %s2 = inlined_call_operand.hbm [shape: f32[32,256], index: 2, kind: input, shape index: {}]
  %s3 = inlined_call_operand.vmem [shape: f32[256,128], index: 3, kind: input, shape index: {}]
  %s4 = inlined_call_operand.hbm [shape: f32[30,128], index: 4, kind: input, shape index: {}]
  %s5 = inlined_call_operand.hbm [shape: f32[128,640], index: 5, kind: input, shape index: {}]
  %s6 = inlined_call_operand.vmem [shape: f32[8,256], index: 6, kind: input, shape index: {}]
  %s7 = inlined_call_operand.hbm [shape: f32[16,128], index: 7, kind: input, shape index: {}]
  %s8 = inlined_call_operand.hbm [shape: f32[1,1,256], index: 8, kind: output, shape index: {}]
  %s9 = sld [smem:[#allocation0]]
  $region58: #{tpu_custom_call.1} parent=0
    _
  %s11 = ssub.s32 1, %s9
  %s12 = scalar_select 0, %s11, %s9
  $region1: #{tpu_custom_call.1} parent=0
    #allocation2 [shape = 'u8[32768]{0}', space=vmem, size = 0x8000, scoped, tag = 'input window, operand 2, single buffered']
    #allocation3 [shape = 's32[1]{0}', space=sflag, size = 0x4, scoped, tag = 'scoped memory for tpu_custom_call.1']
    #allocation4 [shape = 's32[1]{0}', space=sflag, size = 0x4, scoped, tag = 'scoped memory for tpu_custom_call.1']
    #allocation5 [shape = 'u8[16384]{0}', space=vmem, size = 0x4000, scoped, tag = 'input window, operand 4, single buffered']
    #allocation6 [shape = 's32[1]{0}', space=sflag, size = 0x4, scoped, tag = 'scoped memory for tpu_custom_call.1']
    #allocation7 [shape = 'u8[327680]{0}', space=vmem, size = 0x50000, scoped, tag = 'input window, operand 5, single buffered']
    #allocation8 [shape = 'u8[8192]{0}', space=vmem, size = 0x2000, scoped, tag = 'input window, operand 7, single buffered']
    #allocation9 [shape = 's32[1]{0}', space=sflag, size = 0x4, scoped, tag = 'scoped memory for tpu_custom_call.1']
    #allocation10 [shape = 'u8[1024]{0}', space=vmem, size = 0x400, scoped, tag = 'output window, operand 0, single buffered']
    %13 = vsyncpa [#allocation3], 0
    %14 = vsyncpa [#allocation6], 0
    %15 = vsyncpa [#allocation9], 0
    %16 = vsyncpa [#allocation4], 0
    // Predicated region
    $region2: #{tpu_custom_call.1} parent=1 // pred_check
      _
    $region3: #{tpu_custom_call.1} parent=1 // pred_check_branch
      %18 = sbr.rel (0) target = $region5
    $region4: #{tpu_custom_call.1} parent=1 // pred_region
      _
    $region5: #{tpu_custom_call.1} parent=1 // pred_fallthru
      _
    // Predicated region
    $region6: #{tpu_custom_call.1} parent=1 // pred_check
      _
    $region7: #{tpu_custom_call.1} parent=1 // pred_check_branch
      %20 = sbr.rel (0) target = $region9
    $region8: #{tpu_custom_call.1} parent=1 // pred_region
      _
    $region9: #{tpu_custom_call.1} parent=1 // pred_fallthru
      _
    // Predicated region
    $region10: #{tpu_custom_call.1} parent=1 // pred_check
      _
    $region11: #{tpu_custom_call.1} parent=1 // pred_check_branch
      %22 = sbr.rel (0) target = $region13
    $region12: #{tpu_custom_call.1} parent=1 // pred_region
      %24 = vsyncadd [#allocation3], 0
      %s25 = sshll.u32 %s2, 4
      %s26 = int_to_ptr.hbm [resolvable:$true] %s25
      %s27 = sshll.u32 [#allocation2], 4
      %s28 = int_to_ptr.vmem [resolvable:$true] %s27
      %33 = dma.hbm_to_vmem [thread:$0]  %s26, 1024, %s28, [#allocation3], 256, 256, 16
    $region13: #{tpu_custom_call.1} parent=1 // pred_fallthru
      _
    // Predicated region
    $region14: #{tpu_custom_call.1} parent=1 // pred_check
      _
    $region15: #{tpu_custom_call.1} parent=1 // pred_check_branch
      %35 = sbr.rel (0) target = $region17
    $region16: #{tpu_custom_call.1} parent=1 // pred_region
      _
    $region17: #{tpu_custom_call.1} parent=1 // pred_fallthru
      _
    // Predicated region
    $region18: #{tpu_custom_call.1} parent=1 // pred_check
      _
    $region19: #{tpu_custom_call.1} parent=1 // pred_check_branch
      %37 = sbr.rel (0) target = $region21
    $region20: #{tpu_custom_call.1} parent=1 // pred_region
      %39 = vsyncadd [#allocation6], 0
      %s40 = sshll.u32 %s4, 4
      %s41 = int_to_ptr.hbm [resolvable:$true] %s40
      %s42 = sshll.u32 [#allocation5], 4
      %s43 = int_to_ptr.vmem [resolvable:$true] %s42
      %48 = dma.hbm_to_vmem [thread:$0]  %s41, 512, %s43, [#allocation6], 128, 128, 8
    $region21: #{tpu_custom_call.1} parent=1 // pred_fallthru
      _
    // Predicated region
    $region22: #{tpu_custom_call.1} parent=1 // pred_check
      _
    $region23: #{tpu_custom_call.1} parent=1 // pred_check_branch
      %50 = sbr.rel (0) target = $region25
    $region24: #{tpu_custom_call.1} parent=1 // pred_region
      %52 = vsyncadd [#allocation6], 0
      %s53 = sshll.u32 %s5, 4
      %s54 = int_to_ptr.hbm [resolvable:$true] %s53
      %s55 = sshll.u32 [#allocation7], 4
      %s56 = int_to_ptr.vmem [resolvable:$true] %s55
      %61 = dma.hbm_to_vmem [thread:$0]  %s54, 10240, %s56, [#allocation6], 640, 640, 40
    $region25: #{tpu_custom_call.1} parent=1 // pred_fallthru
      _
    // Predicated region
    $region26: #{tpu_custom_call.1} parent=1 // pred_check
      _
    $region27: #{tpu_custom_call.1} parent=1 // pred_check_branch
      %63 = sbr.rel (0) target = $region29
    $region28: #{tpu_custom_call.1} parent=1 // pred_region
      _
    $region29: #{tpu_custom_call.1} parent=1 // pred_fallthru
      _
    // Predicated region
    $region30: #{tpu_custom_call.1} parent=1 // pred_check
      _
    $region31: #{tpu_custom_call.1} parent=1 // pred_check_branch
      %65 = sbr.rel (0) target = $region33
    $region32: #{tpu_custom_call.1} parent=1 // pred_region
      %67 = vsyncadd [#allocation9], 0
      %s68 = sshll.u32 %s7, 4
      %s69 = int_to_ptr.hbm [resolvable:$true] %s68
      %s70 = sshll.u32 [#allocation8], 4
      %s71 = int_to_ptr.vmem [resolvable:$true] %s70
      %76 = dma.hbm_to_vmem [thread:$0]  %s69, 256, %s71, [#allocation9], 128, 128, 8
    $region33: #{tpu_custom_call.1} parent=1 // pred_fallthru
      _
    // Predicated region
    $region34: #{tpu_custom_call.1} parent=1 // pred_check
      _
    $region35: #{tpu_custom_call.1} parent=1 // pred_check_branch
      %78 = sbr.rel (0) target = $region37
    $region36: #{tpu_custom_call.1} parent=1 // pred_region
      %80 = dma.done [#allocation3], 1024
    $region37: #{tpu_custom_call.1} parent=1 // pred_fallthru
      _
    // Predicated region
    $region38: #{tpu_custom_call.1} parent=1 // pred_check
      _
    $region39: #{tpu_custom_call.1} parent=1 // pred_check_branch
      %82 = sbr.rel (0) target = $region41
    $region40: #{tpu_custom_call.1} parent=1 // pred_region
      %84 = dma.done [#allocation6], 512
    $region41: #{tpu_custom_call.1} parent=1 // pred_fallthru
      _
    // Predicated region
    $region42: #{tpu_custom_call.1} parent=1 // pred_check
      _
    $region43: #{tpu_custom_call.1} parent=1 // pred_check_branch
      %86 = sbr.rel (0) target = $region45
    $region44: #{tpu_custom_call.1} parent=1 // pred_region
      %88 = dma.done [#allocation6], 10240
    $region45: #{tpu_custom_call.1} parent=1 // pred_fallthru
      _
    // Predicated region
    $region46: #{tpu_custom_call.1} parent=1 // pred_check
      _
    $region47: #{tpu_custom_call.1} parent=1 // pred_check_branch
      %90 = sbr.rel (0) target = $region49
    $region48: #{tpu_custom_call.1} parent=1 // pred_region
      %92 = dma.done [#allocation9], 256
    $region49: #{tpu_custom_call.1} parent=1 // pred_fallthru
      _
    %v93 = vld [vmem:[%s6] ss:$8 sm:$0x3]
    %s94 = scalar_lea.vmem %s6, 1
    %v95 = vld [vmem:[%s94] ss:$8 sm:$0x3]
    %s96 = scalar_lea.vmem %s6, 2
    %v97 = vld [vmem:[%s96] ss:$8 sm:$0x3]
    %v98 = vld [vmem:[#allocation8] sm:$0x1]
    %v99 = vld [vmem:[#allocation8 + $0x1] sm:$0x1]
    %v100 = vld [vmem:[#allocation8 + $0x2] sm:$0x1]
    %v101 = vld [vmem:[#allocation8 + $0x3] sm:$0x1]
    %v102 = vld [vmem:[#allocation8 + $0x4] sm:$0x1]
    %v103 = vld [vmem:[#allocation8 + $0x5] sm:$0x1]
    %v104 = vld [vmem:[#allocation8 + $0x6] sm:$0x1]
    %v105 = vld [vmem:[#allocation8 + $0x7] sm:$0x1]
    %v106 = vld [vmem:[#allocation8 + $0x8] sm:$0x1]
    %v107 = vld [vmem:[#allocation8 + $0x9] sm:$0x1]
    %v108 = vld [vmem:[#allocation7] sm:$0xff]
    %v109 = vld [vmem:[#allocation7 + $0x28] sm:$0xff]
    %v110 = vld [vmem:[#allocation7 + $0x50] sm:$0xff]
    %v111 = vld [vmem:[#allocation7 + $0x78] sm:$0xff]
    %v112 = vld [vmem:[#allocation7 + $0xa0] sm:$0xff]
    %v113 = vld [vmem:[#allocation7 + $0xc8] sm:$0xff]
    %v114 = vld [vmem:[#allocation7 + $0xf0] sm:$0xff]
    %v115 = vld [vmem:[#allocation7 + $0x118] sm:$0xff]
    %v116 = vld [vmem:[#allocation7 + $0x140] sm:$0xff]
    %v117 = vld [vmem:[#allocation7 + $0x168] sm:$0xff]
    %v118 = vld [vmem:[#allocation7 + $0x190] sm:$0xff]
    %v119 = vld [vmem:[#allocation7 + $0x1b8] sm:$0xff]
    %v120 = vld [vmem:[#allocation7 + $0x1e0] sm:$0xff]
    %v121 = vld [vmem:[#allocation7 + $0x208] sm:$0xff]
    %v122 = vld [vmem:[#allocation7 + $0x230] sm:$0xff]
    %v123 = vld [vmem:[#allocation7 + $0x258] sm:$0xff]
    %v124 = vld [vmem:[#allocation7 + $0x8] sm:$0xff]
    %v125 = vld [vmem:[#allocation7 + $0x10] sm:$0xff]
    %v126 = vld [vmem:[#allocation7 + $0x30] sm:$0xff]
    %v127 = vld [vmem:[#allocation7 + $0x38] sm:$0xff]
    %v128 = vld [vmem:[#allocation7 + $0x58] sm:$0xff]
    %v129 = vld [vmem:[#allocation7 + $0x60] sm:$0xff]
    %v130 = vld [vmem:[#allocation7 + $0x80] sm:$0xff]
    %v131 = vld [vmem:[#allocation7 + $0x88] sm:$0xff]
    %v132 = vld [vmem:[#allocation7 + $0xa8] sm:$0xff]
    %v133 = vld [vmem:[#allocation7 + $0xb0] sm:$0xff]
    %v134 = vld [vmem:[#allocation7 + $0xd0] sm:$0xff]
    %v135 = vld [vmem:[#allocation7 + $0xd8] sm:$0xff]
    %v136 = vld [vmem:[#allocation7 + $0xf8] sm:$0xff]
    %v137 = vld [vmem:[#allocation7 + $0x100] sm:$0xff]
    %v138 = vld [vmem:[#allocation7 + $0x120] sm:$0xff]
    %v139 = vld [vmem:[#allocation7 + $0x128] sm:$0xff]
    %v140 = vld [vmem:[#allocation7 + $0x148] sm:$0xff]
    %v141 = vld [vmem:[#allocation7 + $0x150] sm:$0xff]
    %v142 = vld [vmem:[#allocation7 + $0x170] sm:$0xff]
    %v143 = vld [vmem:[#allocation7 + $0x178] sm:$0xff]
    %v144 = vld [vmem:[#allocation7 + $0x198] sm:$0xff]
    %v145 = vld [vmem:[#allocation7 + $0x1a0] sm:$0xff]
    %v146 = vld [vmem:[#allocation7 + $0x1c0] sm:$0xff]
    %v147 = vld [vmem:[#allocation7 + $0x1c8] sm:$0xff]
    %v148 = vld [vmem:[#allocation7 + $0x1e8] sm:$0xff]
    %v149 = vld [vmem:[#allocation7 + $0x1f0] sm:$0xff]
    %v150 = vld [vmem:[#allocation7 + $0x210] sm:$0xff]
    %v151 = vld [vmem:[#allocation7 + $0x218] sm:$0xff]
    %v152 = vld [vmem:[#allocation7 + $0x238] sm:$0xff]
    %v153 = vld [vmem:[#allocation7 + $0x240] sm:$0xff]
    %v154 = vld [vmem:[#allocation7 + $0x260] sm:$0xff]
    %v155 = vld [vmem:[#allocation7 + $0x268] sm:$0xff]
    %v156 = vld [vmem:[#allocation7 + $0x18] sm:$0xff]
    %v157 = vld [vmem:[#allocation7 + $0x40] sm:$0xff]
    %v158 = vld [vmem:[#allocation7 + $0x68] sm:$0xff]
    %v159 = vld [vmem:[#allocation7 + $0x90] sm:$0xff]
    %v160 = vld [vmem:[#allocation7 + $0xb8] sm:$0xff]
    %v161 = vld [vmem:[#allocation7 + $0xe0] sm:$0xff]
    %v162 = vld [vmem:[#allocation7 + $0x108] sm:$0xff]
    %v163 = vld [vmem:[#allocation7 + $0x130] sm:$0xff]
    %v164 = vld [vmem:[#allocation7 + $0x158] sm:$0xff]
    %v165 = vld [vmem:[#allocation7 + $0x180] sm:$0xff]
    %v166 = vld [vmem:[#allocation7 + $0x1a8] sm:$0xff]
    %v167 = vld [vmem:[#allocation7 + $0x1d0] sm:$0xff]
    %v168 = vld [vmem:[#allocation7 + $0x1f8] sm:$0xff]
    %v169 = vld [vmem:[#allocation7 + $0x220] sm:$0xff]
    %v170 = vld [vmem:[#allocation7 + $0x248] sm:$0xff]
    %v171 = vld [vmem:[#allocation7 + $0x270] sm:$0xff]
    %v172 = vld [vmem:[#allocation7 + $0x20] sm:$0xff]
    %v173 = vld [vmem:[#allocation7 + $0x48] sm:$0xff]
    %v174 = vld [vmem:[#allocation7 + $0x70] sm:$0xff]
    %v175 = vld [vmem:[#allocation7 + $0x98] sm:$0xff]
    %v176 = vld [vmem:[#allocation7 + $0xc0] sm:$0xff]
    %v177 = vld [vmem:[#allocation7 + $0xe8] sm:$0xff]
    %v178 = vld [vmem:[#allocation7 + $0x110] sm:$0xff]
    %v179 = vld [vmem:[#allocation7 + $0x138] sm:$0xff]
    %v180 = vld [vmem:[#allocation7 + $0x160] sm:$0xff]
    %v181 = vld [vmem:[#allocation7 + $0x188] sm:$0xff]
    %v182 = vld [vmem:[#allocation7 + $0x1b0] sm:$0xff]
    %v183 = vld [vmem:[#allocation7 + $0x1d8] sm:$0xff]
    %v184 = vld [vmem:[#allocation7 + $0x200] sm:$0xff]
    %v185 = vld [vmem:[#allocation7 + $0x228] sm:$0xff]
    %v186 = vld [vmem:[#allocation7 + $0x250] sm:$0xff]
    %v187 = vld [vmem:[#allocation7 + $0x278] sm:$0xff]
    %v188 = vld [vmem:[%s0] sm:$0xff]
    %v189 = vld [vmem:[%s0 + $0x8] sm:$0xff]
    %v190 = vld [vmem:[%s0 + $0x10] sm:$0xff]
    %v191 = vld [vmem:[%s0 + $0x18] sm:$0xff]
    %v192 = vld [vmem:[#allocation2] sm:$0xff]
    %v193 = vld [vmem:[#allocation2 + $0x8] sm:$0xff]
    %v194 = vld [vmem:[#allocation2 + $0x10] sm:$0xff]
    %v195 = vld [vmem:[#allocation2 + $0x18] sm:$0xff]
    %v196 = vld [vmem:[#allocation2 + $0x20] sm:$0xff]
    %v197 = vld [vmem:[#allocation2 + $0x28] sm:$0xff]
    %v198 = vld [vmem:[#allocation2 + $0x30] sm:$0xff]
    %v199 = vld [vmem:[#allocation2 + $0x38] sm:$0xff]
    %v201 = vperm.slane %v93, 0
    %v202 = vperm.slane %v93, 1
    %vm205 = vcmask 261120
    %v207 = vsel %vm205, %v188, 0
    %v210 = vsel %vm205, %v189, 0
    %v213 = vsel %vm205, %v190, 0
    %v216 = vsel %vm205, %v191, 0
    %218 = vmatpush.msra.mxu0 0.0
    %219 = vmatpush.msra.mxu0 0.0
    %220 = vmatpush.msra.mxu0 0.0
    %221 = vmatpush.msra.mxu0 0.0
    %222 = vmatpush.msra.mxu0 0.0
    %223 = vmatpush.msra.mxu0 0.0
    %224 = vmatpush.msra.mxu0 0.0
    %225 = vmatpush.msra.mxu0 0.0
    %226 = vmatpush.msra.mxu0 0.0
    %227 = vmatpush.msra.mxu0 0.0
    %228 = vmatpush.msra.mxu0 0.0
    %229 = vmatpush.msra.mxu0 0.0
    %230 = vmatpush.msra.mxu0 %v198
    %231 = vmatpush.msra.mxu0 %v196
    %232 = vmatpush.msra.mxu0 %v194
    %233 = vmatpush.msra.mxu0 %v192
    %234 = vmatmul.f32.gmra.mxu0 %v207
    %v235 = vpop.f32.mrf.mxu0
    %v236 = vadd.f32 %v201, %v235
    %237 = vmatmul.f32.gmra.mxu0 %v210
    %v238 = vpop.f32.mrf.mxu0
    %v239 = vadd.f32 %v201, %v238
    %240 = vmatmul.f32.gmra.mxu0 %v213
    %v241 = vpop.f32.mrf.mxu0
    %v242 = vadd.f32 %v201, %v241
    %243 = vmatmul.f32.gmra.mxu0 %v216
    %v244 = vpop.f32.mrf.mxu0
    %v245 = vadd.f32 %v201, %v244
    %246 = vdwg.mxu0
    %247 = vmatpush.msra.mxu0 0.0
    %248 = vmatpush.msra.mxu0 0.0
    %249 = vmatpush.msra.mxu0 0.0
    %250 = vmatpush.msra.mxu0 0.0
    %251 = vmatpush.msra.mxu0 0.0
    %252 = vmatpush.msra.mxu0 0.0
    %253 = vmatpush.msra.mxu0 0.0
    %254 = vmatpush.msra.mxu0 0.0
    %255 = vmatpush.msra.mxu0 0.0
    %256 = vmatpush.msra.mxu0 0.0
    %257 = vmatpush.msra.mxu0 0.0
    %258 = vmatpush.msra.mxu0 0.0
    %259 = vmatpush.msra.mxu0 %v199
    %260 = vmatpush.msra.mxu0 %v197
    %261 = vmatpush.msra.mxu0 %v195
    %262 = vmatpush.msra.mxu0 %v193
    %263 = vmatmul.f32.gmra.mxu0 %v207
    %v264 = vpop.f32.mrf.mxu0
    %v265 = vadd.f32 %v202, %v264
    %266 = vmatmul.f32.gmra.mxu0 %v210
    %v267 = vpop.f32.mrf.mxu0
    %v268 = vadd.f32 %v202, %v267
    %269 = vmatmul.f32.gmra.mxu0 %v213
    %v270 = vpop.f32.mrf.mxu0
    %v271 = vadd.f32 %v202, %v270
    %272 = vmatmul.f32.gmra.mxu0 %v216
    %v273 = vpop.f32.mrf.mxu0
    %v274 = vadd.f32 %v202, %v273
    %275 = vdwg.mxu0
    %v276 = vadd.f32 %v236, %v265
    %277 = vadd.xlane.f32.xlu0 %v276
    %v278 = vpop.xlane.xlu0 %277
    %v279 = vadd.f32 %v239, %v268
    %280 = vadd.xlane.f32.xlu0 %v279
    %v281 = vpop.xlane.xlu0 %280
    %v282 = vadd.f32 %v242, %v271
    %283 = vadd.xlane.f32.xlu0 %v282
    %v284 = vpop.xlane.xlu0 %283
    %v285 = vadd.f32 %v245, %v274
    %286 = vadd.xlane.f32.xlu0 %v285
    %v287 = vpop.xlane.xlu0 %286
    %v288 = vrcp.pop 256.0
    %v289 = vmul.f32 256.0, %v288
    %v290 = vsub.f32 1.0, %v289
    %v291 = vmul.f32 %v288, %v290
    %v292 = vadd.f32 %v288, %v291
    %vm293 = vweird.f32 %v288
    %v294 = vsel %vm293, %v288, %v292
    %v295 = vmul.f32 %v278, %v294
    %v296 = vmul.f32 %v281, %v294
    %v297 = vmul.f32 %v284, %v294
    %v298 = vmul.f32 %v287, %v294
    %v299 = vmul.f32 %v236, %v236
    %v300 = vmul.f32 %v265, %v265
    %v301 = vmul.f32 %v239, %v239
    %v302 = vmul.f32 %v268, %v268
    %v303 = vmul.f32 %v242, %v242
    %v304 = vmul.f32 %v271, %v271
    %v305 = vmul.f32 %v245, %v245
    %v306 = vmul.f32 %v274, %v274
    %v307 = vadd.f32 %v299, %v300
    %308 = vadd.xlane.f32.xlu0 %v307
    %v309 = vpop.xlane.xlu0 %308
    %v310 = vadd.f32 %v301, %v302
    %311 = vadd.xlane.f32.xlu0 %v310
    %v312 = vpop.xlane.xlu0 %311
    %v313 = vadd.f32 %v303, %v304
    %314 = vadd.xlane.f32.xlu0 %v313
    %v315 = vpop.xlane.xlu0 %314
    %v316 = vadd.f32 %v305, %v306
    %317 = vadd.xlane.f32.xlu0 %v316
    %v318 = vpop.xlane.xlu0 %317
    %v319 = vmul.f32 %v309, %v294
    %v320 = vmul.f32 %v312, %v294
    %v321 = vmul.f32 %v315, %v294
    %v322 = vmul.f32 %v318, %v294
    %v323 = vmul.f32 %v295, %v295
    %v324 = vmul.f32 %v296, %v296
    %v325 = vmul.f32 %v297, %v297
    %v326 = vmul.f32 %v298, %v298
    %v327 = vsub.f32 %v319, %v323
    %v328 = vsub.f32 %v320, %v324
    %v329 = vsub.f32 %v321, %v325
    %v330 = vsub.f32 %v322, %v326
    %v331 = vmax.f32 %v327, 0.0
    %v332 = vmax.f32 %v328, 0.0
    %v333 = vmax.f32 %v329, 0.0
    %v334 = vmax.f32 %v330, 0.0
    %v335 = vsub.f32 %v236, %v295
    %v336 = vsub.f32 %v265, %v295
    %v337 = vsub.f32 %v239, %v296
    %v338 = vsub.f32 %v268, %v296
    %v339 = vsub.f32 %v242, %v297
    %v340 = vsub.f32 %v271, %v297
    %v341 = vsub.f32 %v245, %v298
    %v342 = vsub.f32 %v274, %v298
    %v343 = vadd.f32 %v331, 1e-05
    %v344 = vadd.f32 %v332, 1e-05
    %v345 = vadd.f32 %v333, 1e-05
    %v346 = vadd.f32 %v334, 1e-05
    %v347 = vrsqrt.pop %v343
    %v348 = vmul.f32 %v347, %v343
    %v349 = vmul.f32 %v348, %v347
    %v350 = vmul.f32 0.5, %v349
    %v351 = vsub.f32 1.5, %v350
    %v352 = vmul.f32 %v347, %v351
    %vm353 = vweird.f32 %v343
    %vm354 = vweird.f32 %v347
    %vm355 = vmor %vm353, %vm354
    %v356 = vsel %vm355, %v347, %v352
    %v357 = vrsqrt.pop %v344
    %v358 = vmul.f32 %v357, %v344
    %v359 = vmul.f32 %v358, %v357
    %v360 = vmul.f32 0.5, %v359
    %v361 = vsub.f32 1.5, %v360
    %v362 = vmul.f32 %v357, %v361
    %vm363 = vweird.f32 %v344
    %vm364 = vweird.f32 %v357
    %vm365 = vmor %vm363, %vm364
    %v366 = vsel %vm365, %v357, %v362
    %v367 = vrsqrt.pop %v345
    %v368 = vmul.f32 %v367, %v345
    %v369 = vmul.f32 %v368, %v367
    %v370 = vmul.f32 0.5, %v369
    %v371 = vsub.f32 1.5, %v370
    %v372 = vmul.f32 %v367, %v371
    %vm373 = vweird.f32 %v345
    %vm374 = vweird.f32 %v367
    %vm375 = vmor %vm373, %vm374
    %v376 = vsel %vm375, %v367, %v372
    %v377 = vrsqrt.pop %v346
    %v378 = vmul.f32 %v377, %v346
    %v379 = vmul.f32 %v378, %v377
    %v380 = vmul.f32 0.5, %v379
    %v381 = vsub.f32 1.5, %v380
    %v382 = vmul.f32 %v377, %v381
    %vm383 = vweird.f32 %v346
    %vm384 = vweird.f32 %v377
    %vm385 = vmor %vm383, %vm384
    %v386 = vsel %vm385, %v377, %v382
    %v387 = vmul.f32 %v335, %v356
    %v388 = vmul.f32 %v336, %v356
    %v389 = vmul.f32 %v337, %v366
    %v390 = vmul.f32 %v338, %v366
    %v391 = vmul.f32 %v339, %v376
    %v392 = vmul.f32 %v340, %v376
    %v393 = vmul.f32 %v341, %v386
    %v394 = vmul.f32 %v342, %v386
    %v396 = vperm.slane %v95, 0
    %v397 = vperm.slane %v95, 1
    %v400 = vmul.f32 %v387, %v396
    %v401 = vmul.f32 %v388, %v397
    %v402 = vmul.f32 %v389, %v396
    %v403 = vmul.f32 %v390, %v397
    %v404 = vmul.f32 %v391, %v396
    %v405 = vmul.f32 %v392, %v397
    %v406 = vmul.f32 %v393, %v396
    %v407 = vmul.f32 %v394, %v397
    %v409 = vperm.slane %v97, 0
    %v410 = vperm.slane %v97, 1
    %v413 = vadd.f32 %v400, %v409
    %v414 = vadd.f32 %v401, %v410
    %v415 = vadd.f32 %v402, %v409
    %v416 = vadd.f32 %v403, %v410
    %v417 = vadd.f32 %v404, %v409
    %v418 = vadd.f32 %v405, %v410
    %v419 = vadd.f32 %v406, %v409
    %v420 = vadd.f32 %v407, %v410
    %v421 = vmax.f32 %v413, 0.0
    %v422 = vmax.f32 %v414, 0.0
    %v423 = vmax.f32 %v415, 0.0
    %v424 = vmax.f32 %v416, 0.0
    %v425 = vmax.f32 %v417, 0.0
    %v426 = vmax.f32 %v418, 0.0
    %v427 = vmax.f32 %v419, 0.0
    %v428 = vmax.f32 %v420, 0.0
    %v429 = vld [vmem:[%s3] sm:$0xff]
    %v430 = vld [vmem:[%s3 + $0x8] sm:$0xff]
    %v431 = vld [vmem:[%s3 + $0x10] sm:$0xff]
    %v432 = vld [vmem:[%s3 + $0x18] sm:$0xff]
    %v433 = vld [vmem:[%s3 + $0x20] sm:$0xff]
    %v434 = vld [vmem:[%s3 + $0x28] sm:$0xff]
    %v435 = vld [vmem:[%s3 + $0x30] sm:$0xff]
    %v436 = vld [vmem:[%s3 + $0x38] sm:$0xff]
    %v437 = vld [vmem:[%s3 + $0x40] sm:$0xff]
    %v438 = vld [vmem:[%s3 + $0x48] sm:$0xff]
    %v439 = vld [vmem:[%s3 + $0x50] sm:$0xff]
    %v440 = vld [vmem:[%s3 + $0x58] sm:$0xff]
    %v441 = vld [vmem:[%s3 + $0x60] sm:$0xff]
    %v442 = vld [vmem:[%s3 + $0x68] sm:$0xff]
    %v443 = vld [vmem:[%s3 + $0x70] sm:$0xff]
    %v444 = vld [vmem:[%s3 + $0x78] sm:$0xff]
    %v445 = vld [vmem:[%s3 + $0x80] sm:$0xff]
    %v446 = vld [vmem:[%s3 + $0x88] sm:$0xff]
    %v447 = vld [vmem:[%s3 + $0x90] sm:$0xff]
    %v448 = vld [vmem:[%s3 + $0x98] sm:$0xff]
    %v449 = vld [vmem:[%s3 + $0xa0] sm:$0xff]
    %v450 = vld [vmem:[%s3 + $0xa8] sm:$0xff]
    %v451 = vld [vmem:[%s3 + $0xb0] sm:$0xff]
    %v452 = vld [vmem:[%s3 + $0xb8] sm:$0xff]
    %v453 = vld [vmem:[%s3 + $0xc0] sm:$0xff]
    %v454 = vld [vmem:[%s3 + $0xc8] sm:$0xff]
    %v455 = vld [vmem:[%s3 + $0xd0] sm:$0xff]
    %v456 = vld [vmem:[%s3 + $0xd8] sm:$0xff]
    %v457 = vld [vmem:[%s3 + $0xe0] sm:$0xff]
    %v458 = vld [vmem:[%s3 + $0xe8] sm:$0xff]
    %v459 = vld [vmem:[%s3 + $0xf0] sm:$0xff]
    %v460 = vld [vmem:[%s3 + $0xf8] sm:$0xff]
    %v461 = vperm.slane %v98, 0
    %462 = vmatpush.msra.mxu0 %v444
    %463 = vmatpush.msra.mxu0 %v443
    %464 = vmatpush.msra.mxu0 %v442
    %465 = vmatpush.msra.mxu0 %v441
    %466 = vmatpush.msra.mxu0 %v440
    %467 = vmatpush.msra.mxu0 %v439
    %468 = vmatpush.msra.mxu0 %v438
    %469 = vmatpush.msra.mxu0 %v437
    %470 = vmatpush.msra.mxu0 %v436
    %471 = vmatpush.msra.mxu0 %v435
    %472 = vmatpush.msra.mxu0 %v434
    %473 = vmatpush.msra.mxu0 %v433
    %474 = vmatpush.msra.mxu0 %v432
    %475 = vmatpush.msra.mxu0 %v431
    %476 = vmatpush.msra.mxu0 %v430
    %477 = vmatpush.msra.mxu0 %v429
    %478 = vmatmul.f32.gmra.mxu0 %v421
    %v479 = vpop.f32.mrf.mxu0
    %v480 = vadd.f32 %v461, %v479
    %481 = vmatmul.f32.gmra.mxu0 %v423
    %v482 = vpop.f32.mrf.mxu0
    %v483 = vadd.f32 %v461, %v482
    %484 = vmatmul.f32.gmra.mxu0 %v425
    %v485 = vpop.f32.mrf.mxu0
    %v486 = vadd.f32 %v461, %v485
    %487 = vmatmul.f32.gmra.mxu0 %v427
    %v488 = vpop.f32.mrf.mxu0
    %v489 = vadd.f32 %v461, %v488
    %490 = vdwg.mxu0
    %491 = vmatpush.msra.mxu0 %v460
    %492 = vmatpush.msra.mxu0 %v459
    %493 = vmatpush.msra.mxu0 %v458
    %494 = vmatpush.msra.mxu0 %v457
    %495 = vmatpush.msra.mxu0 %v456
    %496 = vmatpush.msra.mxu0 %v455
    %497 = vmatpush.msra.mxu0 %v454
    %498 = vmatpush.msra.mxu0 %v453
    %499 = vmatpush.msra.mxu0 %v452
    %500 = vmatpush.msra.mxu0 %v451
    %501 = vmatpush.msra.mxu0 %v450
    %502 = vmatpush.msra.mxu0 %v449
    %503 = vmatpush.msra.mxu0 %v448
    %504 = vmatpush.msra.mxu0 %v447
    %505 = vmatpush.msra.mxu0 %v446
    %506 = vmatpush.msra.mxu0 %v445
    %507 = vmatmul.f32.gmra.mxu0 %v422
    %v508 = vpop.f32.mrf.mxu0
    %v509 = vadd.f32 %v480, %v508
    %510 = vmatmul.f32.gmra.mxu0 %v424
    %v511 = vpop.f32.mrf.mxu0
    %v512 = vadd.f32 %v483, %v511
    %513 = vmatmul.f32.gmra.mxu0 %v426
    %v514 = vpop.f32.mrf.mxu0
    %v515 = vadd.f32 %v486, %v514
    %516 = vmatmul.f32.gmra.mxu0 %v428
    %v517 = vpop.f32.mrf.mxu0
    %v518 = vadd.f32 %v489, %v517
    %519 = vdwg.mxu0
    %v520 = vld [vmem:[%s1] sm:$0xff]
    %v521 = vld [vmem:[%s1 + $0x8] sm:$0xff]
    %v522 = vld [vmem:[%s1 + $0x10] sm:$0xff]
    %v523 = vld [vmem:[%s1 + $0x18] sm:$0xff]
    %v524 = vld [vmem:[%s1 + $0x20] sm:$0xff]
    %v525 = vld [vmem:[%s1 + $0x28] sm:$0xff]
    %v526 = vld [vmem:[%s1 + $0x30] sm:$0xff]
    %v527 = vld [vmem:[%s1 + $0x38] sm:$0xff]
    %v528 = vld [vmem:[%s1 + $0x40] sm:$0xff]
    %v529 = vld [vmem:[%s1 + $0x48] sm:$0xff]
    %v530 = vld [vmem:[%s1 + $0x50] sm:$0xff]
    %v531 = vld [vmem:[%s1 + $0x58] sm:$0xff]
    %v532 = vld [vmem:[%s1 + $0x60] sm:$0xff]
    %v533 = vld [vmem:[%s1 + $0x68] sm:$0xff]
    %v534 = vld [vmem:[%s1 + $0x70] sm:$0xff]
    %v535 = vld [vmem:[%s1 + $0x78] sm:$0xff]
    %v536 = vld [vmem:[%s1 + $0x80] sm:$0xff]
    %v537 = vld [vmem:[%s1 + $0x88] sm:$0xff]
    %v538 = vld [vmem:[%s1 + $0x90] sm:$0xff]
    %v539 = vld [vmem:[%s1 + $0x98] sm:$0xff]
    %v540 = vld [vmem:[%s1 + $0xa0] sm:$0xff]
    %v541 = vld [vmem:[%s1 + $0xa8] sm:$0xff]
    %v542 = vld [vmem:[%s1 + $0xb0] sm:$0xff]
    %v543 = vld [vmem:[%s1 + $0xb8] sm:$0xff]
    %v544 = vld [vmem:[%s1 + $0xc0] sm:$0xff]
    %v545 = vld [vmem:[%s1 + $0xc8] sm:$0xff]
    %v546 = vld [vmem:[%s1 + $0xd0] sm:$0xff]
    %v547 = vld [vmem:[%s1 + $0xd8] sm:$0xff]
    %v548 = vld [vmem:[%s1 + $0xe0] sm:$0xff]
    %v549 = vld [vmem:[%s1 + $0xe8] sm:$0xff]
    %v550 = vld [vmem:[%s1 + $0xf0] sm:$0xff]
    %v551 = vld [vmem:[%s1 + $0xf8] sm:$0xff]
    %v552 = vld [vmem:[#allocation5] sm:$0xff]
    %v553 = vld [vmem:[#allocation5 + $0x8] sm:$0xff]
    %v554 = vld [vmem:[#allocation5 + $0x10] sm:$0xff]
    %v555 = vld [vmem:[#allocation5 + $0x18] sm:$0x3f]
    %v556 = vperm.slane %v99, 0
    %vm557 = vcmask 244736
    %v559 = vsel %vm557, %v520, 0
    %v562 = vsel %vm557, %v521, 0
    %v565 = vsel %vm557, %v522, 0
    %v568 = vsel %vm557, %v523, 0
    %v571 = vsel %vm557, %v524, 0
    %v574 = vsel %vm557, %v525, 0
    %v577 = vsel %vm557, %v526, 0
    %v580 = vsel %vm557, %v527, 0
    %v583 = vsel %vm557, %v528, 0
    %v586 = vsel %vm557, %v529, 0
    %v589 = vsel %vm557, %v530, 0
    %v592 = vsel %vm557, %v531, 0
    %v595 = vsel %vm557, %v532, 0
    %v598 = vsel %vm557, %v533, 0
    %v601 = vsel %vm557, %v534, 0
    %v604 = vsel %vm557, %v535, 0
    %v607 = vsel %vm557, %v536, 0
    %v610 = vsel %vm557, %v537, 0
    %v613 = vsel %vm557, %v538, 0
    %v616 = vsel %vm557, %v539, 0
    %v619 = vsel %vm557, %v540, 0
    %v622 = vsel %vm557, %v541, 0
    %v625 = vsel %vm557, %v542, 0
    %v628 = vsel %vm557, %v543, 0
    %v631 = vsel %vm557, %v544, 0
    %v634 = vsel %vm557, %v545, 0
    %v637 = vsel %vm557, %v546, 0
    %v640 = vsel %vm557, %v547, 0
    %v643 = vsel %vm557, %v548, 0
    %v646 = vsel %vm557, %v549, 0
    %v649 = vsel %vm557, %v550, 0
    %v652 = vsel %vm557, %v551, 0
    %vm654 = vcmask 1045504
    %v656 = vsel %vm654, %v555, 0
    %658 = vmatpush.msra.mxu0 0.0
    %659 = vmatpush.msra.mxu0 0.0
    %660 = vmatpush.msra.mxu0 0.0
    %661 = vmatpush.msra.mxu0 0.0
    %662 = vmatpush.msra.mxu0 0.0
    %663 = vmatpush.msra.mxu0 0.0
    %664 = vmatpush.msra.mxu0 0.0
    %665 = vmatpush.msra.mxu0 0.0
    %666 = vmatpush.msra.mxu0 0.0
    %667 = vmatpush.msra.mxu0 0.0
    %668 = vmatpush.msra.mxu0 0.0
    %669 = vmatpush.msra.mxu0 0.0
    %670 = vmatpush.msra.mxu0 %v656
    %671 = vmatpush.msra.mxu0 %v554
    %672 = vmatpush.msra.mxu0 %v553
    %673 = vmatpush.msra.mxu0 %v552
    %674 = vmatmul.f32.gmra.mxu0 %v559
    %v675 = vpop.f32.mrf.mxu0
    %v676 = vadd.f32 %v556, %v675
    %677 = vmatmul.f32.gmra.mxu0 %v562
    %v678 = vpop.f32.mrf.mxu0
    %v679 = vadd.f32 %v556, %v678
    %680 = vmatmul.f32.gmra.mxu0 %v565
    %v681 = vpop.f32.mrf.mxu0
    %v682 = vadd.f32 %v556, %v681
    %683 = vmatmul.f32.gmra.mxu0 %v568
    %v684 = vpop.f32.mrf.mxu0
    %v685 = vadd.f32 %v556, %v684
    %686 = vmatmul.f32.gmra.mxu0 %v571
    %v687 = vpop.f32.mrf.mxu0
    %v688 = vadd.f32 %v556, %v687
    %689 = vmatmul.f32.gmra.mxu0 %v574
    %v690 = vpop.f32.mrf.mxu0
    %v691 = vadd.f32 %v556, %v690
    %692 = vmatmul.f32.gmra.mxu0 %v577
    %v693 = vpop.f32.mrf.mxu0
    %v694 = vadd.f32 %v556, %v693
    %695 = vmatmul.f32.gmra.mxu0 %v580
    %v696 = vpop.f32.mrf.mxu0
    %v697 = vadd.f32 %v556, %v696
    %698 = vmatmul.f32.gmra.mxu0 %v583
    %v699 = vpop.f32.mrf.mxu0
    %v700 = vadd.f32 %v556, %v699
    %701 = vmatmul.f32.gmra.mxu0 %v586
    %v702 = vpop.f32.mrf.mxu0
    %v703 = vadd.f32 %v556, %v702
    %704 = vmatmul.f32.gmra.mxu0 %v589
    %v705 = vpop.f32.mrf.mxu0
    %v706 = vadd.f32 %v556, %v705
    %707 = vmatmul.f32.gmra.mxu0 %v592
    %v708 = vpop.f32.mrf.mxu0
    %v709 = vadd.f32 %v556, %v708
    %710 = vmatmul.f32.gmra.mxu0 %v595
    %v711 = vpop.f32.mrf.mxu0
    %v712 = vadd.f32 %v556, %v711
    %713 = vmatmul.f32.gmra.mxu0 %v598
    %v714 = vpop.f32.mrf.mxu0
    %v715 = vadd.f32 %v556, %v714
    %716 = vmatmul.f32.gmra.mxu0 %v601
    %v717 = vpop.f32.mrf.mxu0
    %v718 = vadd.f32 %v556, %v717
    %719 = vmatmul.f32.gmra.mxu0 %v604
    %v720 = vpop.f32.mrf.mxu0
    %v721 = vadd.f32 %v556, %v720
    %722 = vmatmul.f32.gmra.mxu0 %v607
    %v723 = vpop.f32.mrf.mxu0
    %v724 = vadd.f32 %v556, %v723
    %725 = vmatmul.f32.gmra.mxu0 %v610
    %v726 = vpop.f32.mrf.mxu0
    %v727 = vadd.f32 %v556, %v726
    %728 = vmatmul.f32.gmra.mxu0 %v613
    %v729 = vpop.f32.mrf.mxu0
    %v730 = vadd.f32 %v556, %v729
    %731 = vmatmul.f32.gmra.mxu0 %v616
    %v732 = vpop.f32.mrf.mxu0
    %v733 = vadd.f32 %v556, %v732
    %734 = vmatmul.f32.gmra.mxu0 %v619
    %v735 = vpop.f32.mrf.mxu0
    %v736 = vadd.f32 %v556, %v735
    %737 = vmatmul.f32.gmra.mxu0 %v622
    %v738 = vpop.f32.mrf.mxu0
    %v739 = vadd.f32 %v556, %v738
    %740 = vmatmul.f32.gmra.mxu0 %v625
    %v741 = vpop.f32.mrf.mxu0
    %v742 = vadd.f32 %v556, %v741
    %743 = vmatmul.f32.gmra.mxu0 %v628
    %v744 = vpop.f32.mrf.mxu0
    %v745 = vadd.f32 %v556, %v744
    %746 = vmatmul.f32.gmra.mxu0 %v631
    %v747 = vpop.f32.mrf.mxu0
    %v748 = vadd.f32 %v556, %v747
    %749 = vmatmul.f32.gmra.mxu0 %v634
    %v750 = vpop.f32.mrf.mxu0
    %v751 = vadd.f32 %v556, %v750
    %752 = vmatmul.f32.gmra.mxu0 %v637
    %v753 = vpop.f32.mrf.mxu0
    %v754 = vadd.f32 %v556, %v753
    %755 = vmatmul.f32.gmra.mxu0 %v640
    %v756 = vpop.f32.mrf.mxu0
    %v757 = vadd.f32 %v556, %v756
    %758 = vmatmul.f32.gmra.mxu0 %v643
    %v759 = vpop.f32.mrf.mxu0
    %v760 = vadd.f32 %v556, %v759
    %761 = vmatmul.f32.gmra.mxu0 %v646
    %v762 = vpop.f32.mrf.mxu0
    %v763 = vadd.f32 %v556, %v762
    %764 = vmatmul.f32.gmra.mxu0 %v649
    %v765 = vpop.f32.mrf.mxu0
    %v766 = vadd.f32 %v556, %v765
    %767 = vmatmul.f32.gmra.mxu0 %v652
    %v768 = vpop.f32.mrf.mxu0
    %v769 = vadd.f32 %v556, %v768
    %770 = vdwg.mxu0
    %771 = vadd.xlane.f32.xlu0 %v676
    %v772 = vpop.xlane.xlu0 %771
    %773 = vadd.xlane.f32.xlu0 %v679
    %v774 = vpop.xlane.xlu0 %773
    %775 = vadd.xlane.f32.xlu0 %v682
    %v776 = vpop.xlane.xlu0 %775
    %777 = vadd.xlane.f32.xlu0 %v685
    %v778 = vpop.xlane.xlu0 %777
    %779 = vadd.xlane.f32.xlu0 %v688
    %v780 = vpop.xlane.xlu0 %779
    %781 = vadd.xlane.f32.xlu0 %v691
    %v782 = vpop.xlane.xlu0 %781
    %783 = vadd.xlane.f32.xlu0 %v694
    %v784 = vpop.xlane.xlu0 %783
    %785 = vadd.xlane.f32.xlu0 %v697
    %v786 = vpop.xlane.xlu0 %785
    %787 = vadd.xlane.f32.xlu0 %v700
    %v788 = vpop.xlane.xlu0 %787
    %789 = vadd.xlane.f32.xlu0 %v703
    %v790 = vpop.xlane.xlu0 %789
    %791 = vadd.xlane.f32.xlu0 %v706
    %v792 = vpop.xlane.xlu0 %791
    %793 = vadd.xlane.f32.xlu0 %v709
    %v794 = vpop.xlane.xlu0 %793
    %795 = vadd.xlane.f32.xlu0 %v712
    %v796 = vpop.xlane.xlu0 %795
    %797 = vadd.xlane.f32.xlu0 %v715
    %v798 = vpop.xlane.xlu0 %797
    %799 = vadd.xlane.f32.xlu0 %v718
    %v800 = vpop.xlane.xlu0 %799
    %801 = vadd.xlane.f32.xlu0 %v721
    %v802 = vpop.xlane.xlu0 %801
    %803 = vadd.xlane.f32.xlu0 %v724
    %v804 = vpop.xlane.xlu0 %803
    %805 = vadd.xlane.f32.xlu0 %v727
    %v806 = vpop.xlane.xlu0 %805
    %807 = vadd.xlane.f32.xlu0 %v730
    %v808 = vpop.xlane.xlu0 %807
    %809 = vadd.xlane.f32.xlu0 %v733
    %v810 = vpop.xlane.xlu0 %809
    %811 = vadd.xlane.f32.xlu0 %v736
    %v812 = vpop.xlane.xlu0 %811
    %813 = vadd.xlane.f32.xlu0 %v739
    %v814 = vpop.xlane.xlu0 %813
    %815 = vadd.xlane.f32.xlu0 %v742
    %v816 = vpop.xlane.xlu0 %815
    %817 = vadd.xlane.f32.xlu0 %v745
    %v818 = vpop.xlane.xlu0 %817
    %819 = vadd.xlane.f32.xlu0 %v748
    %v820 = vpop.xlane.xlu0 %819
    %821 = vadd.xlane.f32.xlu0 %v751
    %v822 = vpop.xlane.xlu0 %821
    %823 = vadd.xlane.f32.xlu0 %v754
    %v824 = vpop.xlane.xlu0 %823
    %825 = vadd.xlane.f32.xlu0 %v757
    %v826 = vpop.xlane.xlu0 %825
    %827 = vadd.xlane.f32.xlu0 %v760
    %v828 = vpop.xlane.xlu0 %827
    %829 = vadd.xlane.f32.xlu0 %v763
    %v830 = vpop.xlane.xlu0 %829
    %831 = vadd.xlane.f32.xlu0 %v766
    %v832 = vpop.xlane.xlu0 %831
    %833 = vadd.xlane.f32.xlu0 %v769
    %v834 = vpop.xlane.xlu0 %833
    %v835 = vrcp.pop 128.0
    %v836 = vmul.f32 128.0, %v835
    %v837 = vsub.f32 1.0, %v836
    %v838 = vmul.f32 %v835, %v837
    %v839 = vadd.f32 %v835, %v838
    %vm840 = vweird.f32 %v835
    %v841 = vsel %vm840, %v835, %v839
    %v842 = vmul.f32 %v772, %v841
    %v843 = vmul.f32 %v774, %v841
    %v844 = vmul.f32 %v776, %v841
    %v845 = vmul.f32 %v778, %v841
    %v846 = vmul.f32 %v780, %v841
    %v847 = vmul.f32 %v782, %v841
    %v848 = vmul.f32 %v784, %v841
    %v849 = vmul.f32 %v786, %v841
    %v850 = vmul.f32 %v788, %v841
    %v851 = vmul.f32 %v790, %v841
    %v852 = vmul.f32 %v792, %v841
    %v853 = vmul.f32 %v794, %v841
    %v854 = vmul.f32 %v796, %v841
    %v855 = vmul.f32 %v798, %v841
    %v856 = vmul.f32 %v800, %v841
    %v857 = vmul.f32 %v802, %v841
    %v858 = vmul.f32 %v804, %v841
    %v859 = vmul.f32 %v806, %v841
    %v860 = vmul.f32 %v808, %v841
    %v861 = vmul.f32 %v810, %v841
    %v862 = vmul.f32 %v812, %v841
    %v863 = vmul.f32 %v814, %v841
    %v864 = vmul.f32 %v816, %v841
    %v865 = vmul.f32 %v818, %v841
    %v866 = vmul.f32 %v820, %v841
    %v867 = vmul.f32 %v822, %v841
    %v868 = vmul.f32 %v824, %v841
    %v869 = vmul.f32 %v826, %v841
    %v870 = vmul.f32 %v828, %v841
    %v871 = vmul.f32 %v830, %v841
    %v872 = vmul.f32 %v832, %v841
    %v873 = vmul.f32 %v834, %v841
    %v874 = vmul.f32 %v676, %v676
    %v875 = vmul.f32 %v679, %v679
    %v876 = vmul.f32 %v682, %v682
    %v877 = vmul.f32 %v685, %v685
    %v878 = vmul.f32 %v688, %v688
    %v879 = vmul.f32 %v691, %v691
    %v880 = vmul.f32 %v694, %v694
    %v881 = vmul.f32 %v697, %v697
    %v882 = vmul.f32 %v700, %v700
    %v883 = vmul.f32 %v703, %v703
    %v884 = vmul.f32 %v706, %v706
    %v885 = vmul.f32 %v709, %v709
    %v886 = vmul.f32 %v712, %v712
    %v887 = vmul.f32 %v715, %v715
    %v888 = vmul.f32 %v718, %v718
    %v889 = vmul.f32 %v721, %v721
    %v890 = vmul.f32 %v724, %v724
    %v891 = vmul.f32 %v727, %v727
    %v892 = vmul.f32 %v730, %v730
    %v893 = vmul.f32 %v733, %v733
    %v894 = vmul.f32 %v736, %v736
    %v895 = vmul.f32 %v739, %v739
    %v896 = vmul.f32 %v742, %v742
    %v897 = vmul.f32 %v745, %v745
    %v898 = vmul.f32 %v748, %v748
    %v899 = vmul.f32 %v751, %v751
    %v900 = vmul.f32 %v754, %v754
    %v901 = vmul.f32 %v757, %v757
    %v902 = vmul.f32 %v760, %v760
    %v903 = vmul.f32 %v763, %v763
    %v904 = vmul.f32 %v766, %v766
    %v905 = vmul.f32 %v769, %v769
    %906 = vadd.xlane.f32.xlu0 %v874
    %v907 = vpop.xlane.xlu0 %906
    %908 = vadd.xlane.f32.xlu0 %v875
    %v909 = vpop.xlane.xlu0 %908
    %910 = vadd.xlane.f32.xlu0 %v876
    %v911 = vpop.xlane.xlu0 %910
    %912 = vadd.xlane.f32.xlu0 %v877
    %v913 = vpop.xlane.xlu0 %912
    %914 = vadd.xlane.f32.xlu0 %v878
    %v915 = vpop.xlane.xlu0 %914
    %916 = vadd.xlane.f32.xlu0 %v879
    %v917 = vpop.xlane.xlu0 %916
    %918 = vadd.xlane.f32.xlu0 %v880
    %v919 = vpop.xlane.xlu0 %918
    %920 = vadd.xlane.f32.xlu0 %v881
    %v921 = vpop.xlane.xlu0 %920
    %922 = vadd.xlane.f32.xlu0 %v882
    %v923 = vpop.xlane.xlu0 %922
    %924 = vadd.xlane.f32.xlu0 %v883
    %v925 = vpop.xlane.xlu0 %924
    %926 = vadd.xlane.f32.xlu0 %v884
    %v927 = vpop.xlane.xlu0 %926
    %928 = vadd.xlane.f32.xlu0 %v885
    %v929 = vpop.xlane.xlu0 %928
    %930 = vadd.xlane.f32.xlu0 %v886
    %v931 = vpop.xlane.xlu0 %930
    %932 = vadd.xlane.f32.xlu0 %v887
    %v933 = vpop.xlane.xlu0 %932
    %934 = vadd.xlane.f32.xlu0 %v888
    %v935 = vpop.xlane.xlu0 %934
    %936 = vadd.xlane.f32.xlu0 %v889
    %v937 = vpop.xlane.xlu0 %936
    %938 = vadd.xlane.f32.xlu0 %v890
    %v939 = vpop.xlane.xlu0 %938
    %940 = vadd.xlane.f32.xlu0 %v891
    %v941 = vpop.xlane.xlu0 %940
    %942 = vadd.xlane.f32.xlu0 %v892
    %v943 = vpop.xlane.xlu0 %942
    %944 = vadd.xlane.f32.xlu0 %v893
    %v945 = vpop.xlane.xlu0 %944
    %946 = vadd.xlane.f32.xlu0 %v894
    %v947 = vpop.xlane.xlu0 %946
    %948 = vadd.xlane.f32.xlu0 %v895
    %v949 = vpop.xlane.xlu0 %948
    %950 = vadd.xlane.f32.xlu0 %v896
    %v951 = vpop.xlane.xlu0 %950
    %952 = vadd.xlane.f32.xlu0 %v897
    %v953 = vpop.xlane.xlu0 %952
    %954 = vadd.xlane.f32.xlu0 %v898
    %v955 = vpop.xlane.xlu0 %954
    %956 = vadd.xlane.f32.xlu0 %v899
    %v957 = vpop.xlane.xlu0 %956
    %958 = vadd.xlane.f32.xlu0 %v900
    %v959 = vpop.xlane.xlu0 %958
    %960 = vadd.xlane.f32.xlu0 %v901
    %v961 = vpop.xlane.xlu0 %960
    %962 = vadd.xlane.f32.xlu0 %v902
    %v963 = vpop.xlane.xlu0 %962
    %964 = vadd.xlane.f32.xlu0 %v903
    %v965 = vpop.xlane.xlu0 %964
    %966 = vadd.xlane.f32.xlu0 %v904
    %v967 = vpop.xlane.xlu0 %966
    %968 = vadd.xlane.f32.xlu0 %v905
    %v969 = vpop.xlane.xlu0 %968
    %v970 = vmul.f32 %v907, %v841
    %v971 = vmul.f32 %v909, %v841
    %v972 = vmul.f32 %v911, %v841
    %v973 = vmul.f32 %v913, %v841
    %v974 = vmul.f32 %v915, %v841
    %v975 = vmul.f32 %v917, %v841
    %v976 = vmul.f32 %v919, %v841
    %v977 = vmul.f32 %v921, %v841
    %v978 = vmul.f32 %v923, %v841
    %v979 = vmul.f32 %v925, %v841
    %v980 = vmul.f32 %v927, %v841
    %v981 = vmul.f32 %v929, %v841
    %v982 = vmul.f32 %v931, %v841
    %v983 = vmul.f32 %v933, %v841
    %v984 = vmul.f32 %v935, %v841
    %v985 = vmul.f32 %v937, %v841
    %v986 = vmul.f32 %v939, %v841
    %v987 = vmul.f32 %v941, %v841
    %v988 = vmul.f32 %v943, %v841
    %v989 = vmul.f32 %v945, %v841
    %v990 = vmul.f32 %v947, %v841
    %v991 = vmul.f32 %v949, %v841
    %v992 = vmul.f32 %v951, %v841
    %v993 = vmul.f32 %v953, %v841
    %v994 = vmul.f32 %v955, %v841
    %v995 = vmul.f32 %v957, %v841
    %v996 = vmul.f32 %v959, %v841
    %v997 = vmul.f32 %v961, %v841
    %v998 = vmul.f32 %v963, %v841
    %v999 = vmul.f32 %v965, %v841
    %v1000 = vmul.f32 %v967, %v841
    %v1001 = vmul.f32 %v969, %v841
    %v1002 = vmul.f32 %v842, %v842
    %v1003 = vmul.f32 %v843, %v843
    %v1004 = vmul.f32 %v844, %v844
    %v1005 = vmul.f32 %v845, %v845
    %v1006 = vmul.f32 %v846, %v846
    %v1007 = vmul.f32 %v847, %v847
    %v1008 = vmul.f32 %v848, %v848
    %v1009 = vmul.f32 %v849, %v849
    %v1010 = vmul.f32 %v850, %v850
    %v1011 = vmul.f32 %v851, %v851
    %v1012 = vmul.f32 %v852, %v852
    %v1013 = vmul.f32 %v853, %v853
    %v1014 = vmul.f32 %v854, %v854
    %v1015 = vmul.f32 %v855, %v855
    %v1016 = vmul.f32 %v856, %v856
    %v1017 = vmul.f32 %v857, %v857
    %v1018 = vmul.f32 %v858, %v858
    %v1019 = vmul.f32 %v859, %v859
    %v1020 = vmul.f32 %v860, %v860
    %v1021 = vmul.f32 %v861, %v861
    %v1022 = vmul.f32 %v862, %v862
    %v1023 = vmul.f32 %v863, %v863
    %v1024 = vmul.f32 %v864, %v864
    %v1025 = vmul.f32 %v865, %v865
    %v1026 = vmul.f32 %v866, %v866
    %v1027 = vmul.f32 %v867, %v867
    %v1028 = vmul.f32 %v868, %v868
    %v1029 = vmul.f32 %v869, %v869
    %v1030 = vmul.f32 %v870, %v870
    %v1031 = vmul.f32 %v871, %v871
    %v1032 = vmul.f32 %v872, %v872
    %v1033 = vmul.f32 %v873, %v873
    %v1034 = vsub.f32 %v970, %v1002
    %v1035 = vsub.f32 %v971, %v1003
    %v1036 = vsub.f32 %v972, %v1004
    %v1037 = vsub.f32 %v973, %v1005
    %v1038 = vsub.f32 %v974, %v1006
    %v1039 = vsub.f32 %v975, %v1007
    %v1040 = vsub.f32 %v976, %v1008
    %v1041 = vsub.f32 %v977, %v1009
    %v1042 = vsub.f32 %v978, %v1010
    %v1043 = vsub.f32 %v979, %v1011
    %v1044 = vsub.f32 %v980, %v1012
    %v1045 = vsub.f32 %v981, %v1013
    %v1046 = vsub.f32 %v982, %v1014
    %v1047 = vsub.f32 %v983, %v1015
    %v1048 = vsub.f32 %v984, %v1016
    %v1049 = vsub.f32 %v985, %v1017
    %v1050 = vsub.f32 %v986, %v1018
    %v1051 = vsub.f32 %v987, %v1019
    %v1052 = vsub.f32 %v988, %v1020
    %v1053 = vsub.f32 %v989, %v1021
    %v1054 = vsub.f32 %v990, %v1022
    %v1055 = vsub.f32 %v991, %v1023
    %v1056 = vsub.f32 %v992, %v1024
    %v1057 = vsub.f32 %v993, %v1025
    %v1058 = vsub.f32 %v994, %v1026
    %v1059 = vsub.f32 %v995, %v1027
    %v1060 = vsub.f32 %v996, %v1028
    %v1061 = vsub.f32 %v997, %v1029
    %v1062 = vsub.f32 %v998, %v1030
    %v1063 = vsub.f32 %v999, %v1031
    %v1064 = vsub.f32 %v1000, %v1032
    %v1065 = vsub.f32 %v1001, %v1033
    %v1066 = vmax.f32 %v1034, 0.0
    %v1067 = vmax.f32 %v1035, 0.0
    %v1068 = vmax.f32 %v1036, 0.0
    %v1069 = vmax.f32 %v1037, 0.0
    %v1070 = vmax.f32 %v1038, 0.0
    %v1071 = vmax.f32 %v1039, 0.0
    %v1072 = vmax.f32 %v1040, 0.0
    %v1073 = vmax.f32 %v1041, 0.0
    %v1074 = vmax.f32 %v1042, 0.0
    %v1075 = vmax.f32 %v1043, 0.0
    %v1076 = vmax.f32 %v1044, 0.0
    %v1077 = vmax.f32 %v1045, 0.0
    %v1078 = vmax.f32 %v1046, 0.0
    %v1079 = vmax.f32 %v1047, 0.0
    %v1080 = vmax.f32 %v1048, 0.0
    %v1081 = vmax.f32 %v1049, 0.0
    %v1082 = vmax.f32 %v1050, 0.0
    %v1083 = vmax.f32 %v1051, 0.0
    %v1084 = vmax.f32 %v1052, 0.0
    %v1085 = vmax.f32 %v1053, 0.0
    %v1086 = vmax.f32 %v1054, 0.0
    %v1087 = vmax.f32 %v1055, 0.0
    %v1088 = vmax.f32 %v1056, 0.0
    %v1089 = vmax.f32 %v1057, 0.0
    %v1090 = vmax.f32 %v1058, 0.0
    %v1091 = vmax.f32 %v1059, 0.0
    %v1092 = vmax.f32 %v1060, 0.0
    %v1093 = vmax.f32 %v1061, 0.0
    %v1094 = vmax.f32 %v1062, 0.0
    %v1095 = vmax.f32 %v1063, 0.0
    %v1096 = vmax.f32 %v1064, 0.0
    %v1097 = vmax.f32 %v1065, 0.0
    %v1098 = vsub.f32 %v676, %v842
    %v1099 = vsub.f32 %v679, %v843
    %v1100 = vsub.f32 %v682, %v844
    %v1101 = vsub.f32 %v685, %v845
    %v1102 = vsub.f32 %v688, %v846
    %v1103 = vsub.f32 %v691, %v847
    %v1104 = vsub.f32 %v694, %v848
    %v1105 = vsub.f32 %v697, %v849
    %v1106 = vsub.f32 %v700, %v850
    %v1107 = vsub.f32 %v703, %v851
    %v1108 = vsub.f32 %v706, %v852
    %v1109 = vsub.f32 %v709, %v853
    %v1110 = vsub.f32 %v712, %v854
    %v1111 = vsub.f32 %v715, %v855
    %v1112 = vsub.f32 %v718, %v856
    %v1113 = vsub.f32 %v721, %v857
    %v1114 = vsub.f32 %v724, %v858
    %v1115 = vsub.f32 %v727, %v859
    %v1116 = vsub.f32 %v730, %v860
    %v1117 = vsub.f32 %v733, %v861
    %v1118 = vsub.f32 %v736, %v862
    %v1119 = vsub.f32 %v739, %v863
    %v1120 = vsub.f32 %v742, %v864
    %v1121 = vsub.f32 %v745, %v865
    %v1122 = vsub.f32 %v748, %v866
    %v1123 = vsub.f32 %v751, %v867
    %v1124 = vsub.f32 %v754, %v868
    %v1125 = vsub.f32 %v757, %v869
    %v1126 = vsub.f32 %v760, %v870
    %v1127 = vsub.f32 %v763, %v871
    %v1128 = vsub.f32 %v766, %v872
    %v1129 = vsub.f32 %v769, %v873
    %v1130 = vadd.f32 %v1066, 1e-05
    %v1131 = vadd.f32 %v1067, 1e-05
    %v1132 = vadd.f32 %v1068, 1e-05
    %v1133 = vadd.f32 %v1069, 1e-05
    %v1134 = vadd.f32 %v1070, 1e-05
    %v1135 = vadd.f32 %v1071, 1e-05
    %v1136 = vadd.f32 %v1072, 1e-05
    %v1137 = vadd.f32 %v1073, 1e-05
    %v1138 = vadd.f32 %v1074, 1e-05
    %v1139 = vadd.f32 %v1075, 1e-05
    %v1140 = vadd.f32 %v1076, 1e-05
    %v1141 = vadd.f32 %v1077, 1e-05
    %v1142 = vadd.f32 %v1078, 1e-05
    %v1143 = vadd.f32 %v1079, 1e-05
    %v1144 = vadd.f32 %v1080, 1e-05
    %v1145 = vadd.f32 %v1081, 1e-05
    %v1146 = vadd.f32 %v1082, 1e-05
    %v1147 = vadd.f32 %v1083, 1e-05
    %v1148 = vadd.f32 %v1084, 1e-05
    %v1149 = vadd.f32 %v1085, 1e-05
    %v1150 = vadd.f32 %v1086, 1e-05
    %v1151 = vadd.f32 %v1087, 1e-05
    %v1152 = vadd.f32 %v1088, 1e-05
    %v1153 = vadd.f32 %v1089, 1e-05
    %v1154 = vadd.f32 %v1090, 1e-05
    %v1155 = vadd.f32 %v1091, 1e-05
    %v1156 = vadd.f32 %v1092, 1e-05
    %v1157 = vadd.f32 %v1093, 1e-05
    %v1158 = vadd.f32 %v1094, 1e-05
    %v1159 = vadd.f32 %v1095, 1e-05
    %v1160 = vadd.f32 %v1096, 1e-05
    %v1161 = vadd.f32 %v1097, 1e-05
    %v1162 = vrsqrt.pop %v1130
    %v1163 = vmul.f32 %v1162, %v1130
    %v1164 = vmul.f32 %v1163, %v1162
    %v1165 = vmul.f32 0.5, %v1164
    %v1166 = vsub.f32 1.5, %v1165
    %v1167 = vmul.f32 %v1162, %v1166
    %vm1168 = vweird.f32 %v1130
    %vm1169 = vweird.f32 %v1162
    %vm1170 = vmor %vm1168, %vm1169
    %v1171 = vsel %vm1170, %v1162, %v1167
    %v1172 = vrsqrt.pop %v1131
    %v1173 = vmul.f32 %v1172, %v1131
    %v1174 = vmul.f32 %v1173, %v1172
    %v1175 = vmul.f32 0.5, %v1174
    %v1176 = vsub.f32 1.5, %v1175
    %v1177 = vmul.f32 %v1172, %v1176
    %vm1178 = vweird.f32 %v1131
    %vm1179 = vweird.f32 %v1172
    %vm1180 = vmor %vm1178, %vm1179
    %v1181 = vsel %vm1180, %v1172, %v1177
    %v1182 = vrsqrt.pop %v1132
    %v1183 = vmul.f32 %v1182, %v1132
    %v1184 = vmul.f32 %v1183, %v1182
    %v1185 = vmul.f32 0.5, %v1184
    %v1186 = vsub.f32 1.5, %v1185
    %v1187 = vmul.f32 %v1182, %v1186
    %vm1188 = vweird.f32 %v1132
    %vm1189 = vweird.f32 %v1182
    %vm1190 = vmor %vm1188, %vm1189
    %v1191 = vsel %vm1190, %v1182, %v1187
    %v1192 = vrsqrt.pop %v1133
    %v1193 = vmul.f32 %v1192, %v1133
    %v1194 = vmul.f32 %v1193, %v1192
    %v1195 = vmul.f32 0.5, %v1194
    %v1196 = vsub.f32 1.5, %v1195
    %v1197 = vmul.f32 %v1192, %v1196
    %vm1198 = vweird.f32 %v1133
    %vm1199 = vweird.f32 %v1192
    %vm1200 = vmor %vm1198, %vm1199
    %v1201 = vsel %vm1200, %v1192, %v1197
    %v1202 = vrsqrt.pop %v1134
    %v1203 = vmul.f32 %v1202, %v1134
    %v1204 = vmul.f32 %v1203, %v1202
    %v1205 = vmul.f32 0.5, %v1204
    %v1206 = vsub.f32 1.5, %v1205
    %v1207 = vmul.f32 %v1202, %v1206
    %vm1208 = vweird.f32 %v1134
    %vm1209 = vweird.f32 %v1202
    %vm1210 = vmor %vm1208, %vm1209
    %v1211 = vsel %vm1210, %v1202, %v1207
    %v1212 = vrsqrt.pop %v1135
    %v1213 = vmul.f32 %v1212, %v1135
    %v1214 = vmul.f32 %v1213, %v1212
    %v1215 = vmul.f32 0.5, %v1214
    %v1216 = vsub.f32 1.5, %v1215
    %v1217 = vmul.f32 %v1212, %v1216
    %vm1218 = vweird.f32 %v1135
    %vm1219 = vweird.f32 %v1212
    %vm1220 = vmor %vm1218, %vm1219
    %v1221 = vsel %vm1220, %v1212, %v1217
    %v1222 = vrsqrt.pop %v1136
    %v1223 = vmul.f32 %v1222, %v1136
    %v1224 = vmul.f32 %v1223, %v1222
    %v1225 = vmul.f32 0.5, %v1224
    %v1226 = vsub.f32 1.5, %v1225
    %v1227 = vmul.f32 %v1222, %v1226
    %vm1228 = vweird.f32 %v1136
    %vm1229 = vweird.f32 %v1222
    %vm1230 = vmor %vm1228, %vm1229
    %v1231 = vsel %vm1230, %v1222, %v1227
    %v1232 = vrsqrt.pop %v1137
    %v1233 = vmul.f32 %v1232, %v1137
    %v1234 = vmul.f32 %v1233, %v1232
    %v1235 = vmul.f32 0.5, %v1234
    %v1236 = vsub.f32 1.5, %v1235
    %v1237 = vmul.f32 %v1232, %v1236
    %vm1238 = vweird.f32 %v1137
    %vm1239 = vweird.f32 %v1232
    %vm1240 = vmor %vm1238, %vm1239
    %v1241 = vsel %vm1240, %v1232, %v1237
    %v1242 = vrsqrt.pop %v1138
    %v1243 = vmul.f32 %v1242, %v1138
    %v1244 = vmul.f32 %v1243, %v1242
    %v1245 = vmul.f32 0.5, %v1244
    %v1246 = vsub.f32 1.5, %v1245
    %v1247 = vmul.f32 %v1242, %v1246
    %vm1248 = vweird.f32 %v1138
    %vm1249 = vweird.f32 %v1242
    %vm1250 = vmor %vm1248, %vm1249
    %v1251 = vsel %vm1250, %v1242, %v1247
    %v1252 = vrsqrt.pop %v1139
    %v1253 = vmul.f32 %v1252, %v1139
    %v1254 = vmul.f32 %v1253, %v1252
    %v1255 = vmul.f32 0.5, %v1254
    %v1256 = vsub.f32 1.5, %v1255
    %v1257 = vmul.f32 %v1252, %v1256
    %vm1258 = vweird.f32 %v1139
    %vm1259 = vweird.f32 %v1252
    %vm1260 = vmor %vm1258, %vm1259
    %v1261 = vsel %vm1260, %v1252, %v1257
    %v1262 = vrsqrt.pop %v1140
    %v1263 = vmul.f32 %v1262, %v1140
    %v1264 = vmul.f32 %v1263, %v1262
    %v1265 = vmul.f32 0.5, %v1264
    %v1266 = vsub.f32 1.5, %v1265
    %v1267 = vmul.f32 %v1262, %v1266
    %vm1268 = vweird.f32 %v1140
    %vm1269 = vweird.f32 %v1262
    %vm1270 = vmor %vm1268, %vm1269
    %v1271 = vsel %vm1270, %v1262, %v1267
    %v1272 = vrsqrt.pop %v1141
    %v1273 = vmul.f32 %v1272, %v1141
    %v1274 = vmul.f32 %v1273, %v1272
    %v1275 = vmul.f32 0.5, %v1274
    %v1276 = vsub.f32 1.5, %v1275
    %v1277 = vmul.f32 %v1272, %v1276
    %vm1278 = vweird.f32 %v1141
    %vm1279 = vweird.f32 %v1272
    %vm1280 = vmor %vm1278, %vm1279
    %v1281 = vsel %vm1280, %v1272, %v1277
    %v1282 = vrsqrt.pop %v1142
    %v1283 = vmul.f32 %v1282, %v1142
    %v1284 = vmul.f32 %v1283, %v1282
    %v1285 = vmul.f32 0.5, %v1284
    %v1286 = vsub.f32 1.5, %v1285
    %v1287 = vmul.f32 %v1282, %v1286
    %vm1288 = vweird.f32 %v1142
    %vm1289 = vweird.f32 %v1282
    %vm1290 = vmor %vm1288, %vm1289
    %v1291 = vsel %vm1290, %v1282, %v1287
    %v1292 = vrsqrt.pop %v1143
    %v1293 = vmul.f32 %v1292, %v1143
    %v1294 = vmul.f32 %v1293, %v1292
    %v1295 = vmul.f32 0.5, %v1294
    %v1296 = vsub.f32 1.5, %v1295
    %v1297 = vmul.f32 %v1292, %v1296
    %vm1298 = vweird.f32 %v1143
    %vm1299 = vweird.f32 %v1292
    %vm1300 = vmor %vm1298, %vm1299
    %v1301 = vsel %vm1300, %v1292, %v1297
    %v1302 = vrsqrt.pop %v1144
    %v1303 = vmul.f32 %v1302, %v1144
    %v1304 = vmul.f32 %v1303, %v1302
    %v1305 = vmul.f32 0.5, %v1304
    %v1306 = vsub.f32 1.5, %v1305
    %v1307 = vmul.f32 %v1302, %v1306
    %vm1308 = vweird.f32 %v1144
    %vm1309 = vweird.f32 %v1302
    %vm1310 = vmor %vm1308, %vm1309
    %v1311 = vsel %vm1310, %v1302, %v1307
    %v1312 = vrsqrt.pop %v1145
    %v1313 = vmul.f32 %v1312, %v1145
    %v1314 = vmul.f32 %v1313, %v1312
    %v1315 = vmul.f32 0.5, %v1314
    %v1316 = vsub.f32 1.5, %v1315
    %v1317 = vmul.f32 %v1312, %v1316
    %vm1318 = vweird.f32 %v1145
    %vm1319 = vweird.f32 %v1312
    %vm1320 = vmor %vm1318, %vm1319
    %v1321 = vsel %vm1320, %v1312, %v1317
    %v1322 = vrsqrt.pop %v1146
    %v1323 = vmul.f32 %v1322, %v1146
    %v1324 = vmul.f32 %v1323, %v1322
    %v1325 = vmul.f32 0.5, %v1324
    %v1326 = vsub.f32 1.5, %v1325
    %v1327 = vmul.f32 %v1322, %v1326
    %vm1328 = vweird.f32 %v1146
    %vm1329 = vweird.f32 %v1322
    %vm1330 = vmor %vm1328, %vm1329
    %v1331 = vsel %vm1330, %v1322, %v1327
    %v1332 = vrsqrt.pop %v1147
    %v1333 = vmul.f32 %v1332, %v1147
    %v1334 = vmul.f32 %v1333, %v1332
    %v1335 = vmul.f32 0.5, %v1334
    %v1336 = vsub.f32 1.5, %v1335
    %v1337 = vmul.f32 %v1332, %v1336
    %vm1338 = vweird.f32 %v1147
    %vm1339 = vweird.f32 %v1332
    %vm1340 = vmor %vm1338, %vm1339
    %v1341 = vsel %vm1340, %v1332, %v1337
    %v1342 = vrsqrt.pop %v1148
    %v1343 = vmul.f32 %v1342, %v1148
    %v1344 = vmul.f32 %v1343, %v1342
    %v1345 = vmul.f32 0.5, %v1344
    %v1346 = vsub.f32 1.5, %v1345
    %v1347 = vmul.f32 %v1342, %v1346
    %vm1348 = vweird.f32 %v1148
    %vm1349 = vweird.f32 %v1342
    %vm1350 = vmor %vm1348, %vm1349
    %v1351 = vsel %vm1350, %v1342, %v1347
    %v1352 = vrsqrt.pop %v1149
    %v1353 = vmul.f32 %v1352, %v1149
    %v1354 = vmul.f32 %v1353, %v1352
    %v1355 = vmul.f32 0.5, %v1354
    %v1356 = vsub.f32 1.5, %v1355
    %v1357 = vmul.f32 %v1352, %v1356
    %vm1358 = vweird.f32 %v1149
    %vm1359 = vweird.f32 %v1352
    %vm1360 = vmor %vm1358, %vm1359
    %v1361 = vsel %vm1360, %v1352, %v1357
    %v1362 = vrsqrt.pop %v1150
    %v1363 = vmul.f32 %v1362, %v1150
    %v1364 = vmul.f32 %v1363, %v1362
    %v1365 = vmul.f32 0.5, %v1364
    %v1366 = vsub.f32 1.5, %v1365
    %v1367 = vmul.f32 %v1362, %v1366
    %vm1368 = vweird.f32 %v1150
    %vm1369 = vweird.f32 %v1362
    %vm1370 = vmor %vm1368, %vm1369
    %v1371 = vsel %vm1370, %v1362, %v1367
    %v1372 = vrsqrt.pop %v1151
    %v1373 = vmul.f32 %v1372, %v1151
    %v1374 = vmul.f32 %v1373, %v1372
    %v1375 = vmul.f32 0.5, %v1374
    %v1376 = vsub.f32 1.5, %v1375
    %v1377 = vmul.f32 %v1372, %v1376
    %vm1378 = vweird.f32 %v1151
    %vm1379 = vweird.f32 %v1372
    %vm1380 = vmor %vm1378, %vm1379
    %v1381 = vsel %vm1380, %v1372, %v1377
    %v1382 = vrsqrt.pop %v1152
    %v1383 = vmul.f32 %v1382, %v1152
    %v1384 = vmul.f32 %v1383, %v1382
    %v1385 = vmul.f32 0.5, %v1384
    %v1386 = vsub.f32 1.5, %v1385
    %v1387 = vmul.f32 %v1382, %v1386
    %vm1388 = vweird.f32 %v1152
    %vm1389 = vweird.f32 %v1382
    %vm1390 = vmor %vm1388, %vm1389
    %v1391 = vsel %vm1390, %v1382, %v1387
    %v1392 = vrsqrt.pop %v1153
    %v1393 = vmul.f32 %v1392, %v1153
    %v1394 = vmul.f32 %v1393, %v1392
    %v1395 = vmul.f32 0.5, %v1394
    %v1396 = vsub.f32 1.5, %v1395
    %v1397 = vmul.f32 %v1392, %v1396
    %vm1398 = vweird.f32 %v1153
    %vm1399 = vweird.f32 %v1392
    %vm1400 = vmor %vm1398, %vm1399
    %v1401 = vsel %vm1400, %v1392, %v1397
    %v1402 = vrsqrt.pop %v1154
    %v1403 = vmul.f32 %v1402, %v1154
    %v1404 = vmul.f32 %v1403, %v1402
    %v1405 = vmul.f32 0.5, %v1404
    %v1406 = vsub.f32 1.5, %v1405
    %v1407 = vmul.f32 %v1402, %v1406
    %vm1408 = vweird.f32 %v1154
    %vm1409 = vweird.f32 %v1402
    %vm1410 = vmor %vm1408, %vm1409
    %v1411 = vsel %vm1410, %v1402, %v1407
    %v1412 = vrsqrt.pop %v1155
    %v1413 = vmul.f32 %v1412, %v1155
    %v1414 = vmul.f32 %v1413, %v1412
    %v1415 = vmul.f32 0.5, %v1414
    %v1416 = vsub.f32 1.5, %v1415
    %v1417 = vmul.f32 %v1412, %v1416
    %vm1418 = vweird.f32 %v1155
    %vm1419 = vweird.f32 %v1412
    %vm1420 = vmor %vm1418, %vm1419
    %v1421 = vsel %vm1420, %v1412, %v1417
    %v1422 = vrsqrt.pop %v1156
    %v1423 = vmul.f32 %v1422, %v1156
    %v1424 = vmul.f32 %v1423, %v1422
    %v1425 = vmul.f32 0.5, %v1424
    %v1426 = vsub.f32 1.5, %v1425
    %v1427 = vmul.f32 %v1422, %v1426
    %vm1428 = vweird.f32 %v1156
    %vm1429 = vweird.f32 %v1422
    %vm1430 = vmor %vm1428, %vm1429
    %v1431 = vsel %vm1430, %v1422, %v1427
    %v1432 = vrsqrt.pop %v1157
    %v1433 = vmul.f32 %v1432, %v1157
    %v1434 = vmul.f32 %v1433, %v1432
    %v1435 = vmul.f32 0.5, %v1434
    %v1436 = vsub.f32 1.5, %v1435
    %v1437 = vmul.f32 %v1432, %v1436
    %vm1438 = vweird.f32 %v1157
    %vm1439 = vweird.f32 %v1432
    %vm1440 = vmor %vm1438, %vm1439
    %v1441 = vsel %vm1440, %v1432, %v1437
    %v1442 = vrsqrt.pop %v1158
    %v1443 = vmul.f32 %v1442, %v1158
    %v1444 = vmul.f32 %v1443, %v1442
    %v1445 = vmul.f32 0.5, %v1444
    %v1446 = vsub.f32 1.5, %v1445
    %v1447 = vmul.f32 %v1442, %v1446
    %vm1448 = vweird.f32 %v1158
    %vm1449 = vweird.f32 %v1442
    %vm1450 = vmor %vm1448, %vm1449
    %v1451 = vsel %vm1450, %v1442, %v1447
    %v1452 = vrsqrt.pop %v1159
    %v1453 = vmul.f32 %v1452, %v1159
    %v1454 = vmul.f32 %v1453, %v1452
    %v1455 = vmul.f32 0.5, %v1454
    %v1456 = vsub.f32 1.5, %v1455
    %v1457 = vmul.f32 %v1452, %v1456
    %vm1458 = vweird.f32 %v1159
    %vm1459 = vweird.f32 %v1452
    %vm1460 = vmor %vm1458, %vm1459
    %v1461 = vsel %vm1460, %v1452, %v1457
    %v1462 = vrsqrt.pop %v1160
    %v1463 = vmul.f32 %v1462, %v1160
    %v1464 = vmul.f32 %v1463, %v1462
    %v1465 = vmul.f32 0.5, %v1464
    %v1466 = vsub.f32 1.5, %v1465
    %v1467 = vmul.f32 %v1462, %v1466
    %vm1468 = vweird.f32 %v1160
    %vm1469 = vweird.f32 %v1462
    %vm1470 = vmor %vm1468, %vm1469
    %v1471 = vsel %vm1470, %v1462, %v1467
    %v1472 = vrsqrt.pop %v1161
    %v1473 = vmul.f32 %v1472, %v1161
    %v1474 = vmul.f32 %v1473, %v1472
    %v1475 = vmul.f32 0.5, %v1474
    %v1476 = vsub.f32 1.5, %v1475
    %v1477 = vmul.f32 %v1472, %v1476
    %vm1478 = vweird.f32 %v1161
    %vm1479 = vweird.f32 %v1472
    %vm1480 = vmor %vm1478, %vm1479
    %v1481 = vsel %vm1480, %v1472, %v1477
    %v1482 = vmul.f32 %v1098, %v1171
    %v1483 = vmul.f32 %v1099, %v1181
    %v1484 = vmul.f32 %v1100, %v1191
    %v1485 = vmul.f32 %v1101, %v1201
    %v1486 = vmul.f32 %v1102, %v1211
    %v1487 = vmul.f32 %v1103, %v1221
    %v1488 = vmul.f32 %v1104, %v1231
    %v1489 = vmul.f32 %v1105, %v1241
    %v1490 = vmul.f32 %v1106, %v1251
    %v1491 = vmul.f32 %v1107, %v1261
    %v1492 = vmul.f32 %v1108, %v1271
    %v1493 = vmul.f32 %v1109, %v1281
    %v1494 = vmul.f32 %v1110, %v1291
    %v1495 = vmul.f32 %v1111, %v1301
    %v1496 = vmul.f32 %v1112, %v1311
    %v1497 = vmul.f32 %v1113, %v1321
    %v1498 = vmul.f32 %v1114, %v1331
    %v1499 = vmul.f32 %v1115, %v1341
    %v1500 = vmul.f32 %v1116, %v1351
    %v1501 = vmul.f32 %v1117, %v1361
    %v1502 = vmul.f32 %v1118, %v1371
    %v1503 = vmul.f32 %v1119, %v1381
    %v1504 = vmul.f32 %v1120, %v1391
    %v1505 = vmul.f32 %v1121, %v1401
    %v1506 = vmul.f32 %v1122, %v1411
    %v1507 = vmul.f32 %v1123, %v1421
    %v1508 = vmul.f32 %v1124, %v1431
    %v1509 = vmul.f32 %v1125, %v1441
    %v1510 = vmul.f32 %v1126, %v1451
    %v1511 = vmul.f32 %v1127, %v1461
    %v1512 = vmul.f32 %v1128, %v1471
    %v1513 = vmul.f32 %v1129, %v1481
    %v1514 = vperm.slane %v100, 0
    %v1515 = vmul.f32 %v1482, %v1514
    %v1516 = vmul.f32 %v1483, %v1514
    %v1517 = vmul.f32 %v1484, %v1514
    %v1518 = vmul.f32 %v1485, %v1514
    %v1519 = vmul.f32 %v1486, %v1514
    %v1520 = vmul.f32 %v1487, %v1514
    %v1521 = vmul.f32 %v1488, %v1514
    %v1522 = vmul.f32 %v1489, %v1514
    %v1523 = vmul.f32 %v1490, %v1514
    %v1524 = vmul.f32 %v1491, %v1514
    %v1525 = vmul.f32 %v1492, %v1514
    %v1526 = vmul.f32 %v1493, %v1514
    %v1527 = vmul.f32 %v1494, %v1514
    %v1528 = vmul.f32 %v1495, %v1514
    %v1529 = vmul.f32 %v1496, %v1514
    %v1530 = vmul.f32 %v1497, %v1514
    %v1531 = vmul.f32 %v1498, %v1514
    %v1532 = vmul.f32 %v1499, %v1514
    %v1533 = vmul.f32 %v1500, %v1514
    %v1534 = vmul.f32 %v1501, %v1514
    %v1535 = vmul.f32 %v1502, %v1514
    %v1536 = vmul.f32 %v1503, %v1514
    %v1537 = vmul.f32 %v1504, %v1514
    %v1538 = vmul.f32 %v1505, %v1514
    %v1539 = vmul.f32 %v1506, %v1514
    %v1540 = vmul.f32 %v1507, %v1514
    %v1541 = vmul.f32 %v1508, %v1514
    %v1542 = vmul.f32 %v1509, %v1514
    %v1543 = vmul.f32 %v1510, %v1514
    %v1544 = vmul.f32 %v1511, %v1514
    %v1545 = vmul.f32 %v1512, %v1514
    %v1546 = vmul.f32 %v1513, %v1514
    %v1547 = vperm.slane %v101, 0
    %v1548 = vadd.f32 %v1515, %v1547
    %v1549 = vadd.f32 %v1516, %v1547
    %v1550 = vadd.f32 %v1517, %v1547
    %v1551 = vadd.f32 %v1518, %v1547
    %v1552 = vadd.f32 %v1519, %v1547
    %v1553 = vadd.f32 %v1520, %v1547
    %v1554 = vadd.f32 %v1521, %v1547
    %v1555 = vadd.f32 %v1522, %v1547
    %v1556 = vadd.f32 %v1523, %v1547
    %v1557 = vadd.f32 %v1524, %v1547
    %v1558 = vadd.f32 %v1525, %v1547
    %v1559 = vadd.f32 %v1526, %v1547
    %v1560 = vadd.f32 %v1527, %v1547
    %v1561 = vadd.f32 %v1528, %v1547
    %v1562 = vadd.f32 %v1529, %v1547
    %v1563 = vadd.f32 %v1530, %v1547
    %v1564 = vadd.f32 %v1531, %v1547
    %v1565 = vadd.f32 %v1532, %v1547
    %v1566 = vadd.f32 %v1533, %v1547
    %v1567 = vadd.f32 %v1534, %v1547
    %v1568 = vadd.f32 %v1535, %v1547
    %v1569 = vadd.f32 %v1536, %v1547
    %v1570 = vadd.f32 %v1537, %v1547
    %v1571 = vadd.f32 %v1538, %v1547
    %v1572 = vadd.f32 %v1539, %v1547
    %v1573 = vadd.f32 %v1540, %v1547
    %v1574 = vadd.f32 %v1541, %v1547
    %v1575 = vadd.f32 %v1542, %v1547
    %v1576 = vadd.f32 %v1543, %v1547
    %v1577 = vadd.f32 %v1544, %v1547
    %v1578 = vadd.f32 %v1545, %v1547
    %v1579 = vadd.f32 %v1546, %v1547
    %v1580 = vmax.f32 %v1548, 0.0
    %v1581 = vmax.f32 %v1549, 0.0
    %v1582 = vmax.f32 %v1550, 0.0
    %v1583 = vmax.f32 %v1551, 0.0
    %v1584 = vmax.f32 %v1552, 0.0
    %v1585 = vmax.f32 %v1553, 0.0
    %v1586 = vmax.f32 %v1554, 0.0
    %v1587 = vmax.f32 %v1555, 0.0
    %v1588 = vmax.f32 %v1556, 0.0
    %v1589 = vmax.f32 %v1557, 0.0
    %v1590 = vmax.f32 %v1558, 0.0
    %v1591 = vmax.f32 %v1559, 0.0
    %v1592 = vmax.f32 %v1560, 0.0
    %v1593 = vmax.f32 %v1561, 0.0
    %v1594 = vmax.f32 %v1562, 0.0
    %v1595 = vmax.f32 %v1563, 0.0
    %v1596 = vmax.f32 %v1564, 0.0
    %v1597 = vmax.f32 %v1565, 0.0
    %v1598 = vmax.f32 %v1566, 0.0
    %v1599 = vmax.f32 %v1567, 0.0
    %v1600 = vmax.f32 %v1568, 0.0
    %v1601 = vmax.f32 %v1569, 0.0
    %v1602 = vmax.f32 %v1570, 0.0
    %v1603 = vmax.f32 %v1571, 0.0
    %v1604 = vmax.f32 %v1572, 0.0
    %v1605 = vmax.f32 %v1573, 0.0
    %v1606 = vmax.f32 %v1574, 0.0
    %v1607 = vmax.f32 %v1575, 0.0
    %v1608 = vmax.f32 %v1576, 0.0
    %v1609 = vmax.f32 %v1577, 0.0
    %v1610 = vmax.f32 %v1578, 0.0
    %v1611 = vmax.f32 %v1579, 0.0
    %v1612 = vperm.slane %v102, 0
    %1613 = vmatpush.msra.mxu0 %v123
    %1614 = vmatpush.msra.mxu0 %v122
    %1615 = vmatpush.msra.mxu0 %v121
    %1616 = vmatpush.msra.mxu0 %v120
    %1617 = vmatpush.msra.mxu0 %v119
    %1618 = vmatpush.msra.mxu0 %v118
    %1619 = vmatpush.msra.mxu0 %v117
    %1620 = vmatpush.msra.mxu0 %v116
    %1621 = vmatpush.msra.mxu0 %v115
    %1622 = vmatpush.msra.mxu0 %v114
    %1623 = vmatpush.msra.mxu0 %v113
    %1624 = vmatpush.msra.mxu0 %v112
    %1625 = vmatpush.msra.mxu0 %v111
    %1626 = vmatpush.msra.mxu0 %v110
    %1627 = vmatpush.msra.mxu0 %v109
    %1628 = vmatpush.msra.mxu0 %v108
    %1629 = vmatmul.f32.gmra.mxu0 %v509
    %v1630 = vpop.f32.mrf.mxu0
    %v1631 = vadd.f32 %v1612, %v1630
    %1632 = vmatmul.f32.gmra.mxu0 %v512
    %v1633 = vpop.f32.mrf.mxu0
    %v1634 = vadd.f32 %v1612, %v1633
    %1635 = vmatmul.f32.gmra.mxu0 %v515
    %v1636 = vpop.f32.mrf.mxu0
    %v1637 = vadd.f32 %v1612, %v1636
    %1638 = vmatmul.f32.gmra.mxu0 %v518
    %v1639 = vpop.f32.mrf.mxu0
    %v1640 = vadd.f32 %v1612, %v1639
    %1641 = vdwg.mxu0
    %1642 = vmatpush.msra.mxu0 %v154
    %1643 = vmatpush.msra.mxu0 %v152
    %1644 = vmatpush.msra.mxu0 %v150
    %1645 = vmatpush.msra.mxu0 %v148
    %1646 = vmatpush.msra.mxu0 %v146
    %1647 = vmatpush.msra.mxu0 %v144
    %1648 = vmatpush.msra.mxu0 %v142
    %1649 = vmatpush.msra.mxu0 %v140
    %1650 = vmatpush.msra.mxu0 %v138
    %1651 = vmatpush.msra.mxu0 %v136
    %1652 = vmatpush.msra.mxu0 %v134
    %1653 = vmatpush.msra.mxu0 %v132
    %1654 = vmatpush.msra.mxu0 %v130
    %1655 = vmatpush.msra.mxu0 %v128
    %1656 = vmatpush.msra.mxu0 %v126
    %1657 = vmatpush.msra.mxu0 %v124
    %1658 = vmatmul.f32.gmra.mxu0 %v1580
    %v1659 = vpop.f32.mrf.mxu0
    %v1660 = vadd.f32 0.0, %v1659
    %1661 = vmatmul.f32.gmra.mxu0 %v1581
    %v1662 = vpop.f32.mrf.mxu0
    %v1663 = vadd.f32 0.0, %v1662
    %1664 = vmatmul.f32.gmra.mxu0 %v1582
    %v1665 = vpop.f32.mrf.mxu0
    %v1666 = vadd.f32 0.0, %v1665
    %1667 = vmatmul.f32.gmra.mxu0 %v1583
    %v1668 = vpop.f32.mrf.mxu0
    %v1669 = vadd.f32 0.0, %v1668
    %1670 = vmatmul.f32.gmra.mxu0 %v1584
    %v1671 = vpop.f32.mrf.mxu0
    %v1672 = vadd.f32 0.0, %v1671
    %1673 = vmatmul.f32.gmra.mxu0 %v1585
    %v1674 = vpop.f32.mrf.mxu0
    %v1675 = vadd.f32 0.0, %v1674
    %1676 = vmatmul.f32.gmra.mxu0 %v1586
    %v1677 = vpop.f32.mrf.mxu0
    %v1678 = vadd.f32 0.0, %v1677
    %1679 = vmatmul.f32.gmra.mxu0 %v1587
    %v1680 = vpop.f32.mrf.mxu0
    %v1681 = vadd.f32 0.0, %v1680
    %1682 = vmatmul.f32.gmra.mxu0 %v1588
    %v1683 = vpop.f32.mrf.mxu0
    %v1684 = vadd.f32 0.0, %v1683
    %1685 = vmatmul.f32.gmra.mxu0 %v1589
    %v1686 = vpop.f32.mrf.mxu0
    %v1687 = vadd.f32 0.0, %v1686
    %1688 = vmatmul.f32.gmra.mxu0 %v1590
    %v1689 = vpop.f32.mrf.mxu0
    %v1690 = vadd.f32 0.0, %v1689
    %1691 = vmatmul.f32.gmra.mxu0 %v1591
    %v1692 = vpop.f32.mrf.mxu0
    %v1693 = vadd.f32 0.0, %v1692
    %1694 = vmatmul.f32.gmra.mxu0 %v1592
    %v1695 = vpop.f32.mrf.mxu0
    %v1696 = vadd.f32 0.0, %v1695
    %1697 = vmatmul.f32.gmra.mxu0 %v1593
    %v1698 = vpop.f32.mrf.mxu0
    %v1699 = vadd.f32 0.0, %v1698
    %1700 = vmatmul.f32.gmra.mxu0 %v1594
    %v1701 = vpop.f32.mrf.mxu0
    %v1702 = vadd.f32 0.0, %v1701
    %1703 = vmatmul.f32.gmra.mxu0 %v1595
    %v1704 = vpop.f32.mrf.mxu0
    %v1705 = vadd.f32 0.0, %v1704
    %1706 = vmatmul.f32.gmra.mxu0 %v1596
    %v1707 = vpop.f32.mrf.mxu0
    %v1708 = vadd.f32 0.0, %v1707
    %1709 = vmatmul.f32.gmra.mxu0 %v1597
    %v1710 = vpop.f32.mrf.mxu0
    %v1711 = vadd.f32 0.0, %v1710
    %1712 = vmatmul.f32.gmra.mxu0 %v1598
    %v1713 = vpop.f32.mrf.mxu0
    %v1714 = vadd.f32 0.0, %v1713
    %1715 = vmatmul.f32.gmra.mxu0 %v1599
    %v1716 = vpop.f32.mrf.mxu0
    %v1717 = vadd.f32 0.0, %v1716
    %1718 = vmatmul.f32.gmra.mxu0 %v1600
    %v1719 = vpop.f32.mrf.mxu0
    %v1720 = vadd.f32 0.0, %v1719
    %1721 = vmatmul.f32.gmra.mxu0 %v1601
    %v1722 = vpop.f32.mrf.mxu0
    %v1723 = vadd.f32 0.0, %v1722
    %1724 = vmatmul.f32.gmra.mxu0 %v1602
    %v1725 = vpop.f32.mrf.mxu0
    %v1726 = vadd.f32 0.0, %v1725
    %1727 = vmatmul.f32.gmra.mxu0 %v1603
    %v1728 = vpop.f32.mrf.mxu0
    %v1729 = vadd.f32 0.0, %v1728
    %1730 = vmatmul.f32.gmra.mxu0 %v1604
    %v1731 = vpop.f32.mrf.mxu0
    %v1732 = vadd.f32 0.0, %v1731
    %1733 = vmatmul.f32.gmra.mxu0 %v1605
    %v1734 = vpop.f32.mrf.mxu0
    %v1735 = vadd.f32 0.0, %v1734
    %1736 = vmatmul.f32.gmra.mxu0 %v1606
    %v1737 = vpop.f32.mrf.mxu0
    %v1738 = vadd.f32 0.0, %v1737
    %1739 = vmatmul.f32.gmra.mxu0 %v1607
    %v1740 = vpop.f32.mrf.mxu0
    %v1741 = vadd.f32 0.0, %v1740
    %1742 = vmatmul.f32.gmra.mxu0 %v1608
    %v1743 = vpop.f32.mrf.mxu0
    %v1744 = vadd.f32 0.0, %v1743
    %1745 = vmatmul.f32.gmra.mxu0 %v1609
    %v1746 = vpop.f32.mrf.mxu0
    %v1747 = vadd.f32 0.0, %v1746
    %1748 = vmatmul.f32.gmra.mxu0 %v1610
    %v1749 = vpop.f32.mrf.mxu0
    %v1750 = vadd.f32 0.0, %v1749
    %1751 = vmatmul.f32.gmra.mxu0 %v1611
    %v1752 = vpop.f32.mrf.mxu0
    %v1753 = vadd.f32 0.0, %v1752
    %1754 = vdwg.mxu0
    %1755 = vmatpush.msra.mxu0 %v155
    %1756 = vmatpush.msra.mxu0 %v153
    %1757 = vmatpush.msra.mxu0 %v151
    %1758 = vmatpush.msra.mxu0 %v149
    %1759 = vmatpush.msra.mxu0 %v147
    %1760 = vmatpush.msra.mxu0 %v145
    %1761 = vmatpush.msra.mxu0 %v143
    %1762 = vmatpush.msra.mxu0 %v141
    %1763 = vmatpush.msra.mxu0 %v139
    %1764 = vmatpush.msra.mxu0 %v137
    %1765 = vmatpush.msra.mxu0 %v135
    %1766 = vmatpush.msra.mxu0 %v133
    %1767 = vmatpush.msra.mxu0 %v131
    %1768 = vmatpush.msra.mxu0 %v129
    %1769 = vmatpush.msra.mxu0 %v127
    %1770 = vmatpush.msra.mxu0 %v125
    %1771 = vmatmul.f32.gmra.mxu0 %v1580
    %v1772 = vpop.f32.mrf.mxu0
    %v1773 = vadd.f32 0.0, %v1772
    %1774 = vmatmul.f32.gmra.mxu0 %v1581
    %v1775 = vpop.f32.mrf.mxu0
    %v1776 = vadd.f32 0.0, %v1775
    %1777 = vmatmul.f32.gmra.mxu0 %v1582
    %v1778 = vpop.f32.mrf.mxu0
    %v1779 = vadd.f32 0.0, %v1778
    %1780 = vmatmul.f32.gmra.mxu0 %v1583
    %v1781 = vpop.f32.mrf.mxu0
    %v1782 = vadd.f32 0.0, %v1781
    %1783 = vmatmul.f32.gmra.mxu0 %v1584
    %v1784 = vpop.f32.mrf.mxu0
    %v1785 = vadd.f32 0.0, %v1784
    %1786 = vmatmul.f32.gmra.mxu0 %v1585
    %v1787 = vpop.f32.mrf.mxu0
    %v1788 = vadd.f32 0.0, %v1787
    %1789 = vmatmul.f32.gmra.mxu0 %v1586
    %v1790 = vpop.f32.mrf.mxu0
    %v1791 = vadd.f32 0.0, %v1790
    %1792 = vmatmul.f32.gmra.mxu0 %v1587
    %v1793 = vpop.f32.mrf.mxu0
    %v1794 = vadd.f32 0.0, %v1793
    %1795 = vmatmul.f32.gmra.mxu0 %v1588
    %v1796 = vpop.f32.mrf.mxu0
    %v1797 = vadd.f32 0.0, %v1796
    %1798 = vmatmul.f32.gmra.mxu0 %v1589
    %v1799 = vpop.f32.mrf.mxu0
    %v1800 = vadd.f32 0.0, %v1799
    %1801 = vmatmul.f32.gmra.mxu0 %v1590
    %v1802 = vpop.f32.mrf.mxu0
    %v1803 = vadd.f32 0.0, %v1802
    %1804 = vmatmul.f32.gmra.mxu0 %v1591
    %v1805 = vpop.f32.mrf.mxu0
    %v1806 = vadd.f32 0.0, %v1805
    %1807 = vmatmul.f32.gmra.mxu0 %v1592
    %v1808 = vpop.f32.mrf.mxu0
    %v1809 = vadd.f32 0.0, %v1808
    %1810 = vmatmul.f32.gmra.mxu0 %v1593
    %v1811 = vpop.f32.mrf.mxu0
    %v1812 = vadd.f32 0.0, %v1811
    %1813 = vmatmul.f32.gmra.mxu0 %v1594
    %v1814 = vpop.f32.mrf.mxu0
    %v1815 = vadd.f32 0.0, %v1814
    %1816 = vmatmul.f32.gmra.mxu0 %v1595
    %v1817 = vpop.f32.mrf.mxu0
    %v1818 = vadd.f32 0.0, %v1817
    %1819 = vmatmul.f32.gmra.mxu0 %v1596
    %v1820 = vpop.f32.mrf.mxu0
    %v1821 = vadd.f32 0.0, %v1820
    %1822 = vmatmul.f32.gmra.mxu0 %v1597
    %v1823 = vpop.f32.mrf.mxu0
    %v1824 = vadd.f32 0.0, %v1823
    %1825 = vmatmul.f32.gmra.mxu0 %v1598
    %v1826 = vpop.f32.mrf.mxu0
    %v1827 = vadd.f32 0.0, %v1826
    %1828 = vmatmul.f32.gmra.mxu0 %v1599
    %v1829 = vpop.f32.mrf.mxu0
    %v1830 = vadd.f32 0.0, %v1829
    %1831 = vmatmul.f32.gmra.mxu0 %v1600
    %v1832 = vpop.f32.mrf.mxu0
    %v1833 = vadd.f32 0.0, %v1832
    %1834 = vmatmul.f32.gmra.mxu0 %v1601
    %v1835 = vpop.f32.mrf.mxu0
    %v1836 = vadd.f32 0.0, %v1835
    %1837 = vmatmul.f32.gmra.mxu0 %v1602
    %v1838 = vpop.f32.mrf.mxu0
    %v1839 = vadd.f32 0.0, %v1838
    %1840 = vmatmul.f32.gmra.mxu0 %v1603
    %v1841 = vpop.f32.mrf.mxu0
    %v1842 = vadd.f32 0.0, %v1841
    %1843 = vmatmul.f32.gmra.mxu0 %v1604
    %v1844 = vpop.f32.mrf.mxu0
    %v1845 = vadd.f32 0.0, %v1844
    %1846 = vmatmul.f32.gmra.mxu0 %v1605
    %v1847 = vpop.f32.mrf.mxu0
    %v1848 = vadd.f32 0.0, %v1847
    %1849 = vmatmul.f32.gmra.mxu0 %v1606
    %v1850 = vpop.f32.mrf.mxu0
    %v1851 = vadd.f32 0.0, %v1850
    %1852 = vmatmul.f32.gmra.mxu0 %v1607
    %v1853 = vpop.f32.mrf.mxu0
    %v1854 = vadd.f32 0.0, %v1853
    %1855 = vmatmul.f32.gmra.mxu0 %v1608
    %v1856 = vpop.f32.mrf.mxu0
    %v1857 = vadd.f32 0.0, %v1856
    %1858 = vmatmul.f32.gmra.mxu0 %v1609
    %v1859 = vpop.f32.mrf.mxu0
    %v1860 = vadd.f32 0.0, %v1859
    %1861 = vmatmul.f32.gmra.mxu0 %v1610
    %v1862 = vpop.f32.mrf.mxu0
    %v1863 = vadd.f32 0.0, %v1862
    %1864 = vmatmul.f32.gmra.mxu0 %v1611
    %v1865 = vpop.f32.mrf.mxu0
    %v1866 = vadd.f32 0.0, %v1865
    %1867 = vdwg.mxu0
    %v1868 = vperm.slane %v103, 0
    %v1869 = vadd.f32 %v1660, %v1868
    %v1870 = vadd.f32 %v1663, %v1868
    %v1871 = vadd.f32 %v1666, %v1868
    %v1872 = vadd.f32 %v1669, %v1868
    %v1873 = vadd.f32 %v1672, %v1868
    %v1874 = vadd.f32 %v1675, %v1868
    %v1875 = vadd.f32 %v1678, %v1868
    %v1876 = vadd.f32 %v1681, %v1868
    %v1877 = vadd.f32 %v1684, %v1868
    %v1878 = vadd.f32 %v1687, %v1868
    %v1879 = vadd.f32 %v1690, %v1868
    %v1880 = vadd.f32 %v1693, %v1868
    %v1881 = vadd.f32 %v1696, %v1868
    %v1882 = vadd.f32 %v1699, %v1868
    %v1883 = vadd.f32 %v1702, %v1868
    %v1884 = vadd.f32 %v1705, %v1868
    %v1885 = vadd.f32 %v1708, %v1868
    %v1886 = vadd.f32 %v1711, %v1868
    %v1887 = vadd.f32 %v1714, %v1868
    %v1888 = vadd.f32 %v1717, %v1868
    %v1889 = vadd.f32 %v1720, %v1868
    %v1890 = vadd.f32 %v1723, %v1868
    %v1891 = vadd.f32 %v1726, %v1868
    %v1892 = vadd.f32 %v1729, %v1868
    %v1893 = vadd.f32 %v1732, %v1868
    %v1894 = vadd.f32 %v1735, %v1868
    %v1895 = vadd.f32 %v1738, %v1868
    %v1896 = vadd.f32 %v1741, %v1868
    %v1897 = vadd.f32 %v1744, %v1868
    %v1898 = vadd.f32 %v1747, %v1868
    %v1899 = vadd.f32 %v1750, %v1868
    %v1900 = vadd.f32 %v1753, %v1868
    %v1901 = vperm.slane %v104, 0
    %v1902 = vadd.f32 %v1773, %v1901
    %v1903 = vadd.f32 %v1776, %v1901
    %v1904 = vadd.f32 %v1779, %v1901
    %v1905 = vadd.f32 %v1782, %v1901
    %v1906 = vadd.f32 %v1785, %v1901
    %v1907 = vadd.f32 %v1788, %v1901
    %v1908 = vadd.f32 %v1791, %v1901
    %v1909 = vadd.f32 %v1794, %v1901
    %v1910 = vadd.f32 %v1797, %v1901
    %v1911 = vadd.f32 %v1800, %v1901
    %v1912 = vadd.f32 %v1803, %v1901
    %v1913 = vadd.f32 %v1806, %v1901
    %v1914 = vadd.f32 %v1809, %v1901
    %v1915 = vadd.f32 %v1812, %v1901
    %v1916 = vadd.f32 %v1815, %v1901
    %v1917 = vadd.f32 %v1818, %v1901
    %v1918 = vadd.f32 %v1821, %v1901
    %v1919 = vadd.f32 %v1824, %v1901
    %v1920 = vadd.f32 %v1827, %v1901
    %v1921 = vadd.f32 %v1830, %v1901
    %v1922 = vadd.f32 %v1833, %v1901
    %v1923 = vadd.f32 %v1836, %v1901
    %v1924 = vadd.f32 %v1839, %v1901
    %v1925 = vadd.f32 %v1842, %v1901
    %v1926 = vadd.f32 %v1845, %v1901
    %v1927 = vadd.f32 %v1848, %v1901
    %v1928 = vadd.f32 %v1851, %v1901
    %v1929 = vadd.f32 %v1854, %v1901
    %v1930 = vadd.f32 %v1857, %v1901
    %v1931 = vadd.f32 %v1860, %v1901
    %v1932 = vadd.f32 %v1863, %v1901
    %v1933 = vadd.f32 %v1866, %v1901
    %v1938 = vrot.slane %v1631, 1
    %v1939 = vrot.slane %v1631, 2
    %v1940 = vrot.slane %v1631, 3
    %v1941 = vrot.slane %v1631, 4
    %v1942 = vrot.slane %v1631, 5
    %v1943 = vrot.slane %v1631, 6
    %v1944 = vrot.slane %v1631, 7
    %v1945 = vrot.slane %v1634, 1
    %v1946 = vrot.slane %v1634, 2
    %v1947 = vrot.slane %v1634, 3
    %v1948 = vrot.slane %v1634, 4
    %v1949 = vrot.slane %v1634, 5
    %v1950 = vrot.slane %v1634, 6
    %v1951 = vrot.slane %v1634, 7
    %v1952 = vrot.slane %v1637, 1
    %v1953 = vrot.slane %v1637, 2
    %v1954 = vrot.slane %v1637, 3
    %v1955 = vrot.slane %v1637, 4
    %v1956 = vrot.slane %v1637, 5
    %v1957 = vrot.slane %v1637, 6
    %v1958 = vrot.slane %v1637, 7
    %v1959 = vrot.slane %v1640, 1
    %v1960 = vrot.slane %v1640, 2
    %v1961 = vrot.slane %v1640, 3
    %v1962 = vrot.slane %v1640, 4
    %v1963 = vrot.slane %v1640, 5
    %v1964 = vrot.slane %v1640, 6
    %v1965 = vrot.slane %v1640, 7
    %v1966 = vperm.slane %v1631, 0
    %v1967 = vperm.slane %v1938, 0
    %v1968 = vperm.slane %v1939, 0
    %v1969 = vperm.slane %v1940, 0
    %v1970 = vperm.slane %v1941, 0
    %v1971 = vperm.slane %v1942, 0
    %v1972 = vperm.slane %v1943, 0
    %v1973 = vperm.slane %v1944, 0
    %v1974 = vperm.slane %v1634, 0
    %v1975 = vperm.slane %v1945, 0
    %v1976 = vperm.slane %v1946, 0
    %v1977 = vperm.slane %v1947, 0
    %v1978 = vperm.slane %v1948, 0
    %v1979 = vperm.slane %v1949, 0
    %v1980 = vperm.slane %v1950, 0
    %v1981 = vperm.slane %v1951, 0
    %v1982 = vperm.slane %v1637, 0
    %v1983 = vperm.slane %v1952, 0
    %v1984 = vperm.slane %v1953, 0
    %v1985 = vperm.slane %v1954, 0
    %v1986 = vperm.slane %v1955, 0
    %v1987 = vperm.slane %v1956, 0
    %v1988 = vperm.slane %v1957, 0
    %v1989 = vperm.slane %v1958, 0
    %v1990 = vperm.slane %v1640, 0
    %v1991 = vperm.slane %v1959, 0
    %v1992 = vperm.slane %v1960, 0
    %v1993 = vperm.slane %v1961, 0
    %v1994 = vperm.slane %v1962, 0
    %v1995 = vperm.slane %v1963, 0
    %v1996 = vperm.slane %v1964, 0
    %v1997 = vperm.slane %v1965, 0
    %v2030 = vmul.f32 %v1966, %v1869
    %v2031 = vmul.f32 %v1967, %v1870
    %v2032 = vmul.f32 %v1968, %v1871
    %v2033 = vmul.f32 %v1969, %v1872
    %v2034 = vmul.f32 %v1970, %v1873
    %v2035 = vmul.f32 %v1971, %v1874
    %v2036 = vmul.f32 %v1972, %v1875
    %v2037 = vmul.f32 %v1973, %v1876
    %v2038 = vmul.f32 %v1974, %v1877
    %v2039 = vmul.f32 %v1975, %v1878
    %v2040 = vmul.f32 %v1976, %v1879
    %v2041 = vmul.f32 %v1977, %v1880
    %v2042 = vmul.f32 %v1978, %v1881
    %v2043 = vmul.f32 %v1979, %v1882
    %v2044 = vmul.f32 %v1980, %v1883
    %v2045 = vmul.f32 %v1981, %v1884
    %v2046 = vmul.f32 %v1982, %v1885
    %v2047 = vmul.f32 %v1983, %v1886
    %v2048 = vmul.f32 %v1984, %v1887
    %v2049 = vmul.f32 %v1985, %v1888
    %v2050 = vmul.f32 %v1986, %v1889
    %v2051 = vmul.f32 %v1987, %v1890
    %v2052 = vmul.f32 %v1988, %v1891
    %v2053 = vmul.f32 %v1989, %v1892
    %v2054 = vmul.f32 %v1990, %v1893
    %v2055 = vmul.f32 %v1991, %v1894
    %v2056 = vmul.f32 %v1992, %v1895
    %v2057 = vmul.f32 %v1993, %v1896
    %v2058 = vmul.f32 %v1994, %v1897
    %v2059 = vmul.f32 %v1995, %v1898
    %v2060 = vmul.f32 %v1996, %v1899
    %v2061 = vmul.f32 %v1997, %v1900
    %2062 = vmatpush.msra.mxu0 %v187
    %2063 = vmatpush.msra.mxu0 %v186
    %2064 = vmatpush.msra.mxu0 %v185
    %2065 = vmatpush.msra.mxu0 %v184
    %2066 = vmatpush.msra.mxu0 %v183
    %2067 = vmatpush.msra.mxu0 %v182
    %2068 = vmatpush.msra.mxu0 %v181
    %2069 = vmatpush.msra.mxu0 %v180
    %2070 = vmatpush.msra.mxu0 %v179
    %2071 = vmatpush.msra.mxu0 %v178
    %2072 = vmatpush.msra.mxu0 %v177
    %2073 = vmatpush.msra.mxu0 %v176
    %2074 = vmatpush.msra.mxu0 %v175
    %2075 = vmatpush.msra.mxu0 %v174
    %2076 = vmatpush.msra.mxu0 %v173
    %2077 = vmatpush.msra.mxu0 %v172
    %2078 = vmatmul.f32.gmra.mxu0 %v2030
    %v2079 = vpop.f32.mrf.mxu0
    %v2080 = vadd.f32 0.0, %v2079
    %2081 = vmatmul.f32.gmra.mxu0 %v2031
    %v2082 = vpop.f32.mrf.mxu0
    %v2083 = vadd.f32 0.0, %v2082
    %2084 = vmatmul.f32.gmra.mxu0 %v2032
    %v2085 = vpop.f32.mrf.mxu0
    %v2086 = vadd.f32 0.0, %v2085
    %2087 = vmatmul.f32.gmra.mxu0 %v2033
    %v2088 = vpop.f32.mrf.mxu0
    %v2089 = vadd.f32 0.0, %v2088
    %2090 = vmatmul.f32.gmra.mxu0 %v2034
    %v2091 = vpop.f32.mrf.mxu0
    %v2092 = vadd.f32 0.0, %v2091
    %2093 = vmatmul.f32.gmra.mxu0 %v2035
    %v2094 = vpop.f32.mrf.mxu0
    %v2095 = vadd.f32 0.0, %v2094
    %2096 = vmatmul.f32.gmra.mxu0 %v2036
    %v2097 = vpop.f32.mrf.mxu0
    %v2098 = vadd.f32 0.0, %v2097
    %2099 = vmatmul.f32.gmra.mxu0 %v2037
    %v2100 = vpop.f32.mrf.mxu0
    %v2101 = vadd.f32 0.0, %v2100
    %2102 = vmatmul.f32.gmra.mxu0 %v2038
    %v2103 = vpop.f32.mrf.mxu0
    %v2104 = vadd.f32 0.0, %v2103
    %2105 = vmatmul.f32.gmra.mxu0 %v2039
    %v2106 = vpop.f32.mrf.mxu0
    %v2107 = vadd.f32 0.0, %v2106
    %2108 = vmatmul.f32.gmra.mxu0 %v2040
    %v2109 = vpop.f32.mrf.mxu0
    %v2110 = vadd.f32 0.0, %v2109
    %2111 = vmatmul.f32.gmra.mxu0 %v2041
    %v2112 = vpop.f32.mrf.mxu0
    %v2113 = vadd.f32 0.0, %v2112
    %2114 = vmatmul.f32.gmra.mxu0 %v2042
    %v2115 = vpop.f32.mrf.mxu0
    %v2116 = vadd.f32 0.0, %v2115
    %2117 = vmatmul.f32.gmra.mxu0 %v2043
    %v2118 = vpop.f32.mrf.mxu0
    %v2119 = vadd.f32 0.0, %v2118
    %2120 = vmatmul.f32.gmra.mxu0 %v2044
    %v2121 = vpop.f32.mrf.mxu0
    %v2122 = vadd.f32 0.0, %v2121
    %2123 = vmatmul.f32.gmra.mxu0 %v2045
    %v2124 = vpop.f32.mrf.mxu0
    %v2125 = vadd.f32 0.0, %v2124
    %2126 = vmatmul.f32.gmra.mxu0 %v2046
    %v2127 = vpop.f32.mrf.mxu0
    %v2128 = vadd.f32 0.0, %v2127
    %2129 = vmatmul.f32.gmra.mxu0 %v2047
    %v2130 = vpop.f32.mrf.mxu0
    %v2131 = vadd.f32 0.0, %v2130
    %2132 = vmatmul.f32.gmra.mxu0 %v2048
    %v2133 = vpop.f32.mrf.mxu0
    %v2134 = vadd.f32 0.0, %v2133
    %2135 = vmatmul.f32.gmra.mxu0 %v2049
    %v2136 = vpop.f32.mrf.mxu0
    %v2137 = vadd.f32 0.0, %v2136
    %2138 = vmatmul.f32.gmra.mxu0 %v2050
    %v2139 = vpop.f32.mrf.mxu0
    %v2140 = vadd.f32 0.0, %v2139
    %2141 = vmatmul.f32.gmra.mxu0 %v2051
    %v2142 = vpop.f32.mrf.mxu0
    %v2143 = vadd.f32 0.0, %v2142
    %2144 = vmatmul.f32.gmra.mxu0 %v2052
    %v2145 = vpop.f32.mrf.mxu0
    %v2146 = vadd.f32 0.0, %v2145
    %2147 = vmatmul.f32.gmra.mxu0 %v2053
    %v2148 = vpop.f32.mrf.mxu0
    %v2149 = vadd.f32 0.0, %v2148
    %2150 = vmatmul.f32.gmra.mxu0 %v2054
    %v2151 = vpop.f32.mrf.mxu0
    %v2152 = vadd.f32 0.0, %v2151
    %2153 = vmatmul.f32.gmra.mxu0 %v2055
    %v2154 = vpop.f32.mrf.mxu0
    %v2155 = vadd.f32 0.0, %v2154
    %2156 = vmatmul.f32.gmra.mxu0 %v2056
    %v2157 = vpop.f32.mrf.mxu0
    %v2158 = vadd.f32 0.0, %v2157
    %2159 = vmatmul.f32.gmra.mxu0 %v2057
    %v2160 = vpop.f32.mrf.mxu0
    %v2161 = vadd.f32 0.0, %v2160
    %2162 = vmatmul.f32.gmra.mxu0 %v2058
    %v2163 = vpop.f32.mrf.mxu0
    %v2164 = vadd.f32 0.0, %v2163
    %2165 = vmatmul.f32.gmra.mxu0 %v2059
    %v2166 = vpop.f32.mrf.mxu0
    %v2167 = vadd.f32 0.0, %v2166
    %2168 = vmatmul.f32.gmra.mxu0 %v2060
    %v2169 = vpop.f32.mrf.mxu0
    %v2170 = vadd.f32 0.0, %v2169
    %2171 = vmatmul.f32.gmra.mxu0 %v2061
    %v2172 = vpop.f32.mrf.mxu0
    %v2173 = vadd.f32 0.0, %v2172
    %2174 = vdwg.mxu0
    %v2175 = vrot.slane %v2080, 4
    %v2176 = vmax.f32 %v2080, %v2175
    %v2177 = vrot.slane %v2176, 2
    %v2178 = vmax.f32 %v2176, %v2177
    %v2179 = vrot.slane %v2178, 1
    %v2180 = vmax.f32 %v2178, %v2179
    %v2181 = vrot.slane %v2083, 4
    %v2182 = vmax.f32 %v2083, %v2181
    %v2183 = vrot.slane %v2182, 2
    %v2184 = vmax.f32 %v2182, %v2183
    %v2185 = vrot.slane %v2184, 1
    %v2186 = vmax.f32 %v2184, %v2185
    %v2187 = vrot.slane %v2086, 4
    %v2188 = vmax.f32 %v2086, %v2187
    %v2189 = vrot.slane %v2188, 2
    %v2190 = vmax.f32 %v2188, %v2189
    %v2191 = vrot.slane %v2190, 1
    %v2192 = vmax.f32 %v2190, %v2191
    %v2193 = vrot.slane %v2089, 4
    %v2194 = vmax.f32 %v2089, %v2193
    %v2195 = vrot.slane %v2194, 2
    %v2196 = vmax.f32 %v2194, %v2195
    %v2197 = vrot.slane %v2196, 1
    %v2198 = vmax.f32 %v2196, %v2197
    %v2199 = vrot.slane %v2092, 4
    %v2200 = vmax.f32 %v2092, %v2199
    %v2201 = vrot.slane %v2200, 2
    %v2202 = vmax.f32 %v2200, %v2201
    %v2203 = vrot.slane %v2202, 1
    %v2204 = vmax.f32 %v2202, %v2203
    %v2205 = vrot.slane %v2095, 4
    %v2206 = vmax.f32 %v2095, %v2205
    %v2207 = vrot.slane %v2206, 2
    %v2208 = vmax.f32 %v2206, %v2207
    %v2209 = vrot.slane %v2208, 1
    %v2210 = vmax.f32 %v2208, %v2209
    %v2211 = vrot.slane %v2098, 4
    %v2212 = vmax.f32 %v2098, %v2211
    %v2213 = vrot.slane %v2212, 2
    %v2214 = vmax.f32 %v2212, %v2213
    %v2215 = vrot.slane %v2214, 1
    %v2216 = vmax.f32 %v2214, %v2215
    %v2217 = vrot.slane %v2101, 4
    %v2218 = vmax.f32 %v2101, %v2217
    %v2219 = vrot.slane %v2218, 2
    %v2220 = vmax.f32 %v2218, %v2219
    %v2221 = vrot.slane %v2220, 1
    %v2222 = vmax.f32 %v2220, %v2221
    %v2223 = vrot.slane %v2104, 4
    %v2224 = vmax.f32 %v2104, %v2223
    %v2225 = vrot.slane %v2224, 2
    %v2226 = vmax.f32 %v2224, %v2225
    %v2227 = vrot.slane %v2226, 1
    %v2228 = vmax.f32 %v2226, %v2227
    %v2229 = vrot.slane %v2107, 4
    %v2230 = vmax.f32 %v2107, %v2229
    %v2231 = vrot.slane %v2230, 2
    %v2232 = vmax.f32 %v2230, %v2231
    %v2233 = vrot.slane %v2232, 1
    %v2234 = vmax.f32 %v2232, %v2233
    %v2235 = vrot.slane %v2110, 4
    %v2236 = vmax.f32 %v2110, %v2235
    %v2237 = vrot.slane %v2236, 2
    %v2238 = vmax.f32 %v2236, %v2237
    %v2239 = vrot.slane %v2238, 1
    %v2240 = vmax.f32 %v2238, %v2239
    %v2241 = vrot.slane %v2113, 4
    %v2242 = vmax.f32 %v2113, %v2241
    %v2243 = vrot.slane %v2242, 2
    %v2244 = vmax.f32 %v2242, %v2243
    %v2245 = vrot.slane %v2244, 1
    %v2246 = vmax.f32 %v2244, %v2245
    %v2247 = vrot.slane %v2116, 4
    %v2248 = vmax.f32 %v2116, %v2247
    %v2249 = vrot.slane %v2248, 2
    %v2250 = vmax.f32 %v2248, %v2249
    %v2251 = vrot.slane %v2250, 1
    %v2252 = vmax.f32 %v2250, %v2251
    %v2253 = vrot.slane %v2119, 4
    %v2254 = vmax.f32 %v2119, %v2253
    %v2255 = vrot.slane %v2254, 2
    %v2256 = vmax.f32 %v2254, %v2255
    %v2257 = vrot.slane %v2256, 1
    %v2258 = vmax.f32 %v2256, %v2257
    %v2259 = vrot.slane %v2122, 4
    %v2260 = vmax.f32 %v2122, %v2259
    %v2261 = vrot.slane %v2260, 2
    %v2262 = vmax.f32 %v2260, %v2261
    %v2263 = vrot.slane %v2262, 1
    %v2264 = vmax.f32 %v2262, %v2263
    %v2265 = vrot.slane %v2125, 4
    %v2266 = vmax.f32 %v2125, %v2265
    %v2267 = vrot.slane %v2266, 2
    %v2268 = vmax.f32 %v2266, %v2267
    %v2269 = vrot.slane %v2268, 1
    %v2270 = vmax.f32 %v2268, %v2269
    %v2271 = vrot.slane %v2128, 4
    %v2272 = vmax.f32 %v2128, %v2271
    %v2273 = vrot.slane %v2272, 2
    %v2274 = vmax.f32 %v2272, %v2273
    %v2275 = vrot.slane %v2274, 1
    %v2276 = vmax.f32 %v2274, %v2275
    %v2277 = vrot.slane %v2131, 4
    %v2278 = vmax.f32 %v2131, %v2277
    %v2279 = vrot.slane %v2278, 2
    %v2280 = vmax.f32 %v2278, %v2279
    %v2281 = vrot.slane %v2280, 1
    %v2282 = vmax.f32 %v2280, %v2281
    %v2283 = vrot.slane %v2134, 4
    %v2284 = vmax.f32 %v2134, %v2283
    %v2285 = vrot.slane %v2284, 2
    %v2286 = vmax.f32 %v2284, %v2285
    %v2287 = vrot.slane %v2286, 1
    %v2288 = vmax.f32 %v2286, %v2287
    %v2289 = vrot.slane %v2137, 4
    %v2290 = vmax.f32 %v2137, %v2289
    %v2291 = vrot.slane %v2290, 2
    %v2292 = vmax.f32 %v2290, %v2291
    %v2293 = vrot.slane %v2292, 1
    %v2294 = vmax.f32 %v2292, %v2293
    %v2295 = vrot.slane %v2140, 4
    %v2296 = vmax.f32 %v2140, %v2295
    %v2297 = vrot.slane %v2296, 2
    %v2298 = vmax.f32 %v2296, %v2297
    %v2299 = vrot.slane %v2298, 1
    %v2300 = vmax.f32 %v2298, %v2299
    %v2301 = vrot.slane %v2143, 4
    %v2302 = vmax.f32 %v2143, %v2301
    %v2303 = vrot.slane %v2302, 2
    %v2304 = vmax.f32 %v2302, %v2303
    %v2305 = vrot.slane %v2304, 1
    %v2306 = vmax.f32 %v2304, %v2305
    %v2307 = vrot.slane %v2146, 4
    %v2308 = vmax.f32 %v2146, %v2307
    %v2309 = vrot.slane %v2308, 2
    %v2310 = vmax.f32 %v2308, %v2309
    %v2311 = vrot.slane %v2310, 1
    %v2312 = vmax.f32 %v2310, %v2311
    %v2313 = vrot.slane %v2149, 4
    %v2314 = vmax.f32 %v2149, %v2313
    %v2315 = vrot.slane %v2314, 2
    %v2316 = vmax.f32 %v2314, %v2315
    %v2317 = vrot.slane %v2316, 1
    %v2318 = vmax.f32 %v2316, %v2317
    %v2319 = vrot.slane %v2152, 4
    %v2320 = vmax.f32 %v2152, %v2319
    %v2321 = vrot.slane %v2320, 2
    %v2322 = vmax.f32 %v2320, %v2321
    %v2323 = vrot.slane %v2322, 1
    %v2324 = vmax.f32 %v2322, %v2323
    %v2325 = vrot.slane %v2155, 4
    %v2326 = vmax.f32 %v2155, %v2325
    %v2327 = vrot.slane %v2326, 2
    %v2328 = vmax.f32 %v2326, %v2327
    %v2329 = vrot.slane %v2328, 1
    %v2330 = vmax.f32 %v2328, %v2329
    %v2331 = vrot.slane %v2158, 4
    %v2332 = vmax.f32 %v2158, %v2331
    %v2333 = vrot.slane %v2332, 2
    %v2334 = vmax.f32 %v2332, %v2333
    %v2335 = vrot.slane %v2334, 1
    %v2336 = vmax.f32 %v2334, %v2335
    %v2337 = vrot.slane %v2161, 4
    %v2338 = vmax.f32 %v2161, %v2337
    %v2339 = vrot.slane %v2338, 2
    %v2340 = vmax.f32 %v2338, %v2339
    %v2341 = vrot.slane %v2340, 1
    %v2342 = vmax.f32 %v2340, %v2341
    %v2343 = vrot.slane %v2164, 4
    %v2344 = vmax.f32 %v2164, %v2343
    %v2345 = vrot.slane %v2344, 2
    %v2346 = vmax.f32 %v2344, %v2345
    %v2347 = vrot.slane %v2346, 1
    %v2348 = vmax.f32 %v2346, %v2347
    %v2349 = vrot.slane %v2167, 4
    %v2350 = vmax.f32 %v2167, %v2349
    %v2351 = vrot.slane %v2350, 2
    %v2352 = vmax.f32 %v2350, %v2351
    %v2353 = vrot.slane %v2352, 1
    %v2354 = vmax.f32 %v2352, %v2353
    %v2355 = vrot.slane %v2170, 4
    %v2356 = vmax.f32 %v2170, %v2355
    %v2357 = vrot.slane %v2356, 2
    %v2358 = vmax.f32 %v2356, %v2357
    %v2359 = vrot.slane %v2358, 1
    %v2360 = vmax.f32 %v2358, %v2359
    %v2361 = vrot.slane %v2173, 4
    %v2362 = vmax.f32 %v2173, %v2361
    %v2363 = vrot.slane %v2362, 2
    %v2364 = vmax.f32 %v2362, %v2363
    %v2365 = vrot.slane %v2364, 1
    %v2366 = vmax.f32 %v2364, %v2365
    %v2367 = vsub.f32 %v2080, %v2180
    %v2368 = vsub.f32 %v2083, %v2186
    %v2369 = vsub.f32 %v2086, %v2192
    %v2370 = vsub.f32 %v2089, %v2198
    %v2371 = vsub.f32 %v2092, %v2204
    %v2372 = vsub.f32 %v2095, %v2210
    %v2373 = vsub.f32 %v2098, %v2216
    %v2374 = vsub.f32 %v2101, %v2222
    %v2375 = vsub.f32 %v2104, %v2228
    %v2376 = vsub.f32 %v2107, %v2234
    %v2377 = vsub.f32 %v2110, %v2240
    %v2378 = vsub.f32 %v2113, %v2246
    %v2379 = vsub.f32 %v2116, %v2252
    %v2380 = vsub.f32 %v2119, %v2258
    %v2381 = vsub.f32 %v2122, %v2264
    %v2382 = vsub.f32 %v2125, %v2270
    %v2383 = vsub.f32 %v2128, %v2276
    %v2384 = vsub.f32 %v2131, %v2282
    %v2385 = vsub.f32 %v2134, %v2288
    %v2386 = vsub.f32 %v2137, %v2294
    %v2387 = vsub.f32 %v2140, %v2300
    %v2388 = vsub.f32 %v2143, %v2306
    %v2389 = vsub.f32 %v2146, %v2312
    %v2390 = vsub.f32 %v2149, %v2318
    %v2391 = vsub.f32 %v2152, %v2324
    %v2392 = vsub.f32 %v2155, %v2330
    %v2393 = vsub.f32 %v2158, %v2336
    %v2394 = vsub.f32 %v2161, %v2342
    %v2395 = vsub.f32 %v2164, %v2348
    %v2396 = vsub.f32 %v2167, %v2354
    %v2397 = vsub.f32 %v2170, %v2360
    %v2398 = vsub.f32 %v2173, %v2366
    %v2399 = vmul.f32 %v2367, 1.442695
    %v2400 = vpow.pop %v2399
    %v2401 = vmul.f32 %v2368, 1.442695
    %v2402 = vpow.pop %v2401
    %v2403 = vmul.f32 %v2369, 1.442695
    %v2404 = vpow.pop %v2403
    %v2405 = vmul.f32 %v2370, 1.442695
    %v2406 = vpow.pop %v2405
    %v2407 = vmul.f32 %v2371, 1.442695
    %v2408 = vpow.pop %v2407
    %v2409 = vmul.f32 %v2372, 1.442695
    %v2410 = vpow.pop %v2409
    %v2411 = vmul.f32 %v2373, 1.442695
    %v2412 = vpow.pop %v2411
    %v2413 = vmul.f32 %v2374, 1.442695
    %v2414 = vpow.pop %v2413
    %v2415 = vmul.f32 %v2375, 1.442695
    %v2416 = vpow.pop %v2415
    %v2417 = vmul.f32 %v2376, 1.442695
    %v2418 = vpow.pop %v2417
    %v2419 = vmul.f32 %v2377, 1.442695
    %v2420 = vpow.pop %v2419
    %v2421 = vmul.f32 %v2378, 1.442695
    %v2422 = vpow.pop %v2421
    %v2423 = vmul.f32 %v2379, 1.442695
    %v2424 = vpow.pop %v2423
    %v2425 = vmul.f32 %v2380, 1.442695
    %v2426 = vpow.pop %v2425
    %v2427 = vmul.f32 %v2381, 1.442695
    %v2428 = vpow.pop %v2427
    %v2429 = vmul.f32 %v2382, 1.442695
    %v2430 = vpow.pop %v2429
    %v2431 = vmul.f32 %v2383, 1.442695
    %v2432 = vpow.pop %v2431
    %v2433 = vmul.f32 %v2384, 1.442695
    %v2434 = vpow.pop %v2433
    %v2435 = vmul.f32 %v2385, 1.442695
    %v2436 = vpow.pop %v2435
    %v2437 = vmul.f32 %v2386, 1.442695
    %v2438 = vpow.pop %v2437
    %v2439 = vmul.f32 %v2387, 1.442695
    %v2440 = vpow.pop %v2439
    %v2441 = vmul.f32 %v2388, 1.442695
    %v2442 = vpow.pop %v2441
    %v2443 = vmul.f32 %v2389, 1.442695
    %v2444 = vpow.pop %v2443
    %v2445 = vmul.f32 %v2390, 1.442695
    %v2446 = vpow.pop %v2445
    %v2447 = vmul.f32 %v2391, 1.442695
    %v2448 = vpow.pop %v2447
    %v2449 = vmul.f32 %v2392, 1.442695
    %v2450 = vpow.pop %v2449
    %v2451 = vmul.f32 %v2393, 1.442695
    %v2452 = vpow.pop %v2451
    %v2453 = vmul.f32 %v2394, 1.442695
    %v2454 = vpow.pop %v2453
    %v2455 = vmul.f32 %v2395, 1.442695
    %v2456 = vpow.pop %v2455
    %v2457 = vmul.f32 %v2396, 1.442695
    %v2458 = vpow.pop %v2457
    %v2459 = vmul.f32 %v2397, 1.442695
    %v2460 = vpow.pop %v2459
    %v2461 = vmul.f32 %v2398, 1.442695
    %v2462 = vpow.pop %v2461
    %v2463 = vrot.slane %v2400, 4
    %v2464 = vadd.f32 %v2400, %v2463
    %v2465 = vrot.slane %v2464, 2
    %v2466 = vadd.f32 %v2464, %v2465
    %v2467 = vrot.slane %v2466, 1
    %v2468 = vadd.f32 %v2466, %v2467
    %v2469 = vrot.slane %v2402, 4
    %v2470 = vadd.f32 %v2402, %v2469
    %v2471 = vrot.slane %v2470, 2
    %v2472 = vadd.f32 %v2470, %v2471
    %v2473 = vrot.slane %v2472, 1
    %v2474 = vadd.f32 %v2472, %v2473
    %v2475 = vrot.slane %v2404, 4
    %v2476 = vadd.f32 %v2404, %v2475
    %v2477 = vrot.slane %v2476, 2
    %v2478 = vadd.f32 %v2476, %v2477
    %v2479 = vrot.slane %v2478, 1
    %v2480 = vadd.f32 %v2478, %v2479
    %v2481 = vrot.slane %v2406, 4
    %v2482 = vadd.f32 %v2406, %v2481
    %v2483 = vrot.slane %v2482, 2
    %v2484 = vadd.f32 %v2482, %v2483
    %v2485 = vrot.slane %v2484, 1
    %v2486 = vadd.f32 %v2484, %v2485
    %v2487 = vrot.slane %v2408, 4
    %v2488 = vadd.f32 %v2408, %v2487
    %v2489 = vrot.slane %v2488, 2
    %v2490 = vadd.f32 %v2488, %v2489
    %v2491 = vrot.slane %v2490, 1
    %v2492 = vadd.f32 %v2490, %v2491
    %v2493 = vrot.slane %v2410, 4
    %v2494 = vadd.f32 %v2410, %v2493
    %v2495 = vrot.slane %v2494, 2
    %v2496 = vadd.f32 %v2494, %v2495
    %v2497 = vrot.slane %v2496, 1
    %v2498 = vadd.f32 %v2496, %v2497
    %v2499 = vrot.slane %v2412, 4
    %v2500 = vadd.f32 %v2412, %v2499
    %v2501 = vrot.slane %v2500, 2
    %v2502 = vadd.f32 %v2500, %v2501
    %v2503 = vrot.slane %v2502, 1
    %v2504 = vadd.f32 %v2502, %v2503
    %v2505 = vrot.slane %v2414, 4
    %v2506 = vadd.f32 %v2414, %v2505
    %v2507 = vrot.slane %v2506, 2
    %v2508 = vadd.f32 %v2506, %v2507
    %v2509 = vrot.slane %v2508, 1
    %v2510 = vadd.f32 %v2508, %v2509
    %v2511 = vrot.slane %v2416, 4
    %v2512 = vadd.f32 %v2416, %v2511
    %v2513 = vrot.slane %v2512, 2
    %v2514 = vadd.f32 %v2512, %v2513
    %v2515 = vrot.slane %v2514, 1
    %v2516 = vadd.f32 %v2514, %v2515
    %v2517 = vrot.slane %v2418, 4
    %v2518 = vadd.f32 %v2418, %v2517
    %v2519 = vrot.slane %v2518, 2
    %v2520 = vadd.f32 %v2518, %v2519
    %v2521 = vrot.slane %v2520, 1
    %v2522 = vadd.f32 %v2520, %v2521
    %v2523 = vrot.slane %v2420, 4
    %v2524 = vadd.f32 %v2420, %v2523
    %v2525 = vrot.slane %v2524, 2
    %v2526 = vadd.f32 %v2524, %v2525
    %v2527 = vrot.slane %v2526, 1
    %v2528 = vadd.f32 %v2526, %v2527
    %v2529 = vrot.slane %v2422, 4
    %v2530 = vadd.f32 %v2422, %v2529
    %v2531 = vrot.slane %v2530, 2
    %v2532 = vadd.f32 %v2530, %v2531
    %v2533 = vrot.slane %v2532, 1
    %v2534 = vadd.f32 %v2532, %v2533
    %v2535 = vrot.slane %v2424, 4
    %v2536 = vadd.f32 %v2424, %v2535
    %v2537 = vrot.slane %v2536, 2
    %v2538 = vadd.f32 %v2536, %v2537
    %v2539 = vrot.slane %v2538, 1
    %v2540 = vadd.f32 %v2538, %v2539
    %v2541 = vrot.slane %v2426, 4
    %v2542 = vadd.f32 %v2426, %v2541
    %v2543 = vrot.slane %v2542, 2
    %v2544 = vadd.f32 %v2542, %v2543
    %v2545 = vrot.slane %v2544, 1
    %v2546 = vadd.f32 %v2544, %v2545
    %v2547 = vrot.slane %v2428, 4
    %v2548 = vadd.f32 %v2428, %v2547
    %v2549 = vrot.slane %v2548, 2
    %v2550 = vadd.f32 %v2548, %v2549
    %v2551 = vrot.slane %v2550, 1
    %v2552 = vadd.f32 %v2550, %v2551
    %v2553 = vrot.slane %v2430, 4
    %v2554 = vadd.f32 %v2430, %v2553
    %v2555 = vrot.slane %v2554, 2
    %v2556 = vadd.f32 %v2554, %v2555
    %v2557 = vrot.slane %v2556, 1
    %v2558 = vadd.f32 %v2556, %v2557
    %v2559 = vrot.slane %v2432, 4
    %v2560 = vadd.f32 %v2432, %v2559
    %v2561 = vrot.slane %v2560, 2
    %v2562 = vadd.f32 %v2560, %v2561
    %v2563 = vrot.slane %v2562, 1
    %v2564 = vadd.f32 %v2562, %v2563
    %v2565 = vrot.slane %v2434, 4
    %v2566 = vadd.f32 %v2434, %v2565
    %v2567 = vrot.slane %v2566, 2
    %v2568 = vadd.f32 %v2566, %v2567
    %v2569 = vrot.slane %v2568, 1
    %v2570 = vadd.f32 %v2568, %v2569
    %v2571 = vrot.slane %v2436, 4
    %v2572 = vadd.f32 %v2436, %v2571
    %v2573 = vrot.slane %v2572, 2
    %v2574 = vadd.f32 %v2572, %v2573
    %v2575 = vrot.slane %v2574, 1
    %v2576 = vadd.f32 %v2574, %v2575
    %v2577 = vrot.slane %v2438, 4
    %v2578 = vadd.f32 %v2438, %v2577
    %v2579 = vrot.slane %v2578, 2
    %v2580 = vadd.f32 %v2578, %v2579
    %v2581 = vrot.slane %v2580, 1
    %v2582 = vadd.f32 %v2580, %v2581
    %v2583 = vrot.slane %v2440, 4
    %v2584 = vadd.f32 %v2440, %v2583
    %v2585 = vrot.slane %v2584, 2
    %v2586 = vadd.f32 %v2584, %v2585
    %v2587 = vrot.slane %v2586, 1
    %v2588 = vadd.f32 %v2586, %v2587
    %v2589 = vrot.slane %v2442, 4
    %v2590 = vadd.f32 %v2442, %v2589
    %v2591 = vrot.slane %v2590, 2
    %v2592 = vadd.f32 %v2590, %v2591
    %v2593 = vrot.slane %v2592, 1
    %v2594 = vadd.f32 %v2592, %v2593
    %v2595 = vrot.slane %v2444, 4
    %v2596 = vadd.f32 %v2444, %v2595
    %v2597 = vrot.slane %v2596, 2
    %v2598 = vadd.f32 %v2596, %v2597
    %v2599 = vrot.slane %v2598, 1
    %v2600 = vadd.f32 %v2598, %v2599
    %v2601 = vrot.slane %v2446, 4
    %v2602 = vadd.f32 %v2446, %v2601
    %v2603 = vrot.slane %v2602, 2
    %v2604 = vadd.f32 %v2602, %v2603
    %v2605 = vrot.slane %v2604, 1
    %v2606 = vadd.f32 %v2604, %v2605
    %v2607 = vrot.slane %v2448, 4
    %v2608 = vadd.f32 %v2448, %v2607
    %v2609 = vrot.slane %v2608, 2
    %v2610 = vadd.f32 %v2608, %v2609
    %v2611 = vrot.slane %v2610, 1
    %v2612 = vadd.f32 %v2610, %v2611
    %v2613 = vrot.slane %v2450, 4
    %v2614 = vadd.f32 %v2450, %v2613
    %v2615 = vrot.slane %v2614, 2
    %v2616 = vadd.f32 %v2614, %v2615
    %v2617 = vrot.slane %v2616, 1
    %v2618 = vadd.f32 %v2616, %v2617
    %v2619 = vrot.slane %v2452, 4
    %v2620 = vadd.f32 %v2452, %v2619
    %v2621 = vrot.slane %v2620, 2
    %v2622 = vadd.f32 %v2620, %v2621
    %v2623 = vrot.slane %v2622, 1
    %v2624 = vadd.f32 %v2622, %v2623
    %v2625 = vrot.slane %v2454, 4
    %v2626 = vadd.f32 %v2454, %v2625
    %v2627 = vrot.slane %v2626, 2
    %v2628 = vadd.f32 %v2626, %v2627
    %v2629 = vrot.slane %v2628, 1
    %v2630 = vadd.f32 %v2628, %v2629
    %v2631 = vrot.slane %v2456, 4
    %v2632 = vadd.f32 %v2456, %v2631
    %v2633 = vrot.slane %v2632, 2
    %v2634 = vadd.f32 %v2632, %v2633
    %v2635 = vrot.slane %v2634, 1
    %v2636 = vadd.f32 %v2634, %v2635
    %v2637 = vrot.slane %v2458, 4
    %v2638 = vadd.f32 %v2458, %v2637
    %v2639 = vrot.slane %v2638, 2
    %v2640 = vadd.f32 %v2638, %v2639
    %v2641 = vrot.slane %v2640, 1
    %v2642 = vadd.f32 %v2640, %v2641
    %v2643 = vrot.slane %v2460, 4
    %v2644 = vadd.f32 %v2460, %v2643
    %v2645 = vrot.slane %v2644, 2
    %v2646 = vadd.f32 %v2644, %v2645
    %v2647 = vrot.slane %v2646, 1
    %v2648 = vadd.f32 %v2646, %v2647
    %v2649 = vrot.slane %v2462, 4
    %v2650 = vadd.f32 %v2462, %v2649
    %v2651 = vrot.slane %v2650, 2
    %v2652 = vadd.f32 %v2650, %v2651
    %v2653 = vrot.slane %v2652, 1
    %v2654 = vadd.f32 %v2652, %v2653
    %v2655 = vrcp.pop %v2468
    %v2656 = vrcp.pop %v2474
    %v2657 = vrcp.pop %v2480
    %v2658 = vrcp.pop %v2486
    %v2659 = vrcp.pop %v2492
    %v2660 = vrcp.pop %v2498
    %v2661 = vrcp.pop %v2504
    %v2662 = vrcp.pop %v2510
    %v2663 = vrcp.pop %v2516
    %v2664 = vrcp.pop %v2522
    %v2665 = vrcp.pop %v2528
    %v2666 = vrcp.pop %v2534
    %v2667 = vrcp.pop %v2540
    %v2668 = vrcp.pop %v2546
    %v2669 = vrcp.pop %v2552
    %v2670 = vrcp.pop %v2558
    %v2671 = vrcp.pop %v2564
    %v2672 = vrcp.pop %v2570
    %v2673 = vrcp.pop %v2576
    %v2674 = vrcp.pop %v2582
    %v2675 = vrcp.pop %v2588
    %v2676 = vrcp.pop %v2594
    %v2677 = vrcp.pop %v2600
    %v2678 = vrcp.pop %v2606
    %v2679 = vrcp.pop %v2612
    %v2680 = vrcp.pop %v2618
    %v2681 = vrcp.pop %v2624
    %v2682 = vrcp.pop %v2630
    %v2683 = vrcp.pop %v2636
    %v2684 = vrcp.pop %v2642
    %v2685 = vrcp.pop %v2648
    %v2686 = vrcp.pop %v2654
    %v2687 = vmul.f32 %v2400, %v2655
    %v2688 = vmul.f32 %v2402, %v2656
    %v2689 = vmul.f32 %v2404, %v2657
    %v2690 = vmul.f32 %v2406, %v2658
    %v2691 = vmul.f32 %v2408, %v2659
    %v2692 = vmul.f32 %v2410, %v2660
    %v2693 = vmul.f32 %v2412, %v2661
    %v2694 = vmul.f32 %v2414, %v2662
    %v2695 = vmul.f32 %v2416, %v2663
    %v2696 = vmul.f32 %v2418, %v2664
    %v2697 = vmul.f32 %v2420, %v2665
    %v2698 = vmul.f32 %v2422, %v2666
    %v2699 = vmul.f32 %v2424, %v2667
    %v2700 = vmul.f32 %v2426, %v2668
    %v2701 = vmul.f32 %v2428, %v2669
    %v2702 = vmul.f32 %v2430, %v2670
    %v2703 = vmul.f32 %v2432, %v2671
    %v2704 = vmul.f32 %v2434, %v2672
    %v2705 = vmul.f32 %v2436, %v2673
    %v2706 = vmul.f32 %v2438, %v2674
    %v2707 = vmul.f32 %v2440, %v2675
    %v2708 = vmul.f32 %v2442, %v2676
    %v2709 = vmul.f32 %v2444, %v2677
    %v2710 = vmul.f32 %v2446, %v2678
    %v2711 = vmul.f32 %v2448, %v2679
    %v2712 = vmul.f32 %v2450, %v2680
    %v2713 = vmul.f32 %v2452, %v2681
    %v2714 = vmul.f32 %v2454, %v2682
    %v2715 = vmul.f32 %v2456, %v2683
    %v2716 = vmul.f32 %v2458, %v2684
    %v2717 = vmul.f32 %v2460, %v2685
    %v2718 = vmul.f32 %v2462, %v2686
    %v2719 = vmul.f32 %v2687, %v1902
    %v2720 = vmul.f32 %v2688, %v1903
    %v2721 = vmul.f32 %v2689, %v1904
    %v2722 = vmul.f32 %v2690, %v1905
    %v2723 = vmul.f32 %v2691, %v1906
    %v2724 = vmul.f32 %v2692, %v1907
    %v2725 = vmul.f32 %v2693, %v1908
    %v2726 = vmul.f32 %v2694, %v1909
    %v2727 = vmul.f32 %v2695, %v1910
    %v2728 = vmul.f32 %v2696, %v1911
    %v2729 = vmul.f32 %v2697, %v1912
    %v2730 = vmul.f32 %v2698, %v1913
    %v2731 = vmul.f32 %v2699, %v1914
    %v2732 = vmul.f32 %v2700, %v1915
    %v2733 = vmul.f32 %v2701, %v1916
    %v2734 = vmul.f32 %v2702, %v1917
    %v2735 = vmul.f32 %v2703, %v1918
    %v2736 = vmul.f32 %v2704, %v1919
    %v2737 = vmul.f32 %v2705, %v1920
    %v2738 = vmul.f32 %v2706, %v1921
    %v2739 = vmul.f32 %v2707, %v1922
    %v2740 = vmul.f32 %v2708, %v1923
    %v2741 = vmul.f32 %v2709, %v1924
    %v2742 = vmul.f32 %v2710, %v1925
    %v2743 = vmul.f32 %v2711, %v1926
    %v2744 = vmul.f32 %v2712, %v1927
    %v2745 = vmul.f32 %v2713, %v1928
    %v2746 = vmul.f32 %v2714, %v1929
    %v2747 = vmul.f32 %v2715, %v1930
    %v2748 = vmul.f32 %v2716, %v1931
    %v2749 = vmul.f32 %v2717, %v1932
    %v2750 = vmul.f32 %v2718, %v1933
    %v2751 = vrot.slane %v2719, 4
    %v2752 = vadd.f32 %v2719, %v2751
    %v2753 = vrot.slane %v2752, 2
    %v2754 = vadd.f32 %v2752, %v2753
    %v2755 = vrot.slane %v2754, 1
    %v2756 = vadd.f32 %v2754, %v2755
    %v2757 = vrot.slane %v2720, 4
    %v2758 = vadd.f32 %v2720, %v2757
    %v2759 = vrot.slane %v2758, 2
    %v2760 = vadd.f32 %v2758, %v2759
    %v2761 = vrot.slane %v2760, 1
    %v2762 = vadd.f32 %v2760, %v2761
    %v2763 = vrot.slane %v2721, 4
    %v2764 = vadd.f32 %v2721, %v2763
    %v2765 = vrot.slane %v2764, 2
    %v2766 = vadd.f32 %v2764, %v2765
    %v2767 = vrot.slane %v2766, 1
    %v2768 = vadd.f32 %v2766, %v2767
    %v2769 = vrot.slane %v2722, 4
    %v2770 = vadd.f32 %v2722, %v2769
    %v2771 = vrot.slane %v2770, 2
    %v2772 = vadd.f32 %v2770, %v2771
    %v2773 = vrot.slane %v2772, 1
    %v2774 = vadd.f32 %v2772, %v2773
    %v2775 = vrot.slane %v2723, 4
    %v2776 = vadd.f32 %v2723, %v2775
    %v2777 = vrot.slane %v2776, 2
    %v2778 = vadd.f32 %v2776, %v2777
    %v2779 = vrot.slane %v2778, 1
    %v2780 = vadd.f32 %v2778, %v2779
    %v2781 = vrot.slane %v2724, 4
    %v2782 = vadd.f32 %v2724, %v2781
    %v2783 = vrot.slane %v2782, 2
    %v2784 = vadd.f32 %v2782, %v2783
    %v2785 = vrot.slane %v2784, 1
    %v2786 = vadd.f32 %v2784, %v2785
    %v2787 = vrot.slane %v2725, 4
    %v2788 = vadd.f32 %v2725, %v2787
    %v2789 = vrot.slane %v2788, 2
    %v2790 = vadd.f32 %v2788, %v2789
    %v2791 = vrot.slane %v2790, 1
    %v2792 = vadd.f32 %v2790, %v2791
    %v2793 = vrot.slane %v2726, 4
    %v2794 = vadd.f32 %v2726, %v2793
    %v2795 = vrot.slane %v2794, 2
    %v2796 = vadd.f32 %v2794, %v2795
    %v2797 = vrot.slane %v2796, 1
    %v2798 = vadd.f32 %v2796, %v2797
    %v2799 = vrot.slane %v2727, 4
    %v2800 = vadd.f32 %v2727, %v2799
    %v2801 = vrot.slane %v2800, 2
    %v2802 = vadd.f32 %v2800, %v2801
    %v2803 = vrot.slane %v2802, 1
    %v2804 = vadd.f32 %v2802, %v2803
    %v2805 = vrot.slane %v2728, 4
    %v2806 = vadd.f32 %v2728, %v2805
    %v2807 = vrot.slane %v2806, 2
    %v2808 = vadd.f32 %v2806, %v2807
    %v2809 = vrot.slane %v2808, 1
    %v2810 = vadd.f32 %v2808, %v2809
    %v2811 = vrot.slane %v2729, 4
    %v2812 = vadd.f32 %v2729, %v2811
    %v2813 = vrot.slane %v2812, 2
    %v2814 = vadd.f32 %v2812, %v2813
    %v2815 = vrot.slane %v2814, 1
    %v2816 = vadd.f32 %v2814, %v2815
    %v2817 = vrot.slane %v2730, 4
    %v2818 = vadd.f32 %v2730, %v2817
    %v2819 = vrot.slane %v2818, 2
    %v2820 = vadd.f32 %v2818, %v2819
    %v2821 = vrot.slane %v2820, 1
    %v2822 = vadd.f32 %v2820, %v2821
    %v2823 = vrot.slane %v2731, 4
    %v2824 = vadd.f32 %v2731, %v2823
    %v2825 = vrot.slane %v2824, 2
    %v2826 = vadd.f32 %v2824, %v2825
    %v2827 = vrot.slane %v2826, 1
    %v2828 = vadd.f32 %v2826, %v2827
    %v2829 = vrot.slane %v2732, 4
    %v2830 = vadd.f32 %v2732, %v2829
    %v2831 = vrot.slane %v2830, 2
    %v2832 = vadd.f32 %v2830, %v2831
    %v2833 = vrot.slane %v2832, 1
    %v2834 = vadd.f32 %v2832, %v2833
    %v2835 = vrot.slane %v2733, 4
    %v2836 = vadd.f32 %v2733, %v2835
    %v2837 = vrot.slane %v2836, 2
    %v2838 = vadd.f32 %v2836, %v2837
    %v2839 = vrot.slane %v2838, 1
    %v2840 = vadd.f32 %v2838, %v2839
    %v2841 = vrot.slane %v2734, 4
    %v2842 = vadd.f32 %v2734, %v2841
    %v2843 = vrot.slane %v2842, 2
    %v2844 = vadd.f32 %v2842, %v2843
    %v2845 = vrot.slane %v2844, 1
    %v2846 = vadd.f32 %v2844, %v2845
    %v2847 = vrot.slane %v2735, 4
    %v2848 = vadd.f32 %v2735, %v2847
    %v2849 = vrot.slane %v2848, 2
    %v2850 = vadd.f32 %v2848, %v2849
    %v2851 = vrot.slane %v2850, 1
    %v2852 = vadd.f32 %v2850, %v2851
    %v2853 = vrot.slane %v2736, 4
    %v2854 = vadd.f32 %v2736, %v2853
    %v2855 = vrot.slane %v2854, 2
    %v2856 = vadd.f32 %v2854, %v2855
    %v2857 = vrot.slane %v2856, 1
    %v2858 = vadd.f32 %v2856, %v2857
    %v2859 = vrot.slane %v2737, 4
    %v2860 = vadd.f32 %v2737, %v2859
    %v2861 = vrot.slane %v2860, 2
    %v2862 = vadd.f32 %v2860, %v2861
    %v2863 = vrot.slane %v2862, 1
    %v2864 = vadd.f32 %v2862, %v2863
    %v2865 = vrot.slane %v2738, 4
    %v2866 = vadd.f32 %v2738, %v2865
    %v2867 = vrot.slane %v2866, 2
    %v2868 = vadd.f32 %v2866, %v2867
    %v2869 = vrot.slane %v2868, 1
    %v2870 = vadd.f32 %v2868, %v2869
    %v2871 = vrot.slane %v2739, 4
    %v2872 = vadd.f32 %v2739, %v2871
    %v2873 = vrot.slane %v2872, 2
    %v2874 = vadd.f32 %v2872, %v2873
    %v2875 = vrot.slane %v2874, 1
    %v2876 = vadd.f32 %v2874, %v2875
    %v2877 = vrot.slane %v2740, 4
    %v2878 = vadd.f32 %v2740, %v2877
    %v2879 = vrot.slane %v2878, 2
    %v2880 = vadd.f32 %v2878, %v2879
    %v2881 = vrot.slane %v2880, 1
    %v2882 = vadd.f32 %v2880, %v2881
    %v2883 = vrot.slane %v2741, 4
    %v2884 = vadd.f32 %v2741, %v2883
    %v2885 = vrot.slane %v2884, 2
    %v2886 = vadd.f32 %v2884, %v2885
    %v2887 = vrot.slane %v2886, 1
    %v2888 = vadd.f32 %v2886, %v2887
    %v2889 = vrot.slane %v2742, 4
    %v2890 = vadd.f32 %v2742, %v2889
    %v2891 = vrot.slane %v2890, 2
    %v2892 = vadd.f32 %v2890, %v2891
    %v2893 = vrot.slane %v2892, 1
    %v2894 = vadd.f32 %v2892, %v2893
    %v2895 = vrot.slane %v2743, 4
    %v2896 = vadd.f32 %v2743, %v2895
    %v2897 = vrot.slane %v2896, 2
    %v2898 = vadd.f32 %v2896, %v2897
    %v2899 = vrot.slane %v2898, 1
    %v2900 = vadd.f32 %v2898, %v2899
    %v2901 = vrot.slane %v2744, 4
    %v2902 = vadd.f32 %v2744, %v2901
    %v2903 = vrot.slane %v2902, 2
    %v2904 = vadd.f32 %v2902, %v2903
    %v2905 = vrot.slane %v2904, 1
    %v2906 = vadd.f32 %v2904, %v2905
    %v2907 = vrot.slane %v2745, 4
    %v2908 = vadd.f32 %v2745, %v2907
    %v2909 = vrot.slane %v2908, 2
    %v2910 = vadd.f32 %v2908, %v2909
    %v2911 = vrot.slane %v2910, 1
    %v2912 = vadd.f32 %v2910, %v2911
    %v2913 = vrot.slane %v2746, 4
    %v2914 = vadd.f32 %v2746, %v2913
    %v2915 = vrot.slane %v2914, 2
    %v2916 = vadd.f32 %v2914, %v2915
    %v2917 = vrot.slane %v2916, 1
    %v2918 = vadd.f32 %v2916, %v2917
    %v2919 = vrot.slane %v2747, 4
    %v2920 = vadd.f32 %v2747, %v2919
    %v2921 = vrot.slane %v2920, 2
    %v2922 = vadd.f32 %v2920, %v2921
    %v2923 = vrot.slane %v2922, 1
    %v2924 = vadd.f32 %v2922, %v2923
    %v2925 = vrot.slane %v2748, 4
    %v2926 = vadd.f32 %v2748, %v2925
    %v2927 = vrot.slane %v2926, 2
    %v2928 = vadd.f32 %v2926, %v2927
    %v2929 = vrot.slane %v2928, 1
    %v2930 = vadd.f32 %v2928, %v2929
    %v2931 = vrot.slane %v2749, 4
    %v2932 = vadd.f32 %v2749, %v2931
    %v2933 = vrot.slane %v2932, 2
    %v2934 = vadd.f32 %v2932, %v2933
    %v2935 = vrot.slane %v2934, 1
    %v2936 = vadd.f32 %v2934, %v2935
    %v2937 = vrot.slane %v2750, 4
    %v2938 = vadd.f32 %v2750, %v2937
    %v2939 = vrot.slane %v2938, 2
    %v2940 = vadd.f32 %v2938, %v2939
    %v2941 = vrot.slane %v2940, 1
    %v2942 = vadd.f32 %v2940, %v2941
    %v2943 = vperm.slane %v105, 0
    %vm2976 = vcmask 1041409
    %v2977 = vsel %vm2976, %v2762, %v2756
    %vm2978 = vcmask 1042434
    %v2979 = vsel %vm2978, %v2768, %v2977
    %vm2980 = vcmask 1043459
    %v2981 = vsel %vm2980, %v2774, %v2979
    %vm2982 = vcmask 1044484
    %v2983 = vsel %vm2982, %v2780, %v2981
    %vm2984 = vcmask 1045509
    %v2985 = vsel %vm2984, %v2786, %v2983
    %vm2986 = vcmask 1046534
    %v2987 = vsel %vm2986, %v2792, %v2985
    %vm2988 = vcmask 1047559
    %v2989 = vsel %vm2988, %v2798, %v2987
    %v2990 = vsel %vm2976, %v2810, %v2804
    %v2991 = vsel %vm2978, %v2816, %v2990
    %v2992 = vsel %vm2980, %v2822, %v2991
    %v2993 = vsel %vm2982, %v2828, %v2992
    %v2994 = vsel %vm2984, %v2834, %v2993
    %v2995 = vsel %vm2986, %v2840, %v2994
    %v2996 = vsel %vm2988, %v2846, %v2995
    %v2997 = vsel %vm2976, %v2858, %v2852
    %v2998 = vsel %vm2978, %v2864, %v2997
    %v2999 = vsel %vm2980, %v2870, %v2998
    %v3000 = vsel %vm2982, %v2876, %v2999
    %v3001 = vsel %vm2984, %v2882, %v3000
    %v3002 = vsel %vm2986, %v2888, %v3001
    %v3003 = vsel %vm2988, %v2894, %v3002
    %v3004 = vsel %vm2976, %v2906, %v2900
    %v3005 = vsel %vm2978, %v2912, %v3004
    %v3006 = vsel %vm2980, %v2918, %v3005
    %v3007 = vsel %vm2982, %v2924, %v3006
    %v3008 = vsel %vm2984, %v2930, %v3007
    %v3009 = vsel %vm2986, %v2936, %v3008
    %v3010 = vsel %vm2988, %v2942, %v3009
    %3015 = vmatpush.msra.mxu0 %v171
    %3016 = vmatpush.msra.mxu0 %v170
    %3017 = vmatpush.msra.mxu0 %v169
    %3018 = vmatpush.msra.mxu0 %v168
    %3019 = vmatpush.msra.mxu0 %v167
    %3020 = vmatpush.msra.mxu0 %v166
    %3021 = vmatpush.msra.mxu0 %v165
    %3022 = vmatpush.msra.mxu0 %v164
    %3023 = vmatpush.msra.mxu0 %v163
    %3024 = vmatpush.msra.mxu0 %v162
    %3025 = vmatpush.msra.mxu0 %v161
    %3026 = vmatpush.msra.mxu0 %v160
    %3027 = vmatpush.msra.mxu0 %v159
    %3028 = vmatpush.msra.mxu0 %v158
    %3029 = vmatpush.msra.mxu0 %v157
    %3030 = vmatpush.msra.mxu0 %v156
    %3031 = vmatmul.f32.gmra.mxu0 %v2989
    %v3032 = vpop.f32.mrf.mxu0
    %v3033 = vadd.f32 %v2943, %v3032
    %3034 = vmatmul.f32.gmra.mxu0 %v2996
    %v3035 = vpop.f32.mrf.mxu0
    %v3036 = vadd.f32 %v2943, %v3035
    %3037 = vmatmul.f32.gmra.mxu0 %v3003
    %v3038 = vpop.f32.mrf.mxu0
    %v3039 = vadd.f32 %v2943, %v3038
    %3040 = vmatmul.f32.gmra.mxu0 %v3010
    %v3041 = vpop.f32.mrf.mxu0
    %v3042 = vadd.f32 %v2943, %v3041
    %3043 = vdwg.mxu0
    %v3048 = vrot.slane %v3033, 1
    %v3049 = vrot.slane %v3033, 2
    %v3050 = vrot.slane %v3033, 3
    %v3051 = vrot.slane %v3033, 4
    %v3052 = vrot.slane %v3033, 5
    %v3053 = vrot.slane %v3033, 6
    %v3054 = vrot.slane %v3033, 7
    %v3055 = vrot.slane %v3036, 1
    %v3056 = vrot.slane %v3036, 2
    %v3057 = vrot.slane %v3036, 3
    %v3058 = vrot.slane %v3036, 4
    %v3059 = vrot.slane %v3036, 5
    %v3060 = vrot.slane %v3036, 6
    %v3061 = vrot.slane %v3036, 7
    %v3062 = vrot.slane %v3039, 1
    %v3063 = vrot.slane %v3039, 2
    %v3064 = vrot.slane %v3039, 3
    %v3065 = vrot.slane %v3039, 4
    %v3066 = vrot.slane %v3039, 5
    %v3067 = vrot.slane %v3039, 6
    %v3068 = vrot.slane %v3039, 7
    %v3069 = vrot.slane %v3042, 1
    %v3070 = vrot.slane %v3042, 2
    %v3071 = vrot.slane %v3042, 3
    %v3072 = vrot.slane %v3042, 4
    %v3073 = vrot.slane %v3042, 5
    %v3074 = vrot.slane %v3042, 6
    %v3075 = vrot.slane %v3042, 7
    %v3076 = vperm.slane %v3033, 0
    %v3077 = vperm.slane %v3048, 0
    %v3078 = vperm.slane %v3049, 0
    %v3079 = vperm.slane %v3050, 0
    %v3080 = vperm.slane %v3051, 0
    %v3081 = vperm.slane %v3052, 0
    %v3082 = vperm.slane %v3053, 0
    %v3083 = vperm.slane %v3054, 0
    %v3084 = vperm.slane %v3036, 0
    %v3085 = vperm.slane %v3055, 0
    %v3086 = vperm.slane %v3056, 0
    %v3087 = vperm.slane %v3057, 0
    %v3088 = vperm.slane %v3058, 0
    %v3089 = vperm.slane %v3059, 0
    %v3090 = vperm.slane %v3060, 0
    %v3091 = vperm.slane %v3061, 0
    %v3092 = vperm.slane %v3039, 0
    %v3093 = vperm.slane %v3062, 0
    %v3094 = vperm.slane %v3063, 0
    %v3095 = vperm.slane %v3064, 0
    %v3096 = vperm.slane %v3065, 0
    %v3097 = vperm.slane %v3066, 0
    %v3098 = vperm.slane %v3067, 0
    %v3099 = vperm.slane %v3068, 0
    %v3100 = vperm.slane %v3042, 0
    %v3101 = vperm.slane %v3069, 0
    %v3102 = vperm.slane %v3070, 0
    %v3103 = vperm.slane %v3071, 0
    %v3104 = vperm.slane %v3072, 0
    %v3105 = vperm.slane %v3073, 0
    %v3106 = vperm.slane %v3074, 0
    %v3107 = vperm.slane %v3075, 0
    %v3140 = vadd.f32 %v3076, %v1580
    %v3141 = vadd.f32 %v3077, %v1581
    %v3142 = vadd.f32 %v3078, %v1582
    %v3143 = vadd.f32 %v3079, %v1583
    %v3144 = vadd.f32 %v3080, %v1584
    %v3145 = vadd.f32 %v3081, %v1585
    %v3146 = vadd.f32 %v3082, %v1586
    %v3147 = vadd.f32 %v3083, %v1587
    %v3148 = vadd.f32 %v3084, %v1588
    %v3149 = vadd.f32 %v3085, %v1589
    %v3150 = vadd.f32 %v3086, %v1590
    %v3151 = vadd.f32 %v3087, %v1591
    %v3152 = vadd.f32 %v3088, %v1592
    %v3153 = vadd.f32 %v3089, %v1593
    %v3154 = vadd.f32 %v3090, %v1594
    %v3155 = vadd.f32 %v3091, %v1595
    %v3156 = vadd.f32 %v3092, %v1596
    %v3157 = vadd.f32 %v3093, %v1597
    %v3158 = vadd.f32 %v3094, %v1598
    %v3159 = vadd.f32 %v3095, %v1599
    %v3160 = vadd.f32 %v3096, %v1600
    %v3161 = vadd.f32 %v3097, %v1601
    %v3162 = vadd.f32 %v3098, %v1602
    %v3163 = vadd.f32 %v3099, %v1603
    %v3164 = vadd.f32 %v3100, %v1604
    %v3165 = vadd.f32 %v3101, %v1605
    %v3166 = vadd.f32 %v3102, %v1606
    %v3167 = vadd.f32 %v3103, %v1607
    %v3168 = vadd.f32 %v3104, %v1608
    %v3169 = vadd.f32 %v3105, %v1609
    %v3170 = vadd.f32 %v3106, %v1610
    %v3171 = vadd.f32 %v3107, %v1611
    %3173 = vset.pattern.permute.xlu0 0
    %3174 = vperm.xlu0 %3173, %v107
    %v3175 = vpop.permute.xlu0 %3174
    %3177 = vmatpush.xpose.msra.mxu0 %v3155
    %3178 = vmatpush.xpose.msra.mxu0 %v3154
    %3179 = vmatpush.xpose.msra.mxu0 %v3153
    %3180 = vmatpush.xpose.msra.mxu0 %v3152
    %3181 = vmatpush.xpose.msra.mxu0 %v3151
    %3182 = vmatpush.xpose.msra.mxu0 %v3150
    %3183 = vmatpush.xpose.msra.mxu0 %v3149
    %3184 = vmatpush.xpose.msra.mxu0 %v3148
    %3185 = vmatpush.xpose.msra.mxu0 %v3147
    %3186 = vmatpush.xpose.msra.mxu0 %v3146
    %3187 = vmatpush.xpose.msra.mxu0 %v3145
    %3188 = vmatpush.xpose.msra.mxu0 %v3144
    %3189 = vmatpush.xpose.msra.mxu0 %v3143
    %3190 = vmatpush.xpose.msra.mxu0 %v3142
    %3191 = vmatpush.xpose.msra.mxu0 %v3141
    %3192 = vmatpush.xpose.msra.mxu0 %v3140
    %3193 = vmatmul.f32.gmra.mxu0 %v106
    %v3194 = vpop.f32.mrf.mxu0
    %v3195 = vadd.f32 %v3175, %v3194
    %3196 = vdwg.mxu0
    %3197 = vmatpush.xpose.msra.mxu0 %v3171
    %3198 = vmatpush.xpose.msra.mxu0 %v3170
    %3199 = vmatpush.xpose.msra.mxu0 %v3169
    %3200 = vmatpush.xpose.msra.mxu0 %v3168
    %3201 = vmatpush.xpose.msra.mxu0 %v3167
    %3202 = vmatpush.xpose.msra.mxu0 %v3166
    %3203 = vmatpush.xpose.msra.mxu0 %v3165
    %3204 = vmatpush.xpose.msra.mxu0 %v3164
    %3205 = vmatpush.xpose.msra.mxu0 %v3163
    %3206 = vmatpush.xpose.msra.mxu0 %v3162
    %3207 = vmatpush.xpose.msra.mxu0 %v3161
    %3208 = vmatpush.xpose.msra.mxu0 %v3160
    %3209 = vmatpush.xpose.msra.mxu0 %v3159
    %3210 = vmatpush.xpose.msra.mxu0 %v3158
    %3211 = vmatpush.xpose.msra.mxu0 %v3157
    %3212 = vmatpush.xpose.msra.mxu0 %v3156
    %3213 = vmatmul.f32.gmra.mxu0 %v106
    %v3214 = vpop.f32.mrf.mxu0
    %v3215 = vadd.f32 %v3175, %v3214
    %3216 = vdwg.mxu0
    %v3219 = vrot.slane %v3215, 7
    %vm3220 = vcmask 1040384
    %v3221 = vsel %vm3220, %v3195, %v3219
    %v3223 = vlaneseq
    %vm3224 = vcmp.ge.s32.totalorder %v3223, 0
    %vm3225 = vcmp.lt.s32.totalorder %v3223, 256
    %vm3226 = vmand %vm3224, %vm3225
    %3227 = vst.msk [vmem:[#allocation10] sm:$0x3] %vm3226, %v3221
    // Predicated region
    $region50: #{tpu_custom_call.1} parent=1 // pred_check
      _
    $region51: #{tpu_custom_call.1} parent=1 // pred_check_branch
      %3229 = sbr.rel (0) target = $region53
    $region52: #{tpu_custom_call.1} parent=1 // pred_region
      %3231 = vsyncadd [#allocation4], 0
      %s3233 = sshll.u32 [#allocation10], 4
      %s3234 = int_to_ptr.vmem [resolvable:$true] %s3233
      %s3235 = sshll.u32 %s8, 4
      %s3236 = int_to_ptr.hbm [resolvable:$true] %s3235
      %3238 = dma.vmem_to_hbm [thread:$0]  %s3234, 32, %s3236, [#allocation4]
    $region53: #{tpu_custom_call.1} parent=1 // pred_fallthru
      _
    // Predicated region
    $region54: #{tpu_custom_call.1} parent=1 // pred_check
      _
    $region55: #{tpu_custom_call.1} parent=1 // pred_check_branch
      %3240 = sbr.rel (0) target = $region57
    $region56: #{tpu_custom_call.1} parent=1 // pred_region
      %3242 = dma.done [#allocation4], 32
    $region57: #{tpu_custom_call.1} parent=1 // pred_fallthru
      _
    %3243 = vsyncpa [#allocation3], 1
    %3244 = vsyncpa [#allocation6], 1
    %3245 = vsyncpa [#allocation9], 1
    %3246 = vsyncpa [#allocation4], 1

</llo_original>
